<compile_context>
chip_gen: v6e
topology: v6e:2x2x1
jax: 0.10.0
libtpu: 0.0.40
codegen_flags: <defaults>
</compile_context>

<pallas_src>
import jax
import jax.numpy as jnp
import numpy as np
from jax import lax
from jax.experimental import pallas as pl
from jax.experimental.pallas import tpu as pltpu


def _price_encoder_kernel(x_ref,
                          wih_r_ref, wih_z_ref, wih_n_ref,
                          whh_r_ref, whh_z_ref, whh_n_ref,
                          bih_r_ref, bih_z_ref, bih_n_ref,
                          bhh_r_ref, bhh_z_ref, bhh_n_ref,
                          wf_ref, wl_ref, v_ref,
                          qt_ref,
                          full_sc, gr_sc, gz_sc, gn_sc):
    TB, D = x_ref.shape
    B, H = qt_ref.shape
    T = TB // B
    f32 = jnp.float32

    # ---- Hoisted input projection: one matmul per gate over ALL timesteps.
    # Biases not gated by r (b_ih_r + b_hh_r, b_ih_z + b_hh_z, b_ih_n) are
    # folded here so the recurrence does no bias broadcasts for r/z.
    x_flat = x_ref[...]                                               # (T*B, D)
    gr_sc[...] = (jnp.dot(x_flat, wih_r_ref[...], preferred_element_type=f32)
                  + bih_r_ref[...] + bhh_r_ref[...])
    gz_sc[...] = (jnp.dot(x_flat, wih_z_ref[...], preferred_element_type=f32)
                  + bih_z_ref[...] + bhh_z_ref[...])
    gn_sc[...] = (jnp.dot(x_flat, wih_n_ref[...], preferred_element_type=f32)
                  + bih_n_ref[...])

    # b_hh_n is gated by r, so it must stay inside the step; broadcast once.
    bhh_n_b = jnp.broadcast_to(bhh_n_ref[...], (B, H))

    # ---- GRU recurrence: only the truly serial h -> h chain stays in the
    # loop.  T is a Python int, so this is a fully-unrolled static loop and
    # every scratch slice below is a static (free) ref view.
    h = jnp.zeros((B, H), f32)
    for t in range(T):
        lo, hi = t * B, (t + 1) * B
        i_r = gr_sc[lo:hi, :]
        i_z = gz_sc[lo:hi, :]
        i_n = gn_sc[lo:hi, :]
        h_r = jnp.dot(h, whh_r_ref[...], preferred_element_type=f32)
        h_z = jnp.dot(h, whh_z_ref[...], preferred_element_type=f32)
        h_n = jnp.dot(h, whh_n_ref[...], preferred_element_type=f32) + bhh_n_b
        r = jax.nn.sigmoid(i_r + h_r)
        z = jax.nn.sigmoid(i_z + h_z)
        n = jnp.tanh(i_n + r * h_n)
        h = (1.0 - z) * n + z * h
        full_sc[lo:hi, :] = h
    last = h                                                          # (B, H)

    # ---- Additive attention, all in flat (T*B, H) layout (row = t*B + b).
    full_flat = full_sc[...]                                          # (T*B, H)
    proj_full = jnp.dot(full_flat, wf_ref[...], preferred_element_type=f32)
    proj_last = jnp.dot(last, wl_ref[...], preferred_element_type=f32)  # (B, H)

    # Selection matrices turn reshapes / tiles / axis-0 reductions into MXU
    # matmuls:  selT[j, b] = sel[b, j] = 1 iff (j % B) == b.
    selT = ((lax.broadcasted_iota(jnp.int32, (TB, B), 0) % B)
            == lax.broadcasted_iota(jnp.int32, (TB, B), 1)).astype(f32)
    sel = ((lax.broadcasted_iota(jnp.int32, (B, TB), 1) % B)
           == lax.broadcasted_iota(jnp.int32, (B, TB), 0)).astype(f32)

    # Broadcast the (B,H) query projection onto every timestep row: (T*B, H).
    last_rows = jnp.dot(selT, proj_last, preferred_element_type=f32)
    e = jnp.tanh(proj_full + last_rows)                               # (T*B, H)

    # Scores via MXU lane-reduction: (T*B, H) @ (H, 1) -> (T*B, 1).
    s = jnp.dot(e, v_ref[...], preferred_element_type=f32)
    # A single global max is shared by all per-batch softmax groups; softmax
    # is shift-invariant per group, so this stays exact.
    m = jnp.max(s, axis=0, keepdims=True)                             # (1, 1)
    p = jnp.exp(s - m)                                                # (T*B, 1)

    denom = jnp.dot(sel, p, preferred_element_type=f32)               # (B, 1)
    qt_num = jnp.dot(sel, p * full_flat, preferred_element_type=f32)  # (B, H)
    # (B,H)=(2,32): a masked partial store is unavoidable at these module
    # shapes; batch more sequences for a lane/sublane-dense output slab.
    qt_ref[...] = (qt_num / denom).astype(qt_ref.dtype)


def price_encoder(x, params, weight_dtype=jnp.float32):
    """x: (B, T, D) float32.  Returns qt: (B, H) float32.

    weight_dtype=jnp.bfloat16 halves weight VMEM / doubles MXU rate on
    v6e/v7x at realistic H (kept f32 here so the tight reference check holds).
    """
    B, T, D = x.shape
    H = params["W_hh"].shape[0]

    # Time-major, flattened to (T*B, D) so each timestep's rows form a
    # contiguous sublane slice (row index = t*B + b).
    x_flat = jnp.transpose(x, (1, 0, 2)).reshape(T * B, D).astype(jnp.float32)

    wd = weight_dtype
    Wih, Whh = params["W_ih"].astype(wd), params["W_hh"].astype(wd)
    wih_r, wih_z, wih_n = Wih[:, :H], Wih[:, H:2 * H], Wih[:, 2 * H:]
    whh_r, whh_z, whh_n = Whh[:, :H], Whh[:, H:2 * H], Whh[:, 2 * H:]
    bih, bhh = params["b_ih"], params["b_hh"]
    bih_r, bih_z, bih_n = bih[:, :H], bih[:, H:2 * H], bih[:, 2 * H:]
    bhh_r, bhh_z, bhh_n = bhh[:, :H], bhh[:, H:2 * H], bhh[:, 2 * H:]
    wf, wl = params["W_f"].astype(wd), params["W_l"].astype(wd)
    v_col = params["v"].reshape(H, 1).astype(wd)

    flops = (2 * T * B * D * 3 * H          # hoisted input projection
             + 2 * T * B * H * 3 * H        # recurrent matmuls
             + 2 * T * B * H * H            # W_f projection
             + 2 * B * H * H                # W_l projection
             + 2 * T * B * B * H            # query broadcast matmul
             + 2 * T * B * H                # scores
             + 2 * B * T * B * (H + 1))     # softmax denom + weighted sum
    transcendentals = T * B * (3 * H) + T * B * H + T * B
    bytes_accessed = 4 * (x_flat.size + Wih.size + Whh.size + bih.size
                          + bhh.size + wf.size + wl.size + H + B * H)

    vmem = pl.BlockSpec(memory_space=pltpu.MemorySpace.VMEM)
    # TODO(synk): at realistic (B, T, H) add a batch grid
    # (dimension_semantics=("parallel",)) with a B-tile BlockSpec and raise
    # vmem_limit_bytes so the (T, B_tile, H) scratch fits v7x's 64 MiB VMEM.
    return pl.pallas_call(
        _price_encoder_kernel,
        out_shape=jax.ShapeDtypeStruct((B, H), jnp.float32),
        in_specs=[vmem] * 16,
        out_specs=vmem,
        scratch_shapes=[
            pltpu.VMEM((T * B, H), jnp.float32),   # full GRU outputs (flat)
            pltpu.VMEM((T * B, H), jnp.float32),   # hoisted gi_r (+ biases)
            pltpu.VMEM((T * B, H), jnp.float32),   # hoisted gi_z (+ biases)
            pltpu.VMEM((T * B, H), jnp.float32),   # hoisted gi_n (+ b_ih_n)
        ],
        cost_estimate=pl.CostEstimate(flops=flops,
                                      transcendentals=transcendentals,
                                      bytes_accessed=bytes_accessed),
    )(x_flat,
      wih_r, wih_z, wih_n,
      whh_r, whh_z, whh_n,
      bih_r, bih_z, bih_n,
      bhh_r, bhh_z, bhh_n,
      wf, wl, v_col)


def _reference(x, params):
    """Pure-JAX reference mirroring the PyTorch module math."""
    B, T, D = x.shape
    H = params["W_hh"].shape[0]
    h = jnp.zeros((B, H), jnp.float32)
    full = []
    for t in range(T):
        gi = x[:, t, :] @ params["W_ih"] + params["b_ih"]
        gh = h @ params["W_hh"] + params["b_hh"]
        r = jax.nn.sigmoid(gi[:, :H] + gh[:, :H])
        z = jax.nn.sigmoid(gi[:, H:2 * H] + gh[:, H:2 * H])
        n = jnp.tanh(gi[:, 2 * H:] + r * gh[:, 2 * H:])
        h = (1.0 - z) * n + z * h
        full.append(h)
    full = jnp.stack(full, axis=0)                                    # (T, B, H)
    e = jnp.tanh(full @ params["W_f"] + (h @ params["W_l"])[None])    # (T, B, H)
    scores = jnp.sum(e * params["v"][None], axis=-1)                  # (T, B)
    alpha = jax.nn.softmax(scores, axis=0)
    return jnp.sum(alpha[:, :, None] * full, axis=0)                  # (B, H)


def init_params(key, input_dim, hidden_dim):
    ks = jax.random.split(key, 7)
    s = 1.0 / np.sqrt(hidden_dim)
    u = lambda k, shape: jax.random.uniform(k, shape, jnp.float32, -s, s)
    return {
        "W_ih": u(ks[0], (input_dim, 3 * hidden_dim)),
        "W_hh": u(ks[1], (hidden_dim, 3 * hidden_dim)),
        "b_ih": u(ks[2], (1, 3 * hidden_dim)),
        "b_hh": u(ks[3], (1, 3 * hidden_dim)),
        "W_f":  u(ks[4], (hidden_dim, hidden_dim)),
        "W_l":  u(ks[5], (hidden_dim, hidden_dim)),
        "v":    u(ks[6], (1, hidden_dim)),
    }


if __name__ == "__main__":
    B, T, D, H = 2, 8, 4, 32    # batch, seq, input features, hidden size
    key = jax.random.PRNGKey(0)
    kx, kp = jax.random.split(key)
    x = jax.random.normal(kx, (B, T, D), jnp.float32)
    params = init_params(kp, D, H)

    qt = price_encoder(x, params)
    qt = jax.block_until_ready(qt)

    ref = _reference(x, params)
    np.testing.assert_allclose(np.asarray(qt), np.asarray(ref),
                               rtol=1e-3, atol=1e-3)
    print("KERNEL_OK")
</pallas_src>

<mosaic_0001>
module attributes {stable_mosaic.version = 11 : i64} {
  func.func @_price_encoder_kernel(%arg0: memref<16x4xf32, #tpu.memory_space<vmem>>, %arg1: memref<4x32xf32, #tpu.memory_space<vmem>>, %arg2: memref<4x32xf32, #tpu.memory_space<vmem>>, %arg3: memref<4x32xf32, #tpu.memory_space<vmem>>, %arg4: memref<32x32xf32, #tpu.memory_space<vmem>>, %arg5: memref<32x32xf32, #tpu.memory_space<vmem>>, %arg6: memref<32x32xf32, #tpu.memory_space<vmem>>, %arg7: memref<1x32xf32, #tpu.memory_space<vmem>>, %arg8: memref<1x32xf32, #tpu.memory_space<vmem>>, %arg9: memref<1x32xf32, #tpu.memory_space<vmem>>, %arg10: memref<1x32xf32, #tpu.memory_space<vmem>>, %arg11: memref<1x32xf32, #tpu.memory_space<vmem>>, %arg12: memref<1x32xf32, #tpu.memory_space<vmem>>, %arg13: memref<32x32xf32, #tpu.memory_space<vmem>>, %arg14: memref<32x32xf32, #tpu.memory_space<vmem>>, %arg15: memref<32x1xf32, #tpu.memory_space<vmem>>, %arg16: memref<2x32xf32, #tpu.memory_space<vmem>>, %arg17: memref<16x32xf32, #tpu.memory_space<vmem>>, %arg18: memref<16x32xf32, #tpu.memory_space<vmem>>, %arg19: memref<16x32xf32, #tpu.memory_space<vmem>>, %arg20: memref<16x32xf32, #tpu.memory_space<vmem>>) attributes {dimension_semantics = [], scalar_prefetch = 0 : i64, scratch_operands = 4 : i64, tpu.core_type = #tpu.core_type<tc>} {
    %c0 = arith.constant 0 : index
    %c0_0 = arith.constant 0 : index
    %0 = vector.load %arg0[%c0, %c0_0] : memref<16x4xf32, #tpu.memory_space<vmem>>, vector<16x4xf32>
    %c0_1 = arith.constant 0 : index
    %c0_2 = arith.constant 0 : index
    %1 = vector.load %arg1[%c0_1, %c0_2] : memref<4x32xf32, #tpu.memory_space<vmem>>, vector<4x32xf32>
    %cst = arith.constant dense<0.000000e+00> : vector<16x32xf32>
    %2 = tpu.matmul %0, %1, %cst {dimension_numbers = #tpu.dot_dimension_numbers<[1], [0], [0], [1], [0, 0, 1, 1], [], []>} : vector<16x4xf32>, vector<4x32xf32>, vector<16x32xf32> -> vector<16x32xf32>
    %c0_3 = arith.constant 0 : index
    %c0_4 = arith.constant 0 : index
    %3 = vector.load %arg7[%c0_3, %c0_4] : memref<1x32xf32, #tpu.memory_space<vmem>>, vector<1x32xf32>
    %4 = vector.broadcast %3 : vector<1x32xf32> to vector<16x32xf32>
    %5 = arith.addf %2, %4 : vector<16x32xf32>
    %c0_5 = arith.constant 0 : index
    %c0_6 = arith.constant 0 : index
    %6 = vector.load %arg10[%c0_5, %c0_6] : memref<1x32xf32, #tpu.memory_space<vmem>>, vector<1x32xf32>
    %7 = vector.broadcast %6 : vector<1x32xf32> to vector<16x32xf32>
    %8 = arith.addf %5, %7 : vector<16x32xf32>
    %c0_7 = arith.constant 0 : index
    %c0_8 = arith.constant 0 : index
    %9 = vector.load %arg18[%c0_7, %c0_8] : memref<16x32xf32, #tpu.memory_space<vmem>>, vector<16x32xf32>
    tpu.vector_store %arg18[%c0_7, %c0_8], %8 {strides = array<i32>} : memref<16x32xf32, #tpu.memory_space<vmem>>, vector<16x32xf32>,
    %c0_9 = arith.constant 0 : index
    %c0_10 = arith.constant 0 : index
    %10 = vector.load %arg2[%c0_9, %c0_10] : memref<4x32xf32, #tpu.memory_space<vmem>>, vector<4x32xf32>
    %cst_11 = arith.constant dense<0.000000e+00> : vector<16x32xf32>
    %11 = tpu.matmul %0, %10, %cst_11 {dimension_numbers = #tpu.dot_dimension_numbers<[1], [0], [0], [1], [0, 0, 1, 1], [], []>} : vector<16x4xf32>, vector<4x32xf32>, vector<16x32xf32> -> vector<16x32xf32>
    %c0_12 = arith.constant 0 : index
    %c0_13 = arith.constant 0 : index
    %12 = vector.load %arg8[%c0_12, %c0_13] : memref<1x32xf32, #tpu.memory_space<vmem>>, vector<1x32xf32>
    %13 = vector.broadcast %12 : vector<1x32xf32> to vector<16x32xf32>
    %14 = arith.addf %11, %13 : vector<16x32xf32>
    %c0_14 = arith.constant 0 : index
    %c0_15 = arith.constant 0 : index
    %15 = vector.load %arg11[%c0_14, %c0_15] : memref<1x32xf32, #tpu.memory_space<vmem>>, vector<1x32xf32>
    %16 = vector.broadcast %15 : vector<1x32xf32> to vector<16x32xf32>
    %17 = arith.addf %14, %16 : vector<16x32xf32>
    %c0_16 = arith.constant 0 : index
    %c0_17 = arith.constant 0 : index
    %18 = vector.load %arg19[%c0_16, %c0_17] : memref<16x32xf32, #tpu.memory_space<vmem>>, vector<16x32xf32>
    tpu.vector_store %arg19[%c0_16, %c0_17], %17 {strides = array<i32>} : memref<16x32xf32, #tpu.memory_space<vmem>>, vector<16x32xf32>,
    %c0_18 = arith.constant 0 : index
    %c0_19 = arith.constant 0 : index
    %19 = vector.load %arg3[%c0_18, %c0_19] : memref<4x32xf32, #tpu.memory_space<vmem>>, vector<4x32xf32>
    %cst_20 = arith.constant dense<0.000000e+00> : vector<16x32xf32>
    %20 = tpu.matmul %0, %19, %cst_20 {dimension_numbers = #tpu.dot_dimension_numbers<[1], [0], [0], [1], [0, 0, 1, 1], [], []>} : vector<16x4xf32>, vector<4x32xf32>, vector<16x32xf32> -> vector<16x32xf32>
    %c0_21 = arith.constant 0 : index
    %c0_22 = arith.constant 0 : index
    %21 = vector.load %arg9[%c0_21, %c0_22] : memref<1x32xf32, #tpu.memory_space<vmem>>, vector<1x32xf32>
    %22 = vector.broadcast %21 : vector<1x32xf32> to vector<16x32xf32>
    %23 = arith.addf %20, %22 : vector<16x32xf32>
    %c0_23 = arith.constant 0 : index
    %c0_24 = arith.constant 0 : index
    %24 = vector.load %arg20[%c0_23, %c0_24] : memref<16x32xf32, #tpu.memory_space<vmem>>, vector<16x32xf32>
    tpu.vector_store %arg20[%c0_23, %c0_24], %23 {strides = array<i32>} : memref<16x32xf32, #tpu.memory_space<vmem>>, vector<16x32xf32>,
    %c0_25 = arith.constant 0 : index
    %c0_26 = arith.constant 0 : index
    %25 = vector.load %arg12[%c0_25, %c0_26] : memref<1x32xf32, #tpu.memory_space<vmem>>, vector<1x32xf32>
    %26 = vector.shape_cast %25 : vector<1x32xf32> to vector<1x32xf32>
    %27 = vector.broadcast %26 : vector<1x32xf32> to vector<2x32xf32>
    %cst_27 = arith.constant 0.000000e+00 : f32
    %28 = vector.broadcast %cst_27 : f32 to vector<2x32xf32>
    %c0_28 = arith.constant 0 : index
    %c0_29 = arith.constant 0 : index
    %29 = vector.load %arg18[%c0_28, %c0_29] : memref<16x32xf32, #tpu.memory_space<vmem>>, vector<2x32xf32>
    %c0_30 = arith.constant 0 : index
    %c0_31 = arith.constant 0 : index
    %30 = vector.load %arg19[%c0_30, %c0_31] : memref<16x32xf32, #tpu.memory_space<vmem>>, vector<2x32xf32>
    %c0_32 = arith.constant 0 : index
    %c0_33 = arith.constant 0 : index
    %31 = vector.load %arg20[%c0_32, %c0_33] : memref<16x32xf32, #tpu.memory_space<vmem>>, vector<2x32xf32>
    %c0_34 = arith.constant 0 : index
    %c0_35 = arith.constant 0 : index
    %32 = vector.load %arg4[%c0_34, %c0_35] : memref<32x32xf32, #tpu.memory_space<vmem>>, vector<32x32xf32>
    %cst_36 = arith.constant dense<0.000000e+00> : vector<2x32xf32>
    %33 = tpu.matmul %28, %32, %cst_36 {dimension_numbers = #tpu.dot_dimension_numbers<[1], [0], [0], [1], [0, 0, 1, 1], [], []>} : vector<2x32xf32>, vector<32x32xf32>, vector<2x32xf32> -> vector<2x32xf32>
    %c0_37 = arith.constant 0 : index
    %c0_38 = arith.constant 0 : index
    %34 = vector.load %arg5[%c0_37, %c0_38] : memref<32x32xf32, #tpu.memory_space<vmem>>, vector<32x32xf32>
    %cst_39 = arith.constant dense<0.000000e+00> : vector<2x32xf32>
    %35 = tpu.matmul %28, %34, %cst_39 {dimension_numbers = #tpu.dot_dimension_numbers<[1], [0], [0], [1], [0, 0, 1, 1], [], []>} : vector<2x32xf32>, vector<32x32xf32>, vector<2x32xf32> -> vector<2x32xf32>
    %c0_40 = arith.constant 0 : index
    %c0_41 = arith.constant 0 : index
    %36 = vector.load %arg6[%c0_40, %c0_41] : memref<32x32xf32, #tpu.memory_space<vmem>>, vector<32x32xf32>
    %cst_42 = arith.constant dense<0.000000e+00> : vector<2x32xf32>
    %37 = tpu.matmul %28, %36, %cst_42 {dimension_numbers = #tpu.dot_dimension_numbers<[1], [0], [0], [1], [0, 0, 1, 1], [], []>} : vector<2x32xf32>, vector<32x32xf32>, vector<2x32xf32> -> vector<2x32xf32>
    %38 = arith.addf %37, %27 : vector<2x32xf32>
    %39 = arith.addf %29, %33 : vector<2x32xf32>
    %40 = arith.negf %39 : vector<2x32xf32>
    %41 = math.exp %40 : vector<2x32xf32>
    %cst_43 = arith.constant 1.000000e+00 : f32
    %42 = vector.broadcast %cst_43 : f32 to vector<2x32xf32>
    %43 = arith.addf %42, %41 : vector<2x32xf32>
    %44 = arith.divf %42, %43 : vector<2x32xf32>
    %45 = arith.addf %30, %35 : vector<2x32xf32>
    %46 = arith.negf %45 : vector<2x32xf32>
    %47 = math.exp %46 : vector<2x32xf32>
    %cst_44 = arith.constant 1.000000e+00 : f32
    %48 = vector.broadcast %cst_44 : f32 to vector<2x32xf32>
    %49 = arith.addf %48, %47 : vector<2x32xf32>
    %50 = arith.divf %48, %49 : vector<2x32xf32>
    %51 = arith.mulf %44, %38 : vector<2x32xf32>
    %52 = arith.addf %31, %51 : vector<2x32xf32>
    %53 = math.tanh %52 : vector<2x32xf32>
    %cst_45 = arith.constant 1.000000e+00 : f32
    %54 = vector.broadcast %cst_45 : f32 to vector<2x32xf32>
    %55 = arith.subf %54, %50 : vector<2x32xf32>
    %56 = arith.mulf %55, %53 : vector<2x32xf32>
    %57 = arith.mulf %50, %28 : vector<2x32xf32>
    %58 = arith.addf %56, %57 : vector<2x32xf32>
    %c0_46 = arith.constant 0 : index
    %c0_47 = arith.constant 0 : index
    %59 = vector.load %arg17[%c0_46, %c0_47] : memref<16x32xf32, #tpu.memory_space<vmem>>, vector<2x32xf32>
    tpu.vector_store %arg17[%c0_46, %c0_47], %58 {strides = array<i32>} : memref<16x32xf32, #tpu.memory_space<vmem>>, vector<2x32xf32>,
    %c2 = arith.constant 2 : index
    %c0_48 = arith.constant 0 : index
    %60 = vector.load %arg18[%c2, %c0_48] : memref<16x32xf32, #tpu.memory_space<vmem>>, vector<2x32xf32>
    %c2_49 = arith.constant 2 : index
    %c0_50 = arith.constant 0 : index
    %61 = vector.load %arg19[%c2_49, %c0_50] : memref<16x32xf32, #tpu.memory_space<vmem>>, vector<2x32xf32>
    %c2_51 = arith.constant 2 : index
    %c0_52 = arith.constant 0 : index
    %62 = vector.load %arg20[%c2_51, %c0_52] : memref<16x32xf32, #tpu.memory_space<vmem>>, vector<2x32xf32>
    %c0_53 = arith.constant 0 : index
    %c0_54 = arith.constant 0 : index
    %63 = vector.load %arg4[%c0_53, %c0_54] : memref<32x32xf32, #tpu.memory_space<vmem>>, vector<32x32xf32>
    %cst_55 = arith.constant dense<0.000000e+00> : vector<2x32xf32>
    %64 = tpu.matmul %58, %63, %cst_55 {dimension_numbers = #tpu.dot_dimension_numbers<[1], [0], [0], [1], [0, 0, 1, 1], [], []>} : vector<2x32xf32>, vector<32x32xf32>, vector<2x32xf32> -> vector<2x32xf32>
    %c0_56 = arith.constant 0 : index
    %c0_57 = arith.constant 0 : index
    %65 = vector.load %arg5[%c0_56, %c0_57] : memref<32x32xf32, #tpu.memory_space<vmem>>, vector<32x32xf32>
    %cst_58 = arith.constant dense<0.000000e+00> : vector<2x32xf32>
    %66 = tpu.matmul %58, %65, %cst_58 {dimension_numbers = #tpu.dot_dimension_numbers<[1], [0], [0], [1], [0, 0, 1, 1], [], []>} : vector<2x32xf32>, vector<32x32xf32>, vector<2x32xf32> -> vector<2x32xf32>
    %c0_59 = arith.constant 0 : index
    %c0_60 = arith.constant 0 : index
    %67 = vector.load %arg6[%c0_59, %c0_60] : memref<32x32xf32, #tpu.memory_space<vmem>>, vector<32x32xf32>
    %cst_61 = arith.constant dense<0.000000e+00> : vector<2x32xf32>
    %68 = tpu.matmul %58, %67, %cst_61 {dimension_numbers = #tpu.dot_dimension_numbers<[1], [0], [0], [1], [0, 0, 1, 1], [], []>} : vector<2x32xf32>, vector<32x32xf32>, vector<2x32xf32> -> vector<2x32xf32>
    %69 = arith.addf %68, %27 : vector<2x32xf32>
    %70 = arith.addf %60, %64 : vector<2x32xf32>
    %71 = arith.negf %70 : vector<2x32xf32>
    %72 = math.exp %71 : vector<2x32xf32>
    %cst_62 = arith.constant 1.000000e+00 : f32
    %73 = vector.broadcast %cst_62 : f32 to vector<2x32xf32>
    %74 = arith.addf %73, %72 : vector<2x32xf32>
    %75 = arith.divf %73, %74 : vector<2x32xf32>
    %76 = arith.addf %61, %66 : vector<2x32xf32>
    %77 = arith.negf %76 : vector<2x32xf32>
    %78 = math.exp %77 : vector<2x32xf32>
    %cst_63 = arith.constant 1.000000e+00 : f32
    %79 = vector.broadcast %cst_63 : f32 to vector<2x32xf32>
    %80 = arith.addf %79, %78 : vector<2x32xf32>
    %81 = arith.divf %79, %80 : vector<2x32xf32>
    %82 = arith.mulf %75, %69 : vector<2x32xf32>
    %83 = arith.addf %62, %82 : vector<2x32xf32>
    %84 = math.tanh %83 : vector<2x32xf32>
    %cst_64 = arith.constant 1.000000e+00 : f32
    %85 = vector.broadcast %cst_64 : f32 to vector<2x32xf32>
    %86 = arith.subf %85, %81 : vector<2x32xf32>
    %87 = arith.mulf %86, %84 : vector<2x32xf32>
    %88 = arith.mulf %81, %58 : vector<2x32xf32>
    %89 = arith.addf %87, %88 : vector<2x32xf32>
    %c2_65 = arith.constant 2 : index
    %c0_66 = arith.constant 0 : index
    %90 = vector.load %arg17[%c2_65, %c0_66] : memref<16x32xf32, #tpu.memory_space<vmem>>, vector<2x32xf32>
    tpu.vector_store %arg17[%c2_65, %c0_66], %89 {strides = array<i32>} : memref<16x32xf32, #tpu.memory_space<vmem>>, vector<2x32xf32>,
    %c4 = arith.constant 4 : index
    %c0_67 = arith.constant 0 : index
    %91 = vector.load %arg18[%c4, %c0_67] : memref<16x32xf32, #tpu.memory_space<vmem>>, vector<2x32xf32>
    %c4_68 = arith.constant 4 : index
    %c0_69 = arith.constant 0 : index
    %92 = vector.load %arg19[%c4_68, %c0_69] : memref<16x32xf32, #tpu.memory_space<vmem>>, vector<2x32xf32>
    %c4_70 = arith.constant 4 : index
    %c0_71 = arith.constant 0 : index
    %93 = vector.load %arg20[%c4_70, %c0_71] : memref<16x32xf32, #tpu.memory_space<vmem>>, vector<2x32xf32>
    %c0_72 = arith.constant 0 : index
    %c0_73 = arith.constant 0 : index
    %94 = vector.load %arg4[%c0_72, %c0_73] : memref<32x32xf32, #tpu.memory_space<vmem>>, vector<32x32xf32>
    %cst_74 = arith.constant dense<0.000000e+00> : vector<2x32xf32>
    %95 = tpu.matmul %89, %94, %cst_74 {dimension_numbers = #tpu.dot_dimension_numbers<[1], [0], [0], [1], [0, 0, 1, 1], [], []>} : vector<2x32xf32>, vector<32x32xf32>, vector<2x32xf32> -> vector<2x32xf32>
    %c0_75 = arith.constant 0 : index
    %c0_76 = arith.constant 0 : index
    %96 = vector.load %arg5[%c0_75, %c0_76] : memref<32x32xf32, #tpu.memory_space<vmem>>, vector<32x32xf32>
    %cst_77 = arith.constant dense<0.000000e+00> : vector<2x32xf32>
    %97 = tpu.matmul %89, %96, %cst_77 {dimension_numbers = #tpu.dot_dimension_numbers<[1], [0], [0], [1], [0, 0, 1, 1], [], []>} : vector<2x32xf32>, vector<32x32xf32>, vector<2x32xf32> -> vector<2x32xf32>
    %c0_78 = arith.constant 0 : index
    %c0_79 = arith.constant 0 : index
    %98 = vector.load %arg6[%c0_78, %c0_79] : memref<32x32xf32, #tpu.memory_space<vmem>>, vector<32x32xf32>
    %cst_80 = arith.constant dense<0.000000e+00> : vector<2x32xf32>
    %99 = tpu.matmul %89, %98, %cst_80 {dimension_numbers = #tpu.dot_dimension_numbers<[1], [0], [0], [1], [0, 0, 1, 1], [], []>} : vector<2x32xf32>, vector<32x32xf32>, vector<2x32xf32> -> vector<2x32xf32>
    %100 = arith.addf %99, %27 : vector<2x32xf32>
    %101 = arith.addf %91, %95 : vector<2x32xf32>
    %102 = arith.negf %101 : vector<2x32xf32>
    %103 = math.exp %102 : vector<2x32xf32>
    %cst_81 = arith.constant 1.000000e+00 : f32
    %104 = vector.broadcast %cst_81 : f32 to vector<2x32xf32>
    %105 = arith.addf %104, %103 : vector<2x32xf32>
    %106 = arith.divf %104, %105 : vector<2x32xf32>
    %107 = arith.addf %92, %97 : vector<2x32xf32>
    %108 = arith.negf %107 : vector<2x32xf32>
    %109 = math.exp %108 : vector<2x32xf32>
    %cst_82 = arith.constant 1.000000e+00 : f32
    %110 = vector.broadcast %cst_82 : f32 to vector<2x32xf32>
    %111 = arith.addf %110, %109 : vector<2x32xf32>
    %112 = arith.divf %110, %111 : vector<2x32xf32>
    %113 = arith.mulf %106, %100 : vector<2x32xf32>
    %114 = arith.addf %93, %113 : vector<2x32xf32>
    %115 = math.tanh %114 : vector<2x32xf32>
    %cst_83 = arith.constant 1.000000e+00 : f32
    %116 = vector.broadcast %cst_83 : f32 to vector<2x32xf32>
    %117 = arith.subf %116, %112 : vector<2x32xf32>
    %118 = arith.mulf %117, %115 : vector<2x32xf32>
    %119 = arith.mulf %112, %89 : vector<2x32xf32>
    %120 = arith.addf %118, %119 : vector<2x32xf32>
    %c4_84 = arith.constant 4 : index
    %c0_85 = arith.constant 0 : index
    %121 = vector.load %arg17[%c4_84, %c0_85] : memref<16x32xf32, #tpu.memory_space<vmem>>, vector<2x32xf32>
    tpu.vector_store %arg17[%c4_84, %c0_85], %120 {strides = array<i32>} : memref<16x32xf32, #tpu.memory_space<vmem>>, vector<2x32xf32>,
    %c6 = arith.constant 6 : index
    %c0_86 = arith.constant 0 : index
    %122 = vector.load %arg18[%c6, %c0_86] : memref<16x32xf32, #tpu.memory_space<vmem>>, vector<2x32xf32>
    %c6_87 = arith.constant 6 : index
    %c0_88 = arith.constant 0 : index
    %123 = vector.load %arg19[%c6_87, %c0_88] : memref<16x32xf32, #tpu.memory_space<vmem>>, vector<2x32xf32>
    %c6_89 = arith.constant 6 : index
    %c0_90 = arith.constant 0 : index
    %124 = vector.load %arg20[%c6_89, %c0_90] : memref<16x32xf32, #tpu.memory_space<vmem>>, vector<2x32xf32>
    %c0_91 = arith.constant 0 : index
    %c0_92 = arith.constant 0 : index
    %125 = vector.load %arg4[%c0_91, %c0_92] : memref<32x32xf32, #tpu.memory_space<vmem>>, vector<32x32xf32>
    %cst_93 = arith.constant dense<0.000000e+00> : vector<2x32xf32>
    %126 = tpu.matmul %120, %125, %cst_93 {dimension_numbers = #tpu.dot_dimension_numbers<[1], [0], [0], [1], [0, 0, 1, 1], [], []>} : vector<2x32xf32>, vector<32x32xf32>, vector<2x32xf32> -> vector<2x32xf32>
    %c0_94 = arith.constant 0 : index
    %c0_95 = arith.constant 0 : index
    %127 = vector.load %arg5[%c0_94, %c0_95] : memref<32x32xf32, #tpu.memory_space<vmem>>, vector<32x32xf32>
    %cst_96 = arith.constant dense<0.000000e+00> : vector<2x32xf32>
    %128 = tpu.matmul %120, %127, %cst_96 {dimension_numbers = #tpu.dot_dimension_numbers<[1], [0], [0], [1], [0, 0, 1, 1], [], []>} : vector<2x32xf32>, vector<32x32xf32>, vector<2x32xf32> -> vector<2x32xf32>
    %c0_97 = arith.constant 0 : index
    %c0_98 = arith.constant 0 : index
    %129 = vector.load %arg6[%c0_97, %c0_98] : memref<32x32xf32, #tpu.memory_space<vmem>>, vector<32x32xf32>
    %cst_99 = arith.constant dense<0.000000e+00> : vector<2x32xf32>
    %130 = tpu.matmul %120, %129, %cst_99 {dimension_numbers = #tpu.dot_dimension_numbers<[1], [0], [0], [1], [0, 0, 1, 1], [], []>} : vector<2x32xf32>, vector<32x32xf32>, vector<2x32xf32> -> vector<2x32xf32>
    %131 = arith.addf %130, %27 : vector<2x32xf32>
    %132 = arith.addf %122, %126 : vector<2x32xf32>
    %133 = arith.negf %132 : vector<2x32xf32>
    %134 = math.exp %133 : vector<2x32xf32>
    %cst_100 = arith.constant 1.000000e+00 : f32
    %135 = vector.broadcast %cst_100 : f32 to vector<2x32xf32>
    %136 = arith.addf %135, %134 : vector<2x32xf32>
    %137 = arith.divf %135, %136 : vector<2x32xf32>
    %138 = arith.addf %123, %128 : vector<2x32xf32>
    %139 = arith.negf %138 : vector<2x32xf32>
    %140 = math.exp %139 : vector<2x32xf32>
    %cst_101 = arith.constant 1.000000e+00 : f32
    %141 = vector.broadcast %cst_101 : f32 to vector<2x32xf32>
    %142 = arith.addf %141, %140 : vector<2x32xf32>
    %143 = arith.divf %141, %142 : vector<2x32xf32>
    %144 = arith.mulf %137, %131 : vector<2x32xf32>
    %145 = arith.addf %124, %144 : vector<2x32xf32>
    %146 = math.tanh %145 : vector<2x32xf32>
    %cst_102 = arith.constant 1.000000e+00 : f32
    %147 = vector.broadcast %cst_102 : f32 to vector<2x32xf32>
    %148 = arith.subf %147, %143 : vector<2x32xf32>
    %149 = arith.mulf %148, %146 : vector<2x32xf32>
    %150 = arith.mulf %143, %120 : vector<2x32xf32>
    %151 = arith.addf %149, %150 : vector<2x32xf32>
    %c6_103 = arith.constant 6 : index
    %c0_104 = arith.constant 0 : index
    %152 = vector.load %arg17[%c6_103, %c0_104] : memref<16x32xf32, #tpu.memory_space<vmem>>, vector<2x32xf32>
    tpu.vector_store %arg17[%c6_103, %c0_104], %151 {strides = array<i32>} : memref<16x32xf32, #tpu.memory_space<vmem>>, vector<2x32xf32>,
    %c8 = arith.constant 8 : index
    %c0_105 = arith.constant 0 : index
    %153 = vector.load %arg18[%c8, %c0_105] : memref<16x32xf32, #tpu.memory_space<vmem>>, vector<2x32xf32>
    %c8_106 = arith.constant 8 : index
    %c0_107 = arith.constant 0 : index
    %154 = vector.load %arg19[%c8_106, %c0_107] : memref<16x32xf32, #tpu.memory_space<vmem>>, vector<2x32xf32>
    %c8_108 = arith.constant 8 : index
    %c0_109 = arith.constant 0 : index
    %155 = vector.load %arg20[%c8_108, %c0_109] : memref<16x32xf32, #tpu.memory_space<vmem>>, vector<2x32xf32>
    %c0_110 = arith.constant 0 : index
    %c0_111 = arith.constant 0 : index
    %156 = vector.load %arg4[%c0_110, %c0_111] : memref<32x32xf32, #tpu.memory_space<vmem>>, vector<32x32xf32>
    %cst_112 = arith.constant dense<0.000000e+00> : vector<2x32xf32>
    %157 = tpu.matmul %151, %156, %cst_112 {dimension_numbers = #tpu.dot_dimension_numbers<[1], [0], [0], [1], [0, 0, 1, 1], [], []>} : vector<2x32xf32>, vector<32x32xf32>, vector<2x32xf32> -> vector<2x32xf32>
    %c0_113 = arith.constant 0 : index
    %c0_114 = arith.constant 0 : index
    %158 = vector.load %arg5[%c0_113, %c0_114] : memref<32x32xf32, #tpu.memory_space<vmem>>, vector<32x32xf32>
    %cst_115 = arith.constant dense<0.000000e+00> : vector<2x32xf32>
    %159 = tpu.matmul %151, %158, %cst_115 {dimension_numbers = #tpu.dot_dimension_numbers<[1], [0], [0], [1], [0, 0, 1, 1], [], []>} : vector<2x32xf32>, vector<32x32xf32>, vector<2x32xf32> -> vector<2x32xf32>
    %c0_116 = arith.constant 0 : index
    %c0_117 = arith.constant 0 : index
    %160 = vector.load %arg6[%c0_116, %c0_117] : memref<32x32xf32, #tpu.memory_space<vmem>>, vector<32x32xf32>
    %cst_118 = arith.constant dense<0.000000e+00> : vector<2x32xf32>
    %161 = tpu.matmul %151, %160, %cst_118 {dimension_numbers = #tpu.dot_dimension_numbers<[1], [0], [0], [1], [0, 0, 1, 1], [], []>} : vector<2x32xf32>, vector<32x32xf32>, vector<2x32xf32> -> vector<2x32xf32>
    %162 = arith.addf %161, %27 : vector<2x32xf32>
    %163 = arith.addf %153, %157 : vector<2x32xf32>
    %164 = arith.negf %163 : vector<2x32xf32>
    %165 = math.exp %164 : vector<2x32xf32>
    %cst_119 = arith.constant 1.000000e+00 : f32
    %166 = vector.broadcast %cst_119 : f32 to vector<2x32xf32>
    %167 = arith.addf %166, %165 : vector<2x32xf32>
    %168 = arith.divf %166, %167 : vector<2x32xf32>
    %169 = arith.addf %154, %159 : vector<2x32xf32>
    %170 = arith.negf %169 : vector<2x32xf32>
    %171 = math.exp %170 : vector<2x32xf32>
    %cst_120 = arith.constant 1.000000e+00 : f32
    %172 = vector.broadcast %cst_120 : f32 to vector<2x32xf32>
    %173 = arith.addf %172, %171 : vector<2x32xf32>
    %174 = arith.divf %172, %173 : vector<2x32xf32>
    %175 = arith.mulf %168, %162 : vector<2x32xf32>
    %176 = arith.addf %155, %175 : vector<2x32xf32>
    %177 = math.tanh %176 : vector<2x32xf32>
    %cst_121 = arith.constant 1.000000e+00 : f32
    %178 = vector.broadcast %cst_121 : f32 to vector<2x32xf32>
    %179 = arith.subf %178, %174 : vector<2x32xf32>
    %180 = arith.mulf %179, %177 : vector<2x32xf32>
    %181 = arith.mulf %174, %151 : vector<2x32xf32>
    %182 = arith.addf %180, %181 : vector<2x32xf32>
    %c8_122 = arith.constant 8 : index
    %c0_123 = arith.constant 0 : index
    %183 = vector.load %arg17[%c8_122, %c0_123] : memref<16x32xf32, #tpu.memory_space<vmem>>, vector<2x32xf32>
    tpu.vector_store %arg17[%c8_122, %c0_123], %182 {strides = array<i32>} : memref<16x32xf32, #tpu.memory_space<vmem>>, vector<2x32xf32>,
    %c10 = arith.constant 10 : index
    %c0_124 = arith.constant 0 : index
    %184 = vector.load %arg18[%c10, %c0_124] : memref<16x32xf32, #tpu.memory_space<vmem>>, vector<2x32xf32>
    %c10_125 = arith.constant 10 : index
    %c0_126 = arith.constant 0 : index
    %185 = vector.load %arg19[%c10_125, %c0_126] : memref<16x32xf32, #tpu.memory_space<vmem>>, vector<2x32xf32>
    %c10_127 = arith.constant 10 : index
    %c0_128 = arith.constant 0 : index
    %186 = vector.load %arg20[%c10_127, %c0_128] : memref<16x32xf32, #tpu.memory_space<vmem>>, vector<2x32xf32>
    %c0_129 = arith.constant 0 : index
    %c0_130 = arith.constant 0 : index
    %187 = vector.load %arg4[%c0_129, %c0_130] : memref<32x32xf32, #tpu.memory_space<vmem>>, vector<32x32xf32>
    %cst_131 = arith.constant dense<0.000000e+00> : vector<2x32xf32>
    %188 = tpu.matmul %182, %187, %cst_131 {dimension_numbers = #tpu.dot_dimension_numbers<[1], [0], [0], [1], [0, 0, 1, 1], [], []>} : vector<2x32xf32>, vector<32x32xf32>, vector<2x32xf32> -> vector<2x32xf32>
    %c0_132 = arith.constant 0 : index
    %c0_133 = arith.constant 0 : index
    %189 = vector.load %arg5[%c0_132, %c0_133] : memref<32x32xf32, #tpu.memory_space<vmem>>, vector<32x32xf32>
    %cst_134 = arith.constant dense<0.000000e+00> : vector<2x32xf32>
    %190 = tpu.matmul %182, %189, %cst_134 {dimension_numbers = #tpu.dot_dimension_numbers<[1], [0], [0], [1], [0, 0, 1, 1], [], []>} : vector<2x32xf32>, vector<32x32xf32>, vector<2x32xf32> -> vector<2x32xf32>
    %c0_135 = arith.constant 0 : index
    %c0_136 = arith.constant 0 : index
    %191 = vector.load %arg6[%c0_135, %c0_136] : memref<32x32xf32, #tpu.memory_space<vmem>>, vector<32x32xf32>
    %cst_137 = arith.constant dense<0.000000e+00> : vector<2x32xf32>
    %192 = tpu.matmul %182, %191, %cst_137 {dimension_numbers = #tpu.dot_dimension_numbers<[1], [0], [0], [1], [0, 0, 1, 1], [], []>} : vector<2x32xf32>, vector<32x32xf32>, vector<2x32xf32> -> vector<2x32xf32>
    %193 = arith.addf %192, %27 : vector<2x32xf32>
    %194 = arith.addf %184, %188 : vector<2x32xf32>
    %195 = arith.negf %194 : vector<2x32xf32>
    %196 = math.exp %195 : vector<2x32xf32>
    %cst_138 = arith.constant 1.000000e+00 : f32
    %197 = vector.broadcast %cst_138 : f32 to vector<2x32xf32>
    %198 = arith.addf %197, %196 : vector<2x32xf32>
    %199 = arith.divf %197, %198 : vector<2x32xf32>
    %200 = arith.addf %185, %190 : vector<2x32xf32>
    %201 = arith.negf %200 : vector<2x32xf32>
    %202 = math.exp %201 : vector<2x32xf32>
    %cst_139 = arith.constant 1.000000e+00 : f32
    %203 = vector.broadcast %cst_139 : f32 to vector<2x32xf32>
    %204 = arith.addf %203, %202 : vector<2x32xf32>
    %205 = arith.divf %203, %204 : vector<2x32xf32>
    %206 = arith.mulf %199, %193 : vector<2x32xf32>
    %207 = arith.addf %186, %206 : vector<2x32xf32>
    %208 = math.tanh %207 : vector<2x32xf32>
    %cst_140 = arith.constant 1.000000e+00 : f32
    %209 = vector.broadcast %cst_140 : f32 to vector<2x32xf32>
    %210 = arith.subf %209, %205 : vector<2x32xf32>
    %211 = arith.mulf %210, %208 : vector<2x32xf32>
    %212 = arith.mulf %205, %182 : vector<2x32xf32>
    %213 = arith.addf %211, %212 : vector<2x32xf32>
    %c10_141 = arith.constant 10 : index
    %c0_142 = arith.constant 0 : index
    %214 = vector.load %arg17[%c10_141, %c0_142] : memref<16x32xf32, #tpu.memory_space<vmem>>, vector<2x32xf32>
    tpu.vector_store %arg17[%c10_141, %c0_142], %213 {strides = array<i32>} : memref<16x32xf32, #tpu.memory_space<vmem>>, vector<2x32xf32>,
    %c12 = arith.constant 12 : index
    %c0_143 = arith.constant 0 : index
    %215 = vector.load %arg18[%c12, %c0_143] : memref<16x32xf32, #tpu.memory_space<vmem>>, vector<2x32xf32>
    %c12_144 = arith.constant 12 : index
    %c0_145 = arith.constant 0 : index
    %216 = vector.load %arg19[%c12_144, %c0_145] : memref<16x32xf32, #tpu.memory_space<vmem>>, vector<2x32xf32>
    %c12_146 = arith.constant 12 : index
    %c0_147 = arith.constant 0 : index
    %217 = vector.load %arg20[%c12_146, %c0_147] : memref<16x32xf32, #tpu.memory_space<vmem>>, vector<2x32xf32>
    %c0_148 = arith.constant 0 : index
    %c0_149 = arith.constant 0 : index
    %218 = vector.load %arg4[%c0_148, %c0_149] : memref<32x32xf32, #tpu.memory_space<vmem>>, vector<32x32xf32>
    %cst_150 = arith.constant dense<0.000000e+00> : vector<2x32xf32>
    %219 = tpu.matmul %213, %218, %cst_150 {dimension_numbers = #tpu.dot_dimension_numbers<[1], [0], [0], [1], [0, 0, 1, 1], [], []>} : vector<2x32xf32>, vector<32x32xf32>, vector<2x32xf32> -> vector<2x32xf32>
    %c0_151 = arith.constant 0 : index
    %c0_152 = arith.constant 0 : index
    %220 = vector.load %arg5[%c0_151, %c0_152] : memref<32x32xf32, #tpu.memory_space<vmem>>, vector<32x32xf32>
    %cst_153 = arith.constant dense<0.000000e+00> : vector<2x32xf32>
    %221 = tpu.matmul %213, %220, %cst_153 {dimension_numbers = #tpu.dot_dimension_numbers<[1], [0], [0], [1], [0, 0, 1, 1], [], []>} : vector<2x32xf32>, vector<32x32xf32>, vector<2x32xf32> -> vector<2x32xf32>
    %c0_154 = arith.constant 0 : index
    %c0_155 = arith.constant 0 : index
    %222 = vector.load %arg6[%c0_154, %c0_155] : memref<32x32xf32, #tpu.memory_space<vmem>>, vector<32x32xf32>
    %cst_156 = arith.constant dense<0.000000e+00> : vector<2x32xf32>
    %223 = tpu.matmul %213, %222, %cst_156 {dimension_numbers = #tpu.dot_dimension_numbers<[1], [0], [0], [1], [0, 0, 1, 1], [], []>} : vector<2x32xf32>, vector<32x32xf32>, vector<2x32xf32> -> vector<2x32xf32>
    %224 = arith.addf %223, %27 : vector<2x32xf32>
    %225 = arith.addf %215, %219 : vector<2x32xf32>
    %226 = arith.negf %225 : vector<2x32xf32>
    %227 = math.exp %226 : vector<2x32xf32>
    %cst_157 = arith.constant 1.000000e+00 : f32
    %228 = vector.broadcast %cst_157 : f32 to vector<2x32xf32>
    %229 = arith.addf %228, %227 : vector<2x32xf32>
    %230 = arith.divf %228, %229 : vector<2x32xf32>
    %231 = arith.addf %216, %221 : vector<2x32xf32>
    %232 = arith.negf %231 : vector<2x32xf32>
    %233 = math.exp %232 : vector<2x32xf32>
    %cst_158 = arith.constant 1.000000e+00 : f32
    %234 = vector.broadcast %cst_158 : f32 to vector<2x32xf32>
    %235 = arith.addf %234, %233 : vector<2x32xf32>
    %236 = arith.divf %234, %235 : vector<2x32xf32>
    %237 = arith.mulf %230, %224 : vector<2x32xf32>
    %238 = arith.addf %217, %237 : vector<2x32xf32>
    %239 = math.tanh %238 : vector<2x32xf32>
    %cst_159 = arith.constant 1.000000e+00 : f32
    %240 = vector.broadcast %cst_159 : f32 to vector<2x32xf32>
    %241 = arith.subf %240, %236 : vector<2x32xf32>
    %242 = arith.mulf %241, %239 : vector<2x32xf32>
    %243 = arith.mulf %236, %213 : vector<2x32xf32>
    %244 = arith.addf %242, %243 : vector<2x32xf32>
    %c12_160 = arith.constant 12 : index
    %c0_161 = arith.constant 0 : index
    %245 = vector.load %arg17[%c12_160, %c0_161] : memref<16x32xf32, #tpu.memory_space<vmem>>, vector<2x32xf32>
    tpu.vector_store %arg17[%c12_160, %c0_161], %244 {strides = array<i32>} : memref<16x32xf32, #tpu.memory_space<vmem>>, vector<2x32xf32>,
    %c14 = arith.constant 14 : index
    %c0_162 = arith.constant 0 : index
    %246 = vector.load %arg18[%c14, %c0_162] : memref<16x32xf32, #tpu.memory_space<vmem>>, vector<2x32xf32>
    %c14_163 = arith.constant 14 : index
    %c0_164 = arith.constant 0 : index
    %247 = vector.load %arg19[%c14_163, %c0_164] : memref<16x32xf32, #tpu.memory_space<vmem>>, vector<2x32xf32>
    %c14_165 = arith.constant 14 : index
    %c0_166 = arith.constant 0 : index
    %248 = vector.load %arg20[%c14_165, %c0_166] : memref<16x32xf32, #tpu.memory_space<vmem>>, vector<2x32xf32>
    %c0_167 = arith.constant 0 : index
    %c0_168 = arith.constant 0 : index
    %249 = vector.load %arg4[%c0_167, %c0_168] : memref<32x32xf32, #tpu.memory_space<vmem>>, vector<32x32xf32>
    %cst_169 = arith.constant dense<0.000000e+00> : vector<2x32xf32>
    %250 = tpu.matmul %244, %249, %cst_169 {dimension_numbers = #tpu.dot_dimension_numbers<[1], [0], [0], [1], [0, 0, 1, 1], [], []>} : vector<2x32xf32>, vector<32x32xf32>, vector<2x32xf32> -> vector<2x32xf32>
    %c0_170 = arith.constant 0 : index
    %c0_171 = arith.constant 0 : index
    %251 = vector.load %arg5[%c0_170, %c0_171] : memref<32x32xf32, #tpu.memory_space<vmem>>, vector<32x32xf32>
    %cst_172 = arith.constant dense<0.000000e+00> : vector<2x32xf32>
    %252 = tpu.matmul %244, %251, %cst_172 {dimension_numbers = #tpu.dot_dimension_numbers<[1], [0], [0], [1], [0, 0, 1, 1], [], []>} : vector<2x32xf32>, vector<32x32xf32>, vector<2x32xf32> -> vector<2x32xf32>
    %c0_173 = arith.constant 0 : index
    %c0_174 = arith.constant 0 : index
    %253 = vector.load %arg6[%c0_173, %c0_174] : memref<32x32xf32, #tpu.memory_space<vmem>>, vector<32x32xf32>
    %cst_175 = arith.constant dense<0.000000e+00> : vector<2x32xf32>
    %254 = tpu.matmul %244, %253, %cst_175 {dimension_numbers = #tpu.dot_dimension_numbers<[1], [0], [0], [1], [0, 0, 1, 1], [], []>} : vector<2x32xf32>, vector<32x32xf32>, vector<2x32xf32> -> vector<2x32xf32>
    %255 = arith.addf %254, %27 : vector<2x32xf32>
    %256 = arith.addf %246, %250 : vector<2x32xf32>
    %257 = arith.negf %256 : vector<2x32xf32>
    %258 = math.exp %257 : vector<2x32xf32>
    %cst_176 = arith.constant 1.000000e+00 : f32
    %259 = vector.broadcast %cst_176 : f32 to vector<2x32xf32>
    %260 = arith.addf %259, %258 : vector<2x32xf32>
    %261 = arith.divf %259, %260 : vector<2x32xf32>
    %262 = arith.addf %247, %252 : vector<2x32xf32>
    %263 = arith.negf %262 : vector<2x32xf32>
    %264 = math.exp %263 : vector<2x32xf32>
    %cst_177 = arith.constant 1.000000e+00 : f32
    %265 = vector.broadcast %cst_177 : f32 to vector<2x32xf32>
    %266 = arith.addf %265, %264 : vector<2x32xf32>
    %267 = arith.divf %265, %266 : vector<2x32xf32>
    %268 = arith.mulf %261, %255 : vector<2x32xf32>
    %269 = arith.addf %248, %268 : vector<2x32xf32>
    %270 = math.tanh %269 : vector<2x32xf32>
    %cst_178 = arith.constant 1.000000e+00 : f32
    %271 = vector.broadcast %cst_178 : f32 to vector<2x32xf32>
    %272 = arith.subf %271, %267 : vector<2x32xf32>
    %273 = arith.mulf %272, %270 : vector<2x32xf32>
    %274 = arith.mulf %267, %244 : vector<2x32xf32>
    %275 = arith.addf %273, %274 : vector<2x32xf32>
    %c14_179 = arith.constant 14 : index
    %c0_180 = arith.constant 0 : index
    %276 = vector.load %arg17[%c14_179, %c0_180] : memref<16x32xf32, #tpu.memory_space<vmem>>, vector<2x32xf32>
    tpu.vector_store %arg17[%c14_179, %c0_180], %275 {strides = array<i32>} : memref<16x32xf32, #tpu.memory_space<vmem>>, vector<2x32xf32>,
    %c0_181 = arith.constant 0 : index
    %c0_182 = arith.constant 0 : index
    %277 = vector.load %arg17[%c0_181, %c0_182] : memref<16x32xf32, #tpu.memory_space<vmem>>, vector<16x32xf32>
    %c0_183 = arith.constant 0 : index
    %c0_184 = arith.constant 0 : index
    %278 = vector.load %arg13[%c0_183, %c0_184] : memref<32x32xf32, #tpu.memory_space<vmem>>, vector<32x32xf32>
    %cst_185 = arith.constant dense<0.000000e+00> : vector<16x32xf32>
    %279 = tpu.matmul %277, %278, %cst_185 {dimension_numbers = #tpu.dot_dimension_numbers<[1], [0], [0], [1], [0, 0, 1, 1], [], []>} : vector<16x32xf32>, vector<32x32xf32>, vector<16x32xf32> -> vector<16x32xf32>
    %c0_186 = arith.constant 0 : index
    %c0_187 = arith.constant 0 : index
    %280 = vector.load %arg14[%c0_186, %c0_187] : memref<32x32xf32, #tpu.memory_space<vmem>>, vector<32x32xf32>
    %cst_188 = arith.constant dense<0.000000e+00> : vector<2x32xf32>
    %281 = tpu.matmul %275, %280, %cst_188 {dimension_numbers = #tpu.dot_dimension_numbers<[1], [0], [0], [1], [0, 0, 1, 1], [], []>} : vector<2x32xf32>, vector<32x32xf32>, vector<2x32xf32> -> vector<2x32xf32>
    %282 = tpu.iota {dimensions = array<i32: 0>} : vector<16x2xi32>
    %c2_i32 = arith.constant 2 : i32
    %c0_i32 = arith.constant 0 : i32
    %283 = arith.cmpi eq, %c2_i32, %c0_i32 : i32
    %c1_i32 = arith.constant 1 : i32
    %284 = arith.select %283, %c1_i32, %c2_i32 : i32
    %285 = vector.broadcast %284 : i32 to vector<16x2xi32>
    %286 = arith.remsi %282, %285 : vector<16x2xi32>
    %c0_i32_189 = arith.constant 0 : i32
    %287 = vector.broadcast %c0_i32_189 : i32 to vector<16x2xi32>
    %288 = arith.cmpi ne, %286, %287 : vector<16x2xi32>
    %c0_i32_190 = arith.constant 0 : i32
    %289 = vector.broadcast %c0_i32_190 : i32 to vector<16x2xi32>
    %290 = arith.cmpi slt, %286, %289 : vector<16x2xi32>
    %c0_i32_191 = arith.constant 0 : i32
    %291 = arith.cmpi slt, %284, %c0_i32_191 : i32
    %292 = vector.broadcast %291 : i1 to vector<16x2xi1>
    %293 = vector.broadcast %292 : vector<16x2xi1> to vector<16x2xi1>
    %294 = arith.xori %290, %293 : vector<16x2xi1>
    %295 = arith.andi %294, %288 : vector<16x2xi1>
    %296 = vector.broadcast %284 : i32 to vector<16x2xi32>
    %297 = arith.addi %286, %296 : vector<16x2xi32>
    %298 = arith.select %295, %297, %286 : vector<16x2xi1>, vector<16x2xi32>
    %299 = tpu.iota {dimensions = array<i32: 1>} : vector<16x2xi32>
    %300 = arith.cmpi eq, %298, %299 : vector<16x2xi32>
    %301 = arith.extui %300 : vector<16x2xi1> to vector<16x2xi32>
    %302 = arith.sitofp %301 : vector<16x2xi32> to vector<16x2xf32>
    %303 = tpu.iota {dimensions = array<i32: 1>} : vector<2x16xi32>
    %c2_i32_192 = arith.constant 2 : i32
    %c0_i32_193 = arith.constant 0 : i32
    %304 = arith.cmpi eq, %c2_i32_192, %c0_i32_193 : i32
    %c1_i32_194 = arith.constant 1 : i32
    %305 = arith.select %304, %c1_i32_194, %c2_i32_192 : i32
    %306 = vector.broadcast %305 : i32 to vector<2x16xi32>
    %307 = arith.remsi %303, %306 : vector<2x16xi32>
    %c0_i32_195 = arith.constant 0 : i32
    %308 = vector.broadcast %c0_i32_195 : i32 to vector<2x16xi32>
    %309 = arith.cmpi ne, %307, %308 : vector<2x16xi32>
    %c0_i32_196 = arith.constant 0 : i32
    %310 = vector.broadcast %c0_i32_196 : i32 to vector<2x16xi32>
    %311 = arith.cmpi slt, %307, %310 : vector<2x16xi32>
    %c0_i32_197 = arith.constant 0 : i32
    %312 = arith.cmpi slt, %305, %c0_i32_197 : i32
    %313 = vector.broadcast %312 : i1 to vector<2x16xi1>
    %314 = vector.broadcast %313 : vector<2x16xi1> to vector<2x16xi1>
    %315 = arith.xori %311, %314 : vector<2x16xi1>
    %316 = arith.andi %315, %309 : vector<2x16xi1>
    %317 = vector.broadcast %305 : i32 to vector<2x16xi32>
    %318 = arith.addi %307, %317 : vector<2x16xi32>
    %319 = arith.select %316, %318, %307 : vector<2x16xi1>, vector<2x16xi32>
    %320 = tpu.iota {dimensions = array<i32: 0>} : vector<2x16xi32>
    %321 = arith.cmpi eq, %319, %320 : vector<2x16xi32>
    %322 = arith.extui %321 : vector<2x16xi1> to vector<2x16xi32>
    %323 = arith.sitofp %322 : vector<2x16xi32> to vector<2x16xf32>
    %cst_198 = arith.constant dense<0.000000e+00> : vector<16x32xf32>
    %324 = tpu.matmul %302, %281, %cst_198 {dimension_numbers = #tpu.dot_dimension_numbers<[1], [0], [0], [1], [0, 0, 1, 1], [], []>} : vector<16x2xf32>, vector<2x32xf32>, vector<16x32xf32> -> vector<16x32xf32>
    %325 = arith.addf %279, %324 : vector<16x32xf32>
    %326 = math.tanh %325 : vector<16x32xf32>
    %c0_199 = arith.constant 0 : index
    %c0_200 = arith.constant 0 : index
    %327 = vector.load %arg15[%c0_199, %c0_200] : memref<32x1xf32, #tpu.memory_space<vmem>>, vector<32x1xf32>
    %cst_201 = arith.constant dense<0.000000e+00> : vector<16x1xf32>
    %328 = tpu.matmul %326, %327, %cst_201 {dimension_numbers = #tpu.dot_dimension_numbers<[1], [0], [0], [1], [0, 0, 1, 1], [], []>} : vector<16x32xf32>, vector<32x1xf32>, vector<16x1xf32> -> vector<16x1xf32>
    %cst_202 = arith.constant dense<0xFF800000> : vector<1xf32>
    %329 = vector.multi_reduction <maximumf>, %328, %cst_202 [0] : vector<16x1xf32> to vector<1xf32>
    %330 = vector.shape_cast %329 : vector<1xf32> to vector<1x1xf32>
    %331 = vector.broadcast %330 : vector<1x1xf32> to vector<16x1xf32>
    %332 = arith.subf %328, %331 : vector<16x1xf32>
    %333 = math.exp %332 : vector<16x1xf32>
    %cst_203 = arith.constant dense<0.000000e+00> : vector<2x1xf32>
    %334 = tpu.matmul %323, %333, %cst_203 {dimension_numbers = #tpu.dot_dimension_numbers<[1], [0], [0], [1], [0, 0, 1, 1], [], []>} : vector<2x16xf32>, vector<16x1xf32>, vector<2x1xf32> -> vector<2x1xf32>
    %335 = vector.broadcast %333 : vector<16x1xf32> to vector<16x32xf32>
    %336 = arith.mulf %335, %277 : vector<16x32xf32>
    %cst_204 = arith.constant dense<0.000000e+00> : vector<2x32xf32>
    %337 = tpu.matmul %323, %336, %cst_204 {dimension_numbers = #tpu.dot_dimension_numbers<[1], [0], [0], [1], [0, 0, 1, 1], [], []>} : vector<2x16xf32>, vector<16x32xf32>, vector<2x32xf32> -> vector<2x32xf32>
    %338 = vector.broadcast %334 : vector<2x1xf32> to vector<2x32xf32>
    %339 = arith.divf %337, %338 : vector<2x32xf32>
    %c0_205 = arith.constant 0 : index
    %c0_206 = arith.constant 0 : index
    %340 = vector.load %arg16[%c0_205, %c0_206] : memref<2x32xf32, #tpu.memory_space<vmem>>, vector<2x32xf32>
    tpu.vector_store %arg16[%c0_205, %c0_206], %339 {strides = array<i32>} : memref<2x32xf32, #tpu.memory_space<vmem>>, vector<2x32xf32>,
    return
  }
}

</mosaic_0001>

<llo_original>
// kernel: tpu_custom_call.1
$region0: #{tpu_custom_call.1}
  #allocation0 [shape = 'u32[]', space=smem, size = 0x4, offset = 0x4, fixed_abs, tag = 'smem constant byte address 0x4 - core index']
  #allocation1 [shape = 'u32[144,128]{1,0:T(1,128)}', space=vmem, size = 0x12000, scoped, tag = 'internal scratch']
  #allocation2 [shape = 'f32[16,32]{1,0:T(8,128)}', space=vmem, size = 0x2000, scoped, tag = 'scratch operand']
  #allocation3 [shape = 'f32[16,32]{1,0:T(8,128)}', space=vmem, size = 0x2000, scoped, tag = 'scratch operand']
  #allocation4 [shape = 'f32[16,32]{1,0:T(8,128)}', space=vmem, size = 0x2000, scoped, tag = 'scratch operand']
  #allocation5 [shape = 'f32[16,32]{1,0:T(8,128)}', space=vmem, size = 0x2000, scoped, tag = 'scratch operand']
  %s0 = inlined_call_operand.vmem [shape: f32[16,4], index: 0, kind: input, shape index: {}]
  %s1 = inlined_call_operand.hbm [shape: f32[4,32], index: 1, kind: input, shape index: {}]
  %s2 = inlined_call_operand.hbm [shape: f32[4,32], index: 2, kind: input, shape index: {}]
  %s3 = inlined_call_operand.hbm [shape: f32[4,32], index: 3, kind: input, shape index: {}]
  %s4 = inlined_call_operand.vmem [shape: f32[32,32], index: 4, kind: input, shape index: {}]
  %s5 = inlined_call_operand.hbm [shape: f32[32,32], index: 5, kind: input, shape index: {}]
  %s6 = inlined_call_operand.hbm [shape: f32[32,32], index: 6, kind: input, shape index: {}]
  %s7 = inlined_call_operand.vmem [shape: f32[1,32], index: 7, kind: input, shape index: {}]
  %s8 = inlined_call_operand.vmem [shape: f32[1,32], index: 8, kind: input, shape index: {}]
  %s9 = inlined_call_operand.vmem [shape: f32[1,32], index: 9, kind: input, shape index: {}]
  %s10 = inlined_call_operand.vmem [shape: f32[1,32], index: 10, kind: input, shape index: {}]
  %s11 = inlined_call_operand.vmem [shape: f32[1,32], index: 11, kind: input, shape index: {}]
  %s12 = inlined_call_operand.vmem [shape: f32[1,32], index: 12, kind: input, shape index: {}]
  %s13 = inlined_call_operand.vmem [shape: f32[32,32], index: 13, kind: input, shape index: {}]
  %s14 = inlined_call_operand.hbm [shape: f32[32,32], index: 14, kind: input, shape index: {}]
  %s15 = inlined_call_operand.vmem [shape: f32[32,1], index: 15, kind: input, shape index: {}]
  %s16 = inlined_call_operand.hbm [shape: f32[2,32], index: 16, kind: output, shape index: {}]
  %s17 = sld [smem:[#allocation0]]
  $region98: #{tpu_custom_call.1} parent=0
    _
  %s19 = ssub.s32 1, %s17
  %s20 = scalar_select 0, %s19, %s17
  $region1: #{tpu_custom_call.1} parent=0
    #allocation6 [shape = 'u8[2048]{0}', space=vmem, size = 0x800, scoped, tag = 'input window, operand 1, single buffered']
    #allocation7 [shape = 's32[1]{0}', space=sflag, size = 0x4, scoped, tag = 'scoped memory for tpu_custom_call.1']
    #allocation8 [shape = 's32[1]{0}', space=sflag, size = 0x4, scoped, tag = 'scoped memory for tpu_custom_call.1']
    #allocation9 [shape = 'u8[2048]{0}', space=vmem, size = 0x800, scoped, tag = 'input window, operand 2, single buffered']
    #allocation10 [shape = 's32[1]{0}', space=sflag, size = 0x4, scoped, tag = 'scoped memory for tpu_custom_call.1']
    #allocation11 [shape = 'u8[2048]{0}', space=vmem, size = 0x800, scoped, tag = 'input window, operand 3, single buffered']
    #allocation12 [shape = 'u8[16384]{0}', space=vmem, size = 0x4000, scoped, tag = 'input window, operand 5, single buffered']
    #allocation13 [shape = 's32[1]{0}', space=sflag, size = 0x4, scoped, tag = 'scoped memory for tpu_custom_call.1']
    #allocation14 [shape = 'u8[16384]{0}', space=vmem, size = 0x4000, scoped, tag = 'input window, operand 6, single buffered']
    #allocation15 [shape = 'u8[16384]{0}', space=vmem, size = 0x4000, scoped, tag = 'input window, operand 14, single buffered']
    #allocation16 [shape = 's32[1]{0}', space=sflag, size = 0x4, scoped, tag = 'scoped memory for tpu_custom_call.1']
    #allocation17 [shape = 'u8[1024]{0}', space=vmem, size = 0x400, scoped, tag = 'output window, operand 0, single buffered']
    %21 = vsyncpa [#allocation7], 0
    %22 = vsyncpa [#allocation10], 0
    %23 = vsyncpa [#allocation13], 0
    %24 = vsyncpa [#allocation16], 0
    %25 = vsyncpa [#allocation8], 0
    // Predicated region
    $region2: #{tpu_custom_call.1} parent=1 // pred_check
      _
    $region3: #{tpu_custom_call.1} parent=1 // pred_check_branch
      %27 = sbr.rel (0) target = $region5
    $region4: #{tpu_custom_call.1} parent=1 // pred_region
      _
    $region5: #{tpu_custom_call.1} parent=1 // pred_fallthru
      _
    // Predicated region
    $region6: #{tpu_custom_call.1} parent=1 // pred_check
      _
    $region7: #{tpu_custom_call.1} parent=1 // pred_check_branch
      %29 = sbr.rel (0) target = $region9
    $region8: #{tpu_custom_call.1} parent=1 // pred_region
      %s31 = ssub.s32 64, 64
      %32 = vsyncadd [#allocation7], %s31
      %s34 = sshll.u32 [#allocation6], 4
      %s35 = int_to_ptr.vmem [resolvable:$true] %s34
      %37 = dma.hbm_to_vmem [thread:$0]  %s1, 64, %s35, [#allocation7]
    $region9: #{tpu_custom_call.1} parent=1 // pred_fallthru
      _
    // Predicated region
    $region10: #{tpu_custom_call.1} parent=1 // pred_check
      _
    $region11: #{tpu_custom_call.1} parent=1 // pred_check_branch
      %39 = sbr.rel (0) target = $region13
    $region12: #{tpu_custom_call.1} parent=1 // pred_region
      %s41 = ssub.s32 64, 64
      %42 = vsyncadd [#allocation10], %s41
      %s44 = sshll.u32 [#allocation9], 4
      %s45 = int_to_ptr.vmem [resolvable:$true] %s44
      %47 = dma.hbm_to_vmem [thread:$0]  %s2, 64, %s45, [#allocation10]
    $region13: #{tpu_custom_call.1} parent=1 // pred_fallthru
      _
    // Predicated region
    $region14: #{tpu_custom_call.1} parent=1 // pred_check
      _
    $region15: #{tpu_custom_call.1} parent=1 // pred_check_branch
      %49 = sbr.rel (0) target = $region17
    $region16: #{tpu_custom_call.1} parent=1 // pred_region
      %s51 = ssub.s32 64, 64
      %52 = vsyncadd [#allocation10], %s51
      %s54 = sshll.u32 [#allocation11], 4
      %s55 = int_to_ptr.vmem [resolvable:$true] %s54
      %57 = dma.hbm_to_vmem [thread:$0]  %s3, 64, %s55, [#allocation10]
    $region17: #{tpu_custom_call.1} parent=1 // pred_fallthru
      _
    // Predicated region
    $region18: #{tpu_custom_call.1} parent=1 // pred_check
      _
    $region19: #{tpu_custom_call.1} parent=1 // pred_check_branch
      %59 = sbr.rel (0) target = $region21
    $region20: #{tpu_custom_call.1} parent=1 // pred_region
      _
    $region21: #{tpu_custom_call.1} parent=1 // pred_fallthru
      _
    // Predicated region
    $region22: #{tpu_custom_call.1} parent=1 // pred_check
      _
    $region23: #{tpu_custom_call.1} parent=1 // pred_check_branch
      %61 = sbr.rel (0) target = $region25
    $region24: #{tpu_custom_call.1} parent=1 // pred_region
      %s63 = ssub.s32 512, 512
      %64 = vsyncadd [#allocation13], %s63
      %s65 = sshll.u32 [#allocation12], 4
      %s66 = int_to_ptr.vmem [resolvable:$true] %s65
      %71 = dma.hbm_to_vmem [thread:$0]  %s5, 512, %s66, [#allocation13], 128, 128, 8
    $region25: #{tpu_custom_call.1} parent=1 // pred_fallthru
      _
    // Predicated region
    $region26: #{tpu_custom_call.1} parent=1 // pred_check
      _
    $region27: #{tpu_custom_call.1} parent=1 // pred_check_branch
      %73 = sbr.rel (0) target = $region29
    $region28: #{tpu_custom_call.1} parent=1 // pred_region
      %s75 = ssub.s32 512, 512
      %76 = vsyncadd [#allocation13], %s75
      %s77 = sshll.u32 [#allocation14], 4
      %s78 = int_to_ptr.vmem [resolvable:$true] %s77
      %83 = dma.hbm_to_vmem [thread:$0]  %s6, 512, %s78, [#allocation13], 128, 128, 8
    $region29: #{tpu_custom_call.1} parent=1 // pred_fallthru
      _
    // Predicated region
    $region30: #{tpu_custom_call.1} parent=1 // pred_check
      _
    $region31: #{tpu_custom_call.1} parent=1 // pred_check_branch
      %85 = sbr.rel (0) target = $region33
    $region32: #{tpu_custom_call.1} parent=1 // pred_region
      _
    $region33: #{tpu_custom_call.1} parent=1 // pred_fallthru
      _
    // Predicated region
    $region34: #{tpu_custom_call.1} parent=1 // pred_check
      _
    $region35: #{tpu_custom_call.1} parent=1 // pred_check_branch
      %87 = sbr.rel (0) target = $region37
    $region36: #{tpu_custom_call.1} parent=1 // pred_region
      _
    $region37: #{tpu_custom_call.1} parent=1 // pred_fallthru
      _
    // Predicated region
    $region38: #{tpu_custom_call.1} parent=1 // pred_check
      _
    $region39: #{tpu_custom_call.1} parent=1 // pred_check_branch
      %89 = sbr.rel (0) target = $region41
    $region40: #{tpu_custom_call.1} parent=1 // pred_region
      _
    $region41: #{tpu_custom_call.1} parent=1 // pred_fallthru
      _
    // Predicated region
    $region42: #{tpu_custom_call.1} parent=1 // pred_check
      _
    $region43: #{tpu_custom_call.1} parent=1 // pred_check_branch
      %91 = sbr.rel (0) target = $region45
    $region44: #{tpu_custom_call.1} parent=1 // pred_region
      _
    $region45: #{tpu_custom_call.1} parent=1 // pred_fallthru
      _
    // Predicated region
    $region46: #{tpu_custom_call.1} parent=1 // pred_check
      _
    $region47: #{tpu_custom_call.1} parent=1 // pred_check_branch
      %93 = sbr.rel (0) target = $region49
    $region48: #{tpu_custom_call.1} parent=1 // pred_region
      _
    $region49: #{tpu_custom_call.1} parent=1 // pred_fallthru
      _
    // Predicated region
    $region50: #{tpu_custom_call.1} parent=1 // pred_check
      _
    $region51: #{tpu_custom_call.1} parent=1 // pred_check_branch
      %95 = sbr.rel (0) target = $region53
    $region52: #{tpu_custom_call.1} parent=1 // pred_region
      _
    $region53: #{tpu_custom_call.1} parent=1 // pred_fallthru
      _
    // Predicated region
    $region54: #{tpu_custom_call.1} parent=1 // pred_check
      _
    $region55: #{tpu_custom_call.1} parent=1 // pred_check_branch
      %97 = sbr.rel (0) target = $region57
    $region56: #{tpu_custom_call.1} parent=1 // pred_region
      _
    $region57: #{tpu_custom_call.1} parent=1 // pred_fallthru
      _
    // Predicated region
    $region58: #{tpu_custom_call.1} parent=1 // pred_check
      _
    $region59: #{tpu_custom_call.1} parent=1 // pred_check_branch
      %99 = sbr.rel (0) target = $region61
    $region60: #{tpu_custom_call.1} parent=1 // pred_region
      %s101 = ssub.s32 512, 512
      %102 = vsyncadd [#allocation16], %s101
      %s103 = sshll.u32 [#allocation15], 4
      %s104 = int_to_ptr.vmem [resolvable:$true] %s103
      %109 = dma.hbm_to_vmem [thread:$0]  %s14, 512, %s104, [#allocation16], 128, 128, 8
    $region61: #{tpu_custom_call.1} parent=1 // pred_fallthru
      _
    // Predicated region
    $region62: #{tpu_custom_call.1} parent=1 // pred_check
      _
    $region63: #{tpu_custom_call.1} parent=1 // pred_check_branch
      %111 = sbr.rel (0) target = $region65
    $region64: #{tpu_custom_call.1} parent=1 // pred_region
      _
    $region65: #{tpu_custom_call.1} parent=1 // pred_fallthru
      _
    // Predicated region
    $region66: #{tpu_custom_call.1} parent=1 // pred_check
      _
    $region67: #{tpu_custom_call.1} parent=1 // pred_check_branch
      %113 = sbr.rel (0) target = $region69
    $region68: #{tpu_custom_call.1} parent=1 // pred_region
      %114 = dma.done [#allocation7], 64
    $region69: #{tpu_custom_call.1} parent=1 // pred_fallthru
      _
    // Predicated region
    $region70: #{tpu_custom_call.1} parent=1 // pred_check
      _
    $region71: #{tpu_custom_call.1} parent=1 // pred_check_branch
      %116 = sbr.rel (0) target = $region73
    $region72: #{tpu_custom_call.1} parent=1 // pred_region
      %117 = dma.done [#allocation10], 64
    $region73: #{tpu_custom_call.1} parent=1 // pred_fallthru
      _
    // Predicated region
    $region74: #{tpu_custom_call.1} parent=1 // pred_check
      _
    $region75: #{tpu_custom_call.1} parent=1 // pred_check_branch
      %119 = sbr.rel (0) target = $region77
    $region76: #{tpu_custom_call.1} parent=1 // pred_region
      %120 = dma.done [#allocation10], 64
    $region77: #{tpu_custom_call.1} parent=1 // pred_fallthru
      _
    // Predicated region
    $region78: #{tpu_custom_call.1} parent=1 // pred_check
      _
    $region79: #{tpu_custom_call.1} parent=1 // pred_check_branch
      %122 = sbr.rel (0) target = $region81
    $region80: #{tpu_custom_call.1} parent=1 // pred_region
      %123 = dma.done [#allocation13], 512
    $region81: #{tpu_custom_call.1} parent=1 // pred_fallthru
      _
    // Predicated region
    $region82: #{tpu_custom_call.1} parent=1 // pred_check
      _
    $region83: #{tpu_custom_call.1} parent=1 // pred_check_branch
      %125 = sbr.rel (0) target = $region85
    $region84: #{tpu_custom_call.1} parent=1 // pred_region
      %126 = dma.done [#allocation13], 512
    $region85: #{tpu_custom_call.1} parent=1 // pred_fallthru
      _
    // Predicated region
    $region86: #{tpu_custom_call.1} parent=1 // pred_check
      _
    $region87: #{tpu_custom_call.1} parent=1 // pred_check_branch
      %128 = sbr.rel (0) target = $region89
    $region88: #{tpu_custom_call.1} parent=1 // pred_region
      %129 = dma.done [#allocation16], 512
    $region89: #{tpu_custom_call.1} parent=1 // pred_fallthru
      _
    %v130 = vld [vmem:[%s0] sm:$0xff]
    %v131 = vld [vmem:[%s0 + $0x8] sm:$0xff]
    %v132 = vld [vmem:[#allocation6] sm:$0xf]
    %v133 = vld [vmem:[%s7] sm:$0x1]
    %v135 = vlaneseq
    %v136 = vshrl.u32 %v135, 7
    %v137 = vsub.s32 0, %v136
    %v138 = vrot.slane %v133, %v137
    %vm140 = vcmask 31744
    %v142 = vsel %vm140, %v130, 0
    %v145 = vsel %vm140, %v131, 0
    %vm147 = vcmask 1043456
    %v149 = vsel %vm147, %v132, 0
    %151 = vmatprep.subr.mxu0 0.0
    %152 = vmatpush1.msra.mxu0 0.0
    %153 = vmatprep.subr.mxu0 0.0
    %154 = vmatpush1.msra.mxu0 0.0
    %155 = vmatprep.subr.mxu0 0.0
    %156 = vmatpush1.msra.mxu0 0.0
    %157 = vmatprep.subr.mxu0 0.0
    %158 = vmatpush1.msra.mxu0 0.0
    %159 = vmatprep.subr.mxu0 0.0
    %160 = vmatpush1.msra.mxu0 0.0
    %161 = vmatprep.subr.mxu0 0.0
    %162 = vmatpush1.msra.mxu0 0.0
    %163 = vmatprep.subr.mxu0 0.0
    %164 = vmatpush1.msra.mxu0 0.0
    %165 = vmatprep.subr.mxu0 0.0
    %166 = vmatpush1.msra.mxu0 0.0
    %167 = vmatprep.subr.mxu0 0.0
    %168 = vmatpush1.msra.mxu0 0.0
    %169 = vmatprep.subr.mxu0 0.0
    %170 = vmatpush1.msra.mxu0 0.0
    %171 = vmatprep.subr.mxu0 0.0
    %172 = vmatpush1.msra.mxu0 0.0
    %173 = vmatprep.subr.mxu0 0.0
    %174 = vmatpush1.msra.mxu0 0.0
    %175 = vmatprep.subr.mxu0 0.0
    %176 = vmatpush1.msra.mxu0 0.0
    %177 = vmatprep.subr.mxu0 0.0
    %178 = vmatpush1.msra.mxu0 0.0
    %179 = vmatprep.subr.mxu0 0.0
    %180 = vmatpush1.msra.mxu0 0.0
    %181 = vmatprep.subr.mxu0 0.0
    %182 = vmatpush1.msra.mxu0 %v149
    %183 = vmatprep.subr.mxu0 0.0
    %184 = vmatpush2.msra.mxu0 0.0
    %185 = vmatprep.subr.mxu0 0.0
    %186 = vmatpush2.msra.mxu0 0.0
    %187 = vmatprep.subr.mxu0 0.0
    %188 = vmatpush2.msra.mxu0 0.0
    %189 = vmatprep.subr.mxu0 0.0
    %190 = vmatpush2.msra.mxu0 0.0
    %191 = vmatprep.subr.mxu0 0.0
    %192 = vmatpush2.msra.mxu0 0.0
    %193 = vmatprep.subr.mxu0 0.0
    %194 = vmatpush2.msra.mxu0 0.0
    %195 = vmatprep.subr.mxu0 0.0
    %196 = vmatpush2.msra.mxu0 0.0
    %197 = vmatprep.subr.mxu0 0.0
    %198 = vmatpush2.msra.mxu0 0.0
    %199 = vmatprep.subr.mxu0 0.0
    %200 = vmatpush2.msra.mxu0 0.0
    %201 = vmatprep.subr.mxu0 0.0
    %202 = vmatpush2.msra.mxu0 0.0
    %203 = vmatprep.subr.mxu0 0.0
    %204 = vmatpush2.msra.mxu0 0.0
    %205 = vmatprep.subr.mxu0 0.0
    %206 = vmatpush2.msra.mxu0 0.0
    %207 = vmatprep.subr.mxu0 0.0
    %208 = vmatpush2.msra.mxu0 0.0
    %209 = vmatprep.subr.mxu0 0.0
    %210 = vmatpush2.msra.mxu0 0.0
    %211 = vmatprep.subr.mxu0 0.0
    %212 = vmatpush2.msra.mxu0 0.0
    %213 = vmatprep.subr.mxu0 0.0
    %214 = vmatpush2.msra.mxu0 0.0
    %215 = vmatprep.mubr.f32.mxu0 0.0
    %216 = vmatmul.mubr.f32.gmra.mxu0 %v142
    %v217 = vpop.f32.mrf.mxu0
    %v218 = vadd.f32 %v138, %v217
    %v219 = vpop.f32.mrf.mxu0
    %220 = vmatprep.mubr.f32.mxu0 0.0
    %221 = vmatmul.mubr.f32.gmra.mxu0 %v145
    %v222 = vpop.f32.mrf.mxu0
    %v223 = vadd.f32 %v138, %v222
    %v224 = vpop.f32.mrf.mxu0
    %225 = vdwg.mxu0
    %v226 = vld [vmem:[%s10] sm:$0x1]
    %v228 = vlaneseq
    %v229 = vshrl.u32 %v228, 7
    %v230 = vsub.s32 0, %v229
    %v231 = vrot.slane %v226, %v230
    %v233 = vadd.f32 %v218, %v231
    %v234 = vadd.f32 %v223, %v231
    %vm235 = vcmask 261120
    %236 = vst.msk [vmem:[#allocation3] sm:$0xff] %vm235, %v233
    %237 = vst.msk [vmem:[#allocation3 + $0x8] sm:$0xff] %vm235, %v234
    %v238 = vld [vmem:[#allocation9] sm:$0xf]
    %v239 = vld [vmem:[%s8] sm:$0x1]
    %v241 = vlaneseq
    %v242 = vshrl.u32 %v241, 7
    %v243 = vsub.s32 0, %v242
    %v244 = vrot.slane %v239, %v243
    %v247 = vsel %vm147, %v238, 0
    %249 = vmatprep.subr.mxu0 0.0
    %250 = vmatpush1.msra.mxu0 0.0
    %251 = vmatprep.subr.mxu0 0.0
    %252 = vmatpush1.msra.mxu0 0.0
    %253 = vmatprep.subr.mxu0 0.0
    %254 = vmatpush1.msra.mxu0 0.0
    %255 = vmatprep.subr.mxu0 0.0
    %256 = vmatpush1.msra.mxu0 0.0
    %257 = vmatprep.subr.mxu0 0.0
    %258 = vmatpush1.msra.mxu0 0.0
    %259 = vmatprep.subr.mxu0 0.0
    %260 = vmatpush1.msra.mxu0 0.0
    %261 = vmatprep.subr.mxu0 0.0
    %262 = vmatpush1.msra.mxu0 0.0
    %263 = vmatprep.subr.mxu0 0.0
    %264 = vmatpush1.msra.mxu0 0.0
    %265 = vmatprep.subr.mxu0 0.0
    %266 = vmatpush1.msra.mxu0 0.0
    %267 = vmatprep.subr.mxu0 0.0
    %268 = vmatpush1.msra.mxu0 0.0
    %269 = vmatprep.subr.mxu0 0.0
    %270 = vmatpush1.msra.mxu0 0.0
    %271 = vmatprep.subr.mxu0 0.0
    %272 = vmatpush1.msra.mxu0 0.0
    %273 = vmatprep.subr.mxu0 0.0
    %274 = vmatpush1.msra.mxu0 0.0
    %275 = vmatprep.subr.mxu0 0.0
    %276 = vmatpush1.msra.mxu0 0.0
    %277 = vmatprep.subr.mxu0 0.0
    %278 = vmatpush1.msra.mxu0 0.0
    %279 = vmatprep.subr.mxu0 0.0
    %280 = vmatpush1.msra.mxu0 %v247
    %281 = vmatprep.subr.mxu0 0.0
    %282 = vmatpush2.msra.mxu0 0.0
    %283 = vmatprep.subr.mxu0 0.0
    %284 = vmatpush2.msra.mxu0 0.0
    %285 = vmatprep.subr.mxu0 0.0
    %286 = vmatpush2.msra.mxu0 0.0
    %287 = vmatprep.subr.mxu0 0.0
    %288 = vmatpush2.msra.mxu0 0.0
    %289 = vmatprep.subr.mxu0 0.0
    %290 = vmatpush2.msra.mxu0 0.0
    %291 = vmatprep.subr.mxu0 0.0
    %292 = vmatpush2.msra.mxu0 0.0
    %293 = vmatprep.subr.mxu0 0.0
    %294 = vmatpush2.msra.mxu0 0.0
    %295 = vmatprep.subr.mxu0 0.0
    %296 = vmatpush2.msra.mxu0 0.0
    %297 = vmatprep.subr.mxu0 0.0
    %298 = vmatpush2.msra.mxu0 0.0
    %299 = vmatprep.subr.mxu0 0.0
    %300 = vmatpush2.msra.mxu0 0.0
    %301 = vmatprep.subr.mxu0 0.0
    %302 = vmatpush2.msra.mxu0 0.0
    %303 = vmatprep.subr.mxu0 0.0
    %304 = vmatpush2.msra.mxu0 0.0
    %305 = vmatprep.subr.mxu0 0.0
    %306 = vmatpush2.msra.mxu0 0.0
    %307 = vmatprep.subr.mxu0 0.0
    %308 = vmatpush2.msra.mxu0 0.0
    %309 = vmatprep.subr.mxu0 0.0
    %310 = vmatpush2.msra.mxu0 0.0
    %311 = vmatprep.subr.mxu0 0.0
    %312 = vmatpush2.msra.mxu0 0.0
    %313 = vmatprep.mubr.f32.mxu0 0.0
    %314 = vmatmul.mubr.f32.gmra.mxu0 %v142
    %v315 = vpop.f32.mrf.mxu0
    %v316 = vadd.f32 %v244, %v315
    %v317 = vpop.f32.mrf.mxu0
    %318 = vmatprep.mubr.f32.mxu0 0.0
    %319 = vmatmul.mubr.f32.gmra.mxu0 %v145
    %v320 = vpop.f32.mrf.mxu0
    %v321 = vadd.f32 %v244, %v320
    %v322 = vpop.f32.mrf.mxu0
    %323 = vdwg.mxu0
    %v324 = vld [vmem:[%s11] sm:$0x1]
    %v326 = vlaneseq
    %v327 = vshrl.u32 %v326, 7
    %v328 = vsub.s32 0, %v327
    %v329 = vrot.slane %v324, %v328
    %v331 = vadd.f32 %v316, %v329
    %v332 = vadd.f32 %v321, %v329
    %333 = vst.msk [vmem:[#allocation4] sm:$0xff] %vm235, %v331
    %334 = vst.msk [vmem:[#allocation4 + $0x8] sm:$0xff] %vm235, %v332
    %v335 = vld [vmem:[#allocation11] sm:$0xf]
    %v336 = vld [vmem:[%s9] sm:$0x1]
    %v338 = vlaneseq
    %v339 = vshrl.u32 %v338, 7
    %v340 = vsub.s32 0, %v339
    %v341 = vrot.slane %v336, %v340
    %v344 = vsel %vm147, %v335, 0
    %346 = vmatprep.subr.mxu0 0.0
    %347 = vmatpush1.msra.mxu0 0.0
    %348 = vmatprep.subr.mxu0 0.0
    %349 = vmatpush1.msra.mxu0 0.0
    %350 = vmatprep.subr.mxu0 0.0
    %351 = vmatpush1.msra.mxu0 0.0
    %352 = vmatprep.subr.mxu0 0.0
    %353 = vmatpush1.msra.mxu0 0.0
    %354 = vmatprep.subr.mxu0 0.0
    %355 = vmatpush1.msra.mxu0 0.0
    %356 = vmatprep.subr.mxu0 0.0
    %357 = vmatpush1.msra.mxu0 0.0
    %358 = vmatprep.subr.mxu0 0.0
    %359 = vmatpush1.msra.mxu0 0.0
    %360 = vmatprep.subr.mxu0 0.0
    %361 = vmatpush1.msra.mxu0 0.0
    %362 = vmatprep.subr.mxu0 0.0
    %363 = vmatpush1.msra.mxu0 0.0
    %364 = vmatprep.subr.mxu0 0.0
    %365 = vmatpush1.msra.mxu0 0.0
    %366 = vmatprep.subr.mxu0 0.0
    %367 = vmatpush1.msra.mxu0 0.0
    %368 = vmatprep.subr.mxu0 0.0
    %369 = vmatpush1.msra.mxu0 0.0
    %370 = vmatprep.subr.mxu0 0.0
    %371 = vmatpush1.msra.mxu0 0.0
    %372 = vmatprep.subr.mxu0 0.0
    %373 = vmatpush1.msra.mxu0 0.0
    %374 = vmatprep.subr.mxu0 0.0
    %375 = vmatpush1.msra.mxu0 0.0
    %376 = vmatprep.subr.mxu0 0.0
    %377 = vmatpush1.msra.mxu0 %v344
    %378 = vmatprep.subr.mxu0 0.0
    %379 = vmatpush2.msra.mxu0 0.0
    %380 = vmatprep.subr.mxu0 0.0
    %381 = vmatpush2.msra.mxu0 0.0
    %382 = vmatprep.subr.mxu0 0.0
    %383 = vmatpush2.msra.mxu0 0.0
    %384 = vmatprep.subr.mxu0 0.0
    %385 = vmatpush2.msra.mxu0 0.0
    %386 = vmatprep.subr.mxu0 0.0
    %387 = vmatpush2.msra.mxu0 0.0
    %388 = vmatprep.subr.mxu0 0.0
    %389 = vmatpush2.msra.mxu0 0.0
    %390 = vmatprep.subr.mxu0 0.0
    %391 = vmatpush2.msra.mxu0 0.0
    %392 = vmatprep.subr.mxu0 0.0
    %393 = vmatpush2.msra.mxu0 0.0
    %394 = vmatprep.subr.mxu0 0.0
    %395 = vmatpush2.msra.mxu0 0.0
    %396 = vmatprep.subr.mxu0 0.0
    %397 = vmatpush2.msra.mxu0 0.0
    %398 = vmatprep.subr.mxu0 0.0
    %399 = vmatpush2.msra.mxu0 0.0
    %400 = vmatprep.subr.mxu0 0.0
    %401 = vmatpush2.msra.mxu0 0.0
    %402 = vmatprep.subr.mxu0 0.0
    %403 = vmatpush2.msra.mxu0 0.0
    %404 = vmatprep.subr.mxu0 0.0
    %405 = vmatpush2.msra.mxu0 0.0
    %406 = vmatprep.subr.mxu0 0.0
    %407 = vmatpush2.msra.mxu0 0.0
    %408 = vmatprep.subr.mxu0 0.0
    %409 = vmatpush2.msra.mxu0 0.0
    %410 = vmatprep.mubr.f32.mxu0 0.0
    %411 = vmatmul.mubr.f32.gmra.mxu0 %v142
    %v412 = vpop.f32.mrf.mxu0
    %v413 = vadd.f32 %v341, %v412
    %v414 = vpop.f32.mrf.mxu0
    %415 = vmatprep.mubr.f32.mxu0 0.0
    %416 = vmatmul.mubr.f32.gmra.mxu0 %v145
    %v417 = vpop.f32.mrf.mxu0
    %v418 = vadd.f32 %v341, %v417
    %v419 = vpop.f32.mrf.mxu0
    %420 = vdwg.mxu0
    %421 = vst.msk [vmem:[#allocation5] sm:$0xff] %vm235, %v413
    %422 = vst.msk [vmem:[#allocation5 + $0x8] sm:$0xff] %vm235, %v418
    %v423 = vld [vmem:[%s12] sm:$0x1]
    %v425 = vlaneseq
    %v426 = vshrl.u32 %v425, 7
    %v427 = vsub.s32 0, %v426
    %v428 = vrot.slane %v423, %v427
    %v430 = vld [vmem:[#allocation3] sm:$0x3]
    %v431 = vld [vmem:[#allocation4] sm:$0x3]
    %v432 = vld [vmem:[#allocation5] sm:$0x3]
    %v433 = vld [vmem:[%s4] sm:$0xff]
    %v434 = vld [vmem:[%s4 + $0x8] sm:$0xff]
    %v435 = vld [vmem:[%s4 + $0x10] sm:$0xff]
    %v436 = vld [vmem:[%s4 + $0x18] sm:$0xff]
    %v438 = vsel %vm235, 0.0, 0
    %440 = vmatprep.subr.mxu0 0.0
    %441 = vmatpush1.msra.mxu0 0.0
    %442 = vmatprep.subr.mxu0 0.0
    %443 = vmatpush1.msra.mxu0 0.0
    %444 = vmatprep.subr.mxu0 0.0
    %445 = vmatpush1.msra.mxu0 0.0
    %446 = vmatprep.subr.mxu0 0.0
    %447 = vmatpush1.msra.mxu0 0.0
    %448 = vmatprep.subr.mxu0 0.0
    %449 = vmatpush1.msra.mxu0 0.0
    %450 = vmatprep.subr.mxu0 0.0
    %451 = vmatpush1.msra.mxu0 0.0
    %452 = vmatprep.subr.mxu0 0.0
    %453 = vmatpush1.msra.mxu0 0.0
    %454 = vmatprep.subr.mxu0 0.0
    %455 = vmatpush1.msra.mxu0 0.0
    %456 = vmatprep.subr.mxu0 0.0
    %457 = vmatpush1.msra.mxu0 0.0
    %458 = vmatprep.subr.mxu0 0.0
    %459 = vmatpush1.msra.mxu0 0.0
    %460 = vmatprep.subr.mxu0 0.0
    %461 = vmatpush1.msra.mxu0 0.0
    %462 = vmatprep.subr.mxu0 0.0
    %463 = vmatpush1.msra.mxu0 0.0
    %464 = vmatprep.subr.mxu0 0.0
    %465 = vmatpush1.msra.mxu0 %v436
    %466 = vmatprep.subr.mxu0 0.0
    %467 = vmatpush1.msra.mxu0 %v435
    %468 = vmatprep.subr.mxu0 0.0
    %469 = vmatpush1.msra.mxu0 %v434
    %470 = vmatprep.subr.mxu0 0.0
    %471 = vmatpush1.msra.mxu0 %v433
    %472 = vmatprep.subr.mxu0 0.0
    %473 = vmatpush2.msra.mxu0 0.0
    %474 = vmatprep.subr.mxu0 0.0
    %475 = vmatpush2.msra.mxu0 0.0
    %476 = vmatprep.subr.mxu0 0.0
    %477 = vmatpush2.msra.mxu0 0.0
    %478 = vmatprep.subr.mxu0 0.0
    %479 = vmatpush2.msra.mxu0 0.0
    %480 = vmatprep.subr.mxu0 0.0
    %481 = vmatpush2.msra.mxu0 0.0
    %482 = vmatprep.subr.mxu0 0.0
    %483 = vmatpush2.msra.mxu0 0.0
    %484 = vmatprep.subr.mxu0 0.0
    %485 = vmatpush2.msra.mxu0 0.0
    %486 = vmatprep.subr.mxu0 0.0
    %487 = vmatpush2.msra.mxu0 0.0
    %488 = vmatprep.subr.mxu0 0.0
    %489 = vmatpush2.msra.mxu0 0.0
    %490 = vmatprep.subr.mxu0 0.0
    %491 = vmatpush2.msra.mxu0 0.0
    %492 = vmatprep.subr.mxu0 0.0
    %493 = vmatpush2.msra.mxu0 0.0
    %494 = vmatprep.subr.mxu0 0.0
    %495 = vmatpush2.msra.mxu0 0.0
    %496 = vmatprep.subr.mxu0 0.0
    %497 = vmatpush2.msra.mxu0 0.0
    %498 = vmatprep.subr.mxu0 0.0
    %499 = vmatpush2.msra.mxu0 0.0
    %500 = vmatprep.subr.mxu0 0.0
    %501 = vmatpush2.msra.mxu0 0.0
    %502 = vmatprep.subr.mxu0 0.0
    %503 = vmatpush2.msra.mxu0 0.0
    %504 = vmatprep.mubr.f32.mxu0 0.0
    %505 = vmatmul.mubr.f32.gmra.mxu0 %v438
    %v506 = vpop.f32.mrf.mxu0
    %v507 = vadd.f32 0.0, %v506
    %v508 = vpop.f32.mrf.mxu0
    %509 = vdwg.mxu0
    %v510 = vld [vmem:[#allocation12] sm:$0xff]
    %v511 = vld [vmem:[#allocation12 + $0x8] sm:$0xff]
    %v512 = vld [vmem:[#allocation12 + $0x10] sm:$0xff]
    %v513 = vld [vmem:[#allocation12 + $0x18] sm:$0xff]
    %514 = vmatprep.subr.mxu0 0.0
    %515 = vmatpush1.msra.mxu0 0.0
    %516 = vmatprep.subr.mxu0 0.0
    %517 = vmatpush1.msra.mxu0 0.0
    %518 = vmatprep.subr.mxu0 0.0
    %519 = vmatpush1.msra.mxu0 0.0
    %520 = vmatprep.subr.mxu0 0.0
    %521 = vmatpush1.msra.mxu0 0.0
    %522 = vmatprep.subr.mxu0 0.0
    %523 = vmatpush1.msra.mxu0 0.0
    %524 = vmatprep.subr.mxu0 0.0
    %525 = vmatpush1.msra.mxu0 0.0
    %526 = vmatprep.subr.mxu0 0.0
    %527 = vmatpush1.msra.mxu0 0.0
    %528 = vmatprep.subr.mxu0 0.0
    %529 = vmatpush1.msra.mxu0 0.0
    %530 = vmatprep.subr.mxu0 0.0
    %531 = vmatpush1.msra.mxu0 0.0
    %532 = vmatprep.subr.mxu0 0.0
    %533 = vmatpush1.msra.mxu0 0.0
    %534 = vmatprep.subr.mxu0 0.0
    %535 = vmatpush1.msra.mxu0 0.0
    %536 = vmatprep.subr.mxu0 0.0
    %537 = vmatpush1.msra.mxu0 0.0
    %538 = vmatprep.subr.mxu0 0.0
    %539 = vmatpush1.msra.mxu0 %v513
    %540 = vmatprep.subr.mxu0 0.0
    %541 = vmatpush1.msra.mxu0 %v512
    %542 = vmatprep.subr.mxu0 0.0
    %543 = vmatpush1.msra.mxu0 %v511
    %544 = vmatprep.subr.mxu0 0.0
    %545 = vmatpush1.msra.mxu0 %v510
    %546 = vmatprep.subr.mxu0 0.0
    %547 = vmatpush2.msra.mxu0 0.0
    %548 = vmatprep.subr.mxu0 0.0
    %549 = vmatpush2.msra.mxu0 0.0
    %550 = vmatprep.subr.mxu0 0.0
    %551 = vmatpush2.msra.mxu0 0.0
    %552 = vmatprep.subr.mxu0 0.0
    %553 = vmatpush2.msra.mxu0 0.0
    %554 = vmatprep.subr.mxu0 0.0
    %555 = vmatpush2.msra.mxu0 0.0
    %556 = vmatprep.subr.mxu0 0.0
    %557 = vmatpush2.msra.mxu0 0.0
    %558 = vmatprep.subr.mxu0 0.0
    %559 = vmatpush2.msra.mxu0 0.0
    %560 = vmatprep.subr.mxu0 0.0
    %561 = vmatpush2.msra.mxu0 0.0
    %562 = vmatprep.subr.mxu0 0.0
    %563 = vmatpush2.msra.mxu0 0.0
    %564 = vmatprep.subr.mxu0 0.0
    %565 = vmatpush2.msra.mxu0 0.0
    %566 = vmatprep.subr.mxu0 0.0
    %567 = vmatpush2.msra.mxu0 0.0
    %568 = vmatprep.subr.mxu0 0.0
    %569 = vmatpush2.msra.mxu0 0.0
    %570 = vmatprep.subr.mxu0 0.0
    %571 = vmatpush2.msra.mxu0 0.0
    %572 = vmatprep.subr.mxu0 0.0
    %573 = vmatpush2.msra.mxu0 0.0
    %574 = vmatprep.subr.mxu0 0.0
    %575 = vmatpush2.msra.mxu0 0.0
    %576 = vmatprep.subr.mxu0 0.0
    %577 = vmatpush2.msra.mxu0 0.0
    %578 = vmatprep.mubr.f32.mxu0 0.0
    %579 = vmatmul.mubr.f32.gmra.mxu0 %v438
    %v580 = vpop.f32.mrf.mxu0
    %v581 = vadd.f32 0.0, %v580
    %v582 = vpop.f32.mrf.mxu0
    %583 = vdwg.mxu0
    %v584 = vld [vmem:[#allocation14] sm:$0xff]
    %v585 = vld [vmem:[#allocation14 + $0x8] sm:$0xff]
    %v586 = vld [vmem:[#allocation14 + $0x10] sm:$0xff]
    %v587 = vld [vmem:[#allocation14 + $0x18] sm:$0xff]
    %588 = vmatprep.subr.mxu0 0.0
    %589 = vmatpush1.msra.mxu0 0.0
    %590 = vmatprep.subr.mxu0 0.0
    %591 = vmatpush1.msra.mxu0 0.0
    %592 = vmatprep.subr.mxu0 0.0
    %593 = vmatpush1.msra.mxu0 0.0
    %594 = vmatprep.subr.mxu0 0.0
    %595 = vmatpush1.msra.mxu0 0.0
    %596 = vmatprep.subr.mxu0 0.0
    %597 = vmatpush1.msra.mxu0 0.0
    %598 = vmatprep.subr.mxu0 0.0
    %599 = vmatpush1.msra.mxu0 0.0
    %600 = vmatprep.subr.mxu0 0.0
    %601 = vmatpush1.msra.mxu0 0.0
    %602 = vmatprep.subr.mxu0 0.0
    %603 = vmatpush1.msra.mxu0 0.0
    %604 = vmatprep.subr.mxu0 0.0
    %605 = vmatpush1.msra.mxu0 0.0
    %606 = vmatprep.subr.mxu0 0.0
    %607 = vmatpush1.msra.mxu0 0.0
    %608 = vmatprep.subr.mxu0 0.0
    %609 = vmatpush1.msra.mxu0 0.0
    %610 = vmatprep.subr.mxu0 0.0
    %611 = vmatpush1.msra.mxu0 0.0
    %612 = vmatprep.subr.mxu0 0.0
    %613 = vmatpush1.msra.mxu0 %v587
    %614 = vmatprep.subr.mxu0 0.0
    %615 = vmatpush1.msra.mxu0 %v586
    %616 = vmatprep.subr.mxu0 0.0
    %617 = vmatpush1.msra.mxu0 %v585
    %618 = vmatprep.subr.mxu0 0.0
    %619 = vmatpush1.msra.mxu0 %v584
    %620 = vmatprep.subr.mxu0 0.0
    %621 = vmatpush2.msra.mxu0 0.0
    %622 = vmatprep.subr.mxu0 0.0
    %623 = vmatpush2.msra.mxu0 0.0
    %624 = vmatprep.subr.mxu0 0.0
    %625 = vmatpush2.msra.mxu0 0.0
    %626 = vmatprep.subr.mxu0 0.0
    %627 = vmatpush2.msra.mxu0 0.0
    %628 = vmatprep.subr.mxu0 0.0
    %629 = vmatpush2.msra.mxu0 0.0
    %630 = vmatprep.subr.mxu0 0.0
    %631 = vmatpush2.msra.mxu0 0.0
    %632 = vmatprep.subr.mxu0 0.0
    %633 = vmatpush2.msra.mxu0 0.0
    %634 = vmatprep.subr.mxu0 0.0
    %635 = vmatpush2.msra.mxu0 0.0
    %636 = vmatprep.subr.mxu0 0.0
    %637 = vmatpush2.msra.mxu0 0.0
    %638 = vmatprep.subr.mxu0 0.0
    %639 = vmatpush2.msra.mxu0 0.0
    %640 = vmatprep.subr.mxu0 0.0
    %641 = vmatpush2.msra.mxu0 0.0
    %642 = vmatprep.subr.mxu0 0.0
    %643 = vmatpush2.msra.mxu0 0.0
    %644 = vmatprep.subr.mxu0 0.0
    %645 = vmatpush2.msra.mxu0 0.0
    %646 = vmatprep.subr.mxu0 0.0
    %647 = vmatpush2.msra.mxu0 0.0
    %648 = vmatprep.subr.mxu0 0.0
    %649 = vmatpush2.msra.mxu0 0.0
    %650 = vmatprep.subr.mxu0 0.0
    %651 = vmatpush2.msra.mxu0 0.0
    %652 = vmatprep.mubr.f32.mxu0 0.0
    %653 = vmatmul.mubr.f32.gmra.mxu0 %v438
    %v654 = vpop.f32.mrf.mxu0
    %v655 = vadd.f32 %v428, %v654
    %v656 = vpop.f32.mrf.mxu0
    %657 = vdwg.mxu0
    %v658 = vadd.f32 %v430, %v507
    %v659 = vxor.u32 %v658, 2147483648
    %v660 = vmul.f32 %v659, 1.442695
    %v661 = vpow.pop %v660
    %v662 = vadd.f32 %v661, 1.0
    %v663 = vrcp.pop %v662
    %v664 = vmul.f32 1.0, %v663
    %v665 = vadd.f32 %v431, %v581
    %v666 = vxor.u32 %v665, 2147483648
    %v667 = vmul.f32 %v666, 1.442695
    %v668 = vpow.pop %v667
    %v669 = vadd.f32 %v668, 1.0
    %v670 = vrcp.pop %v669
    %v671 = vmul.f32 1.0, %v670
    %v672 = vmul.f32 %v664, %v655
    %v673 = vadd.f32 %v432, %v672
    %v674 = vtanh.pop %v673
    %v675 = vsub.f32 1.0, %v671
    %v676 = vmul.f32 %v675, %v674
    %v677 = vmul.f32 %v671, 0.0
    %v678 = vadd.f32 %v676, %v677
    %vm679 = vcmask 254976
    %680 = vst.msk [vmem:[#allocation2] sm:$0x3] %vm679, %v678
    %v681 = vld [vmem:[#allocation3 + $0x2] sm:$0x3]
    %v682 = vld [vmem:[#allocation4 + $0x2] sm:$0x3]
    %v683 = vld [vmem:[#allocation5 + $0x2] sm:$0x3]
    %v684 = vld [vmem:[%s4] sm:$0xff]
    %v685 = vld [vmem:[%s4 + $0x8] sm:$0xff]
    %v686 = vld [vmem:[%s4 + $0x10] sm:$0xff]
    %v687 = vld [vmem:[%s4 + $0x18] sm:$0xff]
    %v689 = vsel %vm235, %v678, 0
    %691 = vmatprep.subr.mxu0 0.0
    %692 = vmatpush1.msra.mxu0 0.0
    %693 = vmatprep.subr.mxu0 0.0
    %694 = vmatpush1.msra.mxu0 0.0
    %695 = vmatprep.subr.mxu0 0.0
    %696 = vmatpush1.msra.mxu0 0.0
    %697 = vmatprep.subr.mxu0 0.0
    %698 = vmatpush1.msra.mxu0 0.0
    %699 = vmatprep.subr.mxu0 0.0
    %700 = vmatpush1.msra.mxu0 0.0
    %701 = vmatprep.subr.mxu0 0.0
    %702 = vmatpush1.msra.mxu0 0.0
    %703 = vmatprep.subr.mxu0 0.0
    %704 = vmatpush1.msra.mxu0 0.0
    %705 = vmatprep.subr.mxu0 0.0
    %706 = vmatpush1.msra.mxu0 0.0
    %707 = vmatprep.subr.mxu0 0.0
    %708 = vmatpush1.msra.mxu0 0.0
    %709 = vmatprep.subr.mxu0 0.0
    %710 = vmatpush1.msra.mxu0 0.0
    %711 = vmatprep.subr.mxu0 0.0
    %712 = vmatpush1.msra.mxu0 0.0
    %713 = vmatprep.subr.mxu0 0.0
    %714 = vmatpush1.msra.mxu0 0.0
    %715 = vmatprep.subr.mxu0 0.0
    %716 = vmatpush1.msra.mxu0 %v687
    %717 = vmatprep.subr.mxu0 0.0
    %718 = vmatpush1.msra.mxu0 %v686
    %719 = vmatprep.subr.mxu0 0.0
    %720 = vmatpush1.msra.mxu0 %v685
    %721 = vmatprep.subr.mxu0 0.0
    %722 = vmatpush1.msra.mxu0 %v684
    %723 = vmatprep.subr.mxu0 0.0
    %724 = vmatpush2.msra.mxu0 0.0
    %725 = vmatprep.subr.mxu0 0.0
    %726 = vmatpush2.msra.mxu0 0.0
    %727 = vmatprep.subr.mxu0 0.0
    %728 = vmatpush2.msra.mxu0 0.0
    %729 = vmatprep.subr.mxu0 0.0
    %730 = vmatpush2.msra.mxu0 0.0
    %731 = vmatprep.subr.mxu0 0.0
    %732 = vmatpush2.msra.mxu0 0.0
    %733 = vmatprep.subr.mxu0 0.0
    %734 = vmatpush2.msra.mxu0 0.0
    %735 = vmatprep.subr.mxu0 0.0
    %736 = vmatpush2.msra.mxu0 0.0
    %737 = vmatprep.subr.mxu0 0.0
    %738 = vmatpush2.msra.mxu0 0.0
    %739 = vmatprep.subr.mxu0 0.0
    %740 = vmatpush2.msra.mxu0 0.0
    %741 = vmatprep.subr.mxu0 0.0
    %742 = vmatpush2.msra.mxu0 0.0
    %743 = vmatprep.subr.mxu0 0.0
    %744 = vmatpush2.msra.mxu0 0.0
    %745 = vmatprep.subr.mxu0 0.0
    %746 = vmatpush2.msra.mxu0 0.0
    %747 = vmatprep.subr.mxu0 0.0
    %748 = vmatpush2.msra.mxu0 0.0
    %749 = vmatprep.subr.mxu0 0.0
    %750 = vmatpush2.msra.mxu0 0.0
    %751 = vmatprep.subr.mxu0 0.0
    %752 = vmatpush2.msra.mxu0 0.0
    %753 = vmatprep.subr.mxu0 0.0
    %754 = vmatpush2.msra.mxu0 0.0
    %755 = vmatprep.mubr.f32.mxu0 0.0
    %756 = vmatmul.mubr.f32.gmra.mxu0 %v689
    %v757 = vpop.f32.mrf.mxu0
    %v758 = vadd.f32 0.0, %v757
    %v759 = vpop.f32.mrf.mxu0
    %760 = vdwg.mxu0
    %v761 = vld [vmem:[#allocation12] sm:$0xff]
    %v762 = vld [vmem:[#allocation12 + $0x8] sm:$0xff]
    %v763 = vld [vmem:[#allocation12 + $0x10] sm:$0xff]
    %v764 = vld [vmem:[#allocation12 + $0x18] sm:$0xff]
    %765 = vmatprep.subr.mxu0 0.0
    %766 = vmatpush1.msra.mxu0 0.0
    %767 = vmatprep.subr.mxu0 0.0
    %768 = vmatpush1.msra.mxu0 0.0
    %769 = vmatprep.subr.mxu0 0.0
    %770 = vmatpush1.msra.mxu0 0.0
    %771 = vmatprep.subr.mxu0 0.0
    %772 = vmatpush1.msra.mxu0 0.0
    %773 = vmatprep.subr.mxu0 0.0
    %774 = vmatpush1.msra.mxu0 0.0
    %775 = vmatprep.subr.mxu0 0.0
    %776 = vmatpush1.msra.mxu0 0.0
    %777 = vmatprep.subr.mxu0 0.0
    %778 = vmatpush1.msra.mxu0 0.0
    %779 = vmatprep.subr.mxu0 0.0
    %780 = vmatpush1.msra.mxu0 0.0
    %781 = vmatprep.subr.mxu0 0.0
    %782 = vmatpush1.msra.mxu0 0.0
    %783 = vmatprep.subr.mxu0 0.0
    %784 = vmatpush1.msra.mxu0 0.0
    %785 = vmatprep.subr.mxu0 0.0
    %786 = vmatpush1.msra.mxu0 0.0
    %787 = vmatprep.subr.mxu0 0.0
    %788 = vmatpush1.msra.mxu0 0.0
    %789 = vmatprep.subr.mxu0 0.0
    %790 = vmatpush1.msra.mxu0 %v764
    %791 = vmatprep.subr.mxu0 0.0
    %792 = vmatpush1.msra.mxu0 %v763
    %793 = vmatprep.subr.mxu0 0.0
    %794 = vmatpush1.msra.mxu0 %v762
    %795 = vmatprep.subr.mxu0 0.0
    %796 = vmatpush1.msra.mxu0 %v761
    %797 = vmatprep.subr.mxu0 0.0
    %798 = vmatpush2.msra.mxu0 0.0
    %799 = vmatprep.subr.mxu0 0.0
    %800 = vmatpush2.msra.mxu0 0.0
    %801 = vmatprep.subr.mxu0 0.0
    %802 = vmatpush2.msra.mxu0 0.0
    %803 = vmatprep.subr.mxu0 0.0
    %804 = vmatpush2.msra.mxu0 0.0
    %805 = vmatprep.subr.mxu0 0.0
    %806 = vmatpush2.msra.mxu0 0.0
    %807 = vmatprep.subr.mxu0 0.0
    %808 = vmatpush2.msra.mxu0 0.0
    %809 = vmatprep.subr.mxu0 0.0
    %810 = vmatpush2.msra.mxu0 0.0
    %811 = vmatprep.subr.mxu0 0.0
    %812 = vmatpush2.msra.mxu0 0.0
    %813 = vmatprep.subr.mxu0 0.0
    %814 = vmatpush2.msra.mxu0 0.0
    %815 = vmatprep.subr.mxu0 0.0
    %816 = vmatpush2.msra.mxu0 0.0
    %817 = vmatprep.subr.mxu0 0.0
    %818 = vmatpush2.msra.mxu0 0.0
    %819 = vmatprep.subr.mxu0 0.0
    %820 = vmatpush2.msra.mxu0 0.0
    %821 = vmatprep.subr.mxu0 0.0
    %822 = vmatpush2.msra.mxu0 0.0
    %823 = vmatprep.subr.mxu0 0.0
    %824 = vmatpush2.msra.mxu0 0.0
    %825 = vmatprep.subr.mxu0 0.0
    %826 = vmatpush2.msra.mxu0 0.0
    %827 = vmatprep.subr.mxu0 0.0
    %828 = vmatpush2.msra.mxu0 0.0
    %829 = vmatprep.mubr.f32.mxu0 0.0
    %830 = vmatmul.mubr.f32.gmra.mxu0 %v689
    %v831 = vpop.f32.mrf.mxu0
    %v832 = vadd.f32 0.0, %v831
    %v833 = vpop.f32.mrf.mxu0
    %834 = vdwg.mxu0
    %v835 = vld [vmem:[#allocation14] sm:$0xff]
    %v836 = vld [vmem:[#allocation14 + $0x8] sm:$0xff]
    %v837 = vld [vmem:[#allocation14 + $0x10] sm:$0xff]
    %v838 = vld [vmem:[#allocation14 + $0x18] sm:$0xff]
    %839 = vmatprep.subr.mxu0 0.0
    %840 = vmatpush1.msra.mxu0 0.0
    %841 = vmatprep.subr.mxu0 0.0
    %842 = vmatpush1.msra.mxu0 0.0
    %843 = vmatprep.subr.mxu0 0.0
    %844 = vmatpush1.msra.mxu0 0.0
    %845 = vmatprep.subr.mxu0 0.0
    %846 = vmatpush1.msra.mxu0 0.0
    %847 = vmatprep.subr.mxu0 0.0
    %848 = vmatpush1.msra.mxu0 0.0
    %849 = vmatprep.subr.mxu0 0.0
    %850 = vmatpush1.msra.mxu0 0.0
    %851 = vmatprep.subr.mxu0 0.0
    %852 = vmatpush1.msra.mxu0 0.0
    %853 = vmatprep.subr.mxu0 0.0
    %854 = vmatpush1.msra.mxu0 0.0
    %855 = vmatprep.subr.mxu0 0.0
    %856 = vmatpush1.msra.mxu0 0.0
    %857 = vmatprep.subr.mxu0 0.0
    %858 = vmatpush1.msra.mxu0 0.0
    %859 = vmatprep.subr.mxu0 0.0
    %860 = vmatpush1.msra.mxu0 0.0
    %861 = vmatprep.subr.mxu0 0.0
    %862 = vmatpush1.msra.mxu0 0.0
    %863 = vmatprep.subr.mxu0 0.0
    %864 = vmatpush1.msra.mxu0 %v838
    %865 = vmatprep.subr.mxu0 0.0
    %866 = vmatpush1.msra.mxu0 %v837
    %867 = vmatprep.subr.mxu0 0.0
    %868 = vmatpush1.msra.mxu0 %v836
    %869 = vmatprep.subr.mxu0 0.0
    %870 = vmatpush1.msra.mxu0 %v835
    %871 = vmatprep.subr.mxu0 0.0
    %872 = vmatpush2.msra.mxu0 0.0
    %873 = vmatprep.subr.mxu0 0.0
    %874 = vmatpush2.msra.mxu0 0.0
    %875 = vmatprep.subr.mxu0 0.0
    %876 = vmatpush2.msra.mxu0 0.0
    %877 = vmatprep.subr.mxu0 0.0
    %878 = vmatpush2.msra.mxu0 0.0
    %879 = vmatprep.subr.mxu0 0.0
    %880 = vmatpush2.msra.mxu0 0.0
    %881 = vmatprep.subr.mxu0 0.0
    %882 = vmatpush2.msra.mxu0 0.0
    %883 = vmatprep.subr.mxu0 0.0
    %884 = vmatpush2.msra.mxu0 0.0
    %885 = vmatprep.subr.mxu0 0.0
    %886 = vmatpush2.msra.mxu0 0.0
    %887 = vmatprep.subr.mxu0 0.0
    %888 = vmatpush2.msra.mxu0 0.0
    %889 = vmatprep.subr.mxu0 0.0
    %890 = vmatpush2.msra.mxu0 0.0
    %891 = vmatprep.subr.mxu0 0.0
    %892 = vmatpush2.msra.mxu0 0.0
    %893 = vmatprep.subr.mxu0 0.0
    %894 = vmatpush2.msra.mxu0 0.0
    %895 = vmatprep.subr.mxu0 0.0
    %896 = vmatpush2.msra.mxu0 0.0
    %897 = vmatprep.subr.mxu0 0.0
    %898 = vmatpush2.msra.mxu0 0.0
    %899 = vmatprep.subr.mxu0 0.0
    %900 = vmatpush2.msra.mxu0 0.0
    %901 = vmatprep.subr.mxu0 0.0
    %902 = vmatpush2.msra.mxu0 0.0
    %903 = vmatprep.mubr.f32.mxu0 0.0
    %904 = vmatmul.mubr.f32.gmra.mxu0 %v689
    %v905 = vpop.f32.mrf.mxu0
    %v906 = vadd.f32 %v428, %v905
    %v907 = vpop.f32.mrf.mxu0
    %908 = vdwg.mxu0
    %v909 = vadd.f32 %v681, %v758
    %v910 = vxor.u32 %v909, 2147483648
    %v911 = vmul.f32 %v910, 1.442695
    %v912 = vpow.pop %v911
    %v913 = vadd.f32 %v912, 1.0
    %v914 = vrcp.pop %v913
    %v915 = vmul.f32 1.0, %v914
    %v916 = vadd.f32 %v682, %v832
    %v917 = vxor.u32 %v916, 2147483648
    %v918 = vmul.f32 %v917, 1.442695
    %v919 = vpow.pop %v918
    %v920 = vadd.f32 %v919, 1.0
    %v921 = vrcp.pop %v920
    %v922 = vmul.f32 1.0, %v921
    %v923 = vmul.f32 %v915, %v906
    %v924 = vadd.f32 %v683, %v923
    %v925 = vtanh.pop %v924
    %v926 = vsub.f32 1.0, %v922
    %v927 = vmul.f32 %v926, %v925
    %v928 = vmul.f32 %v922, %v678
    %v929 = vadd.f32 %v927, %v928
    %930 = vst.msk [vmem:[#allocation2 + $0x2] sm:$0x3] %vm679, %v929
    %v931 = vld [vmem:[#allocation3 + $0x4] sm:$0x3]
    %v932 = vld [vmem:[#allocation4 + $0x4] sm:$0x3]
    %v933 = vld [vmem:[#allocation5 + $0x4] sm:$0x3]
    %v934 = vld [vmem:[%s4] sm:$0xff]
    %v935 = vld [vmem:[%s4 + $0x8] sm:$0xff]
    %v936 = vld [vmem:[%s4 + $0x10] sm:$0xff]
    %v937 = vld [vmem:[%s4 + $0x18] sm:$0xff]
    %v939 = vsel %vm235, %v929, 0
    %941 = vmatprep.subr.mxu0 0.0
    %942 = vmatpush1.msra.mxu0 0.0
    %943 = vmatprep.subr.mxu0 0.0
    %944 = vmatpush1.msra.mxu0 0.0
    %945 = vmatprep.subr.mxu0 0.0
    %946 = vmatpush1.msra.mxu0 0.0
    %947 = vmatprep.subr.mxu0 0.0
    %948 = vmatpush1.msra.mxu0 0.0
    %949 = vmatprep.subr.mxu0 0.0
    %950 = vmatpush1.msra.mxu0 0.0
    %951 = vmatprep.subr.mxu0 0.0
    %952 = vmatpush1.msra.mxu0 0.0
    %953 = vmatprep.subr.mxu0 0.0
    %954 = vmatpush1.msra.mxu0 0.0
    %955 = vmatprep.subr.mxu0 0.0
    %956 = vmatpush1.msra.mxu0 0.0
    %957 = vmatprep.subr.mxu0 0.0
    %958 = vmatpush1.msra.mxu0 0.0
    %959 = vmatprep.subr.mxu0 0.0
    %960 = vmatpush1.msra.mxu0 0.0
    %961 = vmatprep.subr.mxu0 0.0
    %962 = vmatpush1.msra.mxu0 0.0
    %963 = vmatprep.subr.mxu0 0.0
    %964 = vmatpush1.msra.mxu0 0.0
    %965 = vmatprep.subr.mxu0 0.0
    %966 = vmatpush1.msra.mxu0 %v937
    %967 = vmatprep.subr.mxu0 0.0
    %968 = vmatpush1.msra.mxu0 %v936
    %969 = vmatprep.subr.mxu0 0.0
    %970 = vmatpush1.msra.mxu0 %v935
    %971 = vmatprep.subr.mxu0 0.0
    %972 = vmatpush1.msra.mxu0 %v934
    %973 = vmatprep.subr.mxu0 0.0
    %974 = vmatpush2.msra.mxu0 0.0
    %975 = vmatprep.subr.mxu0 0.0
    %976 = vmatpush2.msra.mxu0 0.0
    %977 = vmatprep.subr.mxu0 0.0
    %978 = vmatpush2.msra.mxu0 0.0
    %979 = vmatprep.subr.mxu0 0.0
    %980 = vmatpush2.msra.mxu0 0.0
    %981 = vmatprep.subr.mxu0 0.0
    %982 = vmatpush2.msra.mxu0 0.0
    %983 = vmatprep.subr.mxu0 0.0
    %984 = vmatpush2.msra.mxu0 0.0
    %985 = vmatprep.subr.mxu0 0.0
    %986 = vmatpush2.msra.mxu0 0.0
    %987 = vmatprep.subr.mxu0 0.0
    %988 = vmatpush2.msra.mxu0 0.0
    %989 = vmatprep.subr.mxu0 0.0
    %990 = vmatpush2.msra.mxu0 0.0
    %991 = vmatprep.subr.mxu0 0.0
    %992 = vmatpush2.msra.mxu0 0.0
    %993 = vmatprep.subr.mxu0 0.0
    %994 = vmatpush2.msra.mxu0 0.0
    %995 = vmatprep.subr.mxu0 0.0
    %996 = vmatpush2.msra.mxu0 0.0
    %997 = vmatprep.subr.mxu0 0.0
    %998 = vmatpush2.msra.mxu0 0.0
    %999 = vmatprep.subr.mxu0 0.0
    %1000 = vmatpush2.msra.mxu0 0.0
    %1001 = vmatprep.subr.mxu0 0.0
    %1002 = vmatpush2.msra.mxu0 0.0
    %1003 = vmatprep.subr.mxu0 0.0
    %1004 = vmatpush2.msra.mxu0 0.0
    %1005 = vmatprep.mubr.f32.mxu0 0.0
    %1006 = vmatmul.mubr.f32.gmra.mxu0 %v939
    %v1007 = vpop.f32.mrf.mxu0
    %v1008 = vadd.f32 0.0, %v1007
    %v1009 = vpop.f32.mrf.mxu0
    %1010 = vdwg.mxu0
    %v1011 = vld [vmem:[#allocation12] sm:$0xff]
    %v1012 = vld [vmem:[#allocation12 + $0x8] sm:$0xff]
    %v1013 = vld [vmem:[#allocation12 + $0x10] sm:$0xff]
    %v1014 = vld [vmem:[#allocation12 + $0x18] sm:$0xff]
    %1015 = vmatprep.subr.mxu0 0.0
    %1016 = vmatpush1.msra.mxu0 0.0
    %1017 = vmatprep.subr.mxu0 0.0
    %1018 = vmatpush1.msra.mxu0 0.0
    %1019 = vmatprep.subr.mxu0 0.0
    %1020 = vmatpush1.msra.mxu0 0.0
    %1021 = vmatprep.subr.mxu0 0.0
    %1022 = vmatpush1.msra.mxu0 0.0
    %1023 = vmatprep.subr.mxu0 0.0
    %1024 = vmatpush1.msra.mxu0 0.0
    %1025 = vmatprep.subr.mxu0 0.0
    %1026 = vmatpush1.msra.mxu0 0.0
    %1027 = vmatprep.subr.mxu0 0.0
    %1028 = vmatpush1.msra.mxu0 0.0
    %1029 = vmatprep.subr.mxu0 0.0
    %1030 = vmatpush1.msra.mxu0 0.0
    %1031 = vmatprep.subr.mxu0 0.0
    %1032 = vmatpush1.msra.mxu0 0.0
    %1033 = vmatprep.subr.mxu0 0.0
    %1034 = vmatpush1.msra.mxu0 0.0
    %1035 = vmatprep.subr.mxu0 0.0
    %1036 = vmatpush1.msra.mxu0 0.0
    %1037 = vmatprep.subr.mxu0 0.0
    %1038 = vmatpush1.msra.mxu0 0.0
    %1039 = vmatprep.subr.mxu0 0.0
    %1040 = vmatpush1.msra.mxu0 %v1014
    %1041 = vmatprep.subr.mxu0 0.0
    %1042 = vmatpush1.msra.mxu0 %v1013
    %1043 = vmatprep.subr.mxu0 0.0
    %1044 = vmatpush1.msra.mxu0 %v1012
    %1045 = vmatprep.subr.mxu0 0.0
    %1046 = vmatpush1.msra.mxu0 %v1011
    %1047 = vmatprep.subr.mxu0 0.0
    %1048 = vmatpush2.msra.mxu0 0.0
    %1049 = vmatprep.subr.mxu0 0.0
    %1050 = vmatpush2.msra.mxu0 0.0
    %1051 = vmatprep.subr.mxu0 0.0
    %1052 = vmatpush2.msra.mxu0 0.0
    %1053 = vmatprep.subr.mxu0 0.0
    %1054 = vmatpush2.msra.mxu0 0.0
    %1055 = vmatprep.subr.mxu0 0.0
    %1056 = vmatpush2.msra.mxu0 0.0
    %1057 = vmatprep.subr.mxu0 0.0
    %1058 = vmatpush2.msra.mxu0 0.0
    %1059 = vmatprep.subr.mxu0 0.0
    %1060 = vmatpush2.msra.mxu0 0.0
    %1061 = vmatprep.subr.mxu0 0.0
    %1062 = vmatpush2.msra.mxu0 0.0
    %1063 = vmatprep.subr.mxu0 0.0
    %1064 = vmatpush2.msra.mxu0 0.0
    %1065 = vmatprep.subr.mxu0 0.0
    %1066 = vmatpush2.msra.mxu0 0.0
    %1067 = vmatprep.subr.mxu0 0.0
    %1068 = vmatpush2.msra.mxu0 0.0
    %1069 = vmatprep.subr.mxu0 0.0
    %1070 = vmatpush2.msra.mxu0 0.0
    %1071 = vmatprep.subr.mxu0 0.0
    %1072 = vmatpush2.msra.mxu0 0.0
    %1073 = vmatprep.subr.mxu0 0.0
    %1074 = vmatpush2.msra.mxu0 0.0
    %1075 = vmatprep.subr.mxu0 0.0
    %1076 = vmatpush2.msra.mxu0 0.0
    %1077 = vmatprep.subr.mxu0 0.0
    %1078 = vmatpush2.msra.mxu0 0.0
    %1079 = vmatprep.mubr.f32.mxu0 0.0
    %1080 = vmatmul.mubr.f32.gmra.mxu0 %v939
    %v1081 = vpop.f32.mrf.mxu0
    %v1082 = vadd.f32 0.0, %v1081
    %v1083 = vpop.f32.mrf.mxu0
    %1084 = vdwg.mxu0
    %v1085 = vld [vmem:[#allocation14] sm:$0xff]
    %v1086 = vld [vmem:[#allocation14 + $0x8] sm:$0xff]
    %v1087 = vld [vmem:[#allocation14 + $0x10] sm:$0xff]
    %v1088 = vld [vmem:[#allocation14 + $0x18] sm:$0xff]
    %1089 = vmatprep.subr.mxu0 0.0
    %1090 = vmatpush1.msra.mxu0 0.0
    %1091 = vmatprep.subr.mxu0 0.0
    %1092 = vmatpush1.msra.mxu0 0.0
    %1093 = vmatprep.subr.mxu0 0.0
    %1094 = vmatpush1.msra.mxu0 0.0
    %1095 = vmatprep.subr.mxu0 0.0
    %1096 = vmatpush1.msra.mxu0 0.0
    %1097 = vmatprep.subr.mxu0 0.0
    %1098 = vmatpush1.msra.mxu0 0.0
    %1099 = vmatprep.subr.mxu0 0.0
    %1100 = vmatpush1.msra.mxu0 0.0
    %1101 = vmatprep.subr.mxu0 0.0
    %1102 = vmatpush1.msra.mxu0 0.0
    %1103 = vmatprep.subr.mxu0 0.0
    %1104 = vmatpush1.msra.mxu0 0.0
    %1105 = vmatprep.subr.mxu0 0.0
    %1106 = vmatpush1.msra.mxu0 0.0
    %1107 = vmatprep.subr.mxu0 0.0
    %1108 = vmatpush1.msra.mxu0 0.0
    %1109 = vmatprep.subr.mxu0 0.0
    %1110 = vmatpush1.msra.mxu0 0.0
    %1111 = vmatprep.subr.mxu0 0.0
    %1112 = vmatpush1.msra.mxu0 0.0
    %1113 = vmatprep.subr.mxu0 0.0
    %1114 = vmatpush1.msra.mxu0 %v1088
    %1115 = vmatprep.subr.mxu0 0.0
    %1116 = vmatpush1.msra.mxu0 %v1087
    %1117 = vmatprep.subr.mxu0 0.0
    %1118 = vmatpush1.msra.mxu0 %v1086
    %1119 = vmatprep.subr.mxu0 0.0
    %1120 = vmatpush1.msra.mxu0 %v1085
    %1121 = vmatprep.subr.mxu0 0.0
    %1122 = vmatpush2.msra.mxu0 0.0
    %1123 = vmatprep.subr.mxu0 0.0
    %1124 = vmatpush2.msra.mxu0 0.0
    %1125 = vmatprep.subr.mxu0 0.0
    %1126 = vmatpush2.msra.mxu0 0.0
    %1127 = vmatprep.subr.mxu0 0.0
    %1128 = vmatpush2.msra.mxu0 0.0
    %1129 = vmatprep.subr.mxu0 0.0
    %1130 = vmatpush2.msra.mxu0 0.0
    %1131 = vmatprep.subr.mxu0 0.0
    %1132 = vmatpush2.msra.mxu0 0.0
    %1133 = vmatprep.subr.mxu0 0.0
    %1134 = vmatpush2.msra.mxu0 0.0
    %1135 = vmatprep.subr.mxu0 0.0
    %1136 = vmatpush2.msra.mxu0 0.0
    %1137 = vmatprep.subr.mxu0 0.0
    %1138 = vmatpush2.msra.mxu0 0.0
    %1139 = vmatprep.subr.mxu0 0.0
    %1140 = vmatpush2.msra.mxu0 0.0
    %1141 = vmatprep.subr.mxu0 0.0
    %1142 = vmatpush2.msra.mxu0 0.0
    %1143 = vmatprep.subr.mxu0 0.0
    %1144 = vmatpush2.msra.mxu0 0.0
    %1145 = vmatprep.subr.mxu0 0.0
    %1146 = vmatpush2.msra.mxu0 0.0
    %1147 = vmatprep.subr.mxu0 0.0
    %1148 = vmatpush2.msra.mxu0 0.0
    %1149 = vmatprep.subr.mxu0 0.0
    %1150 = vmatpush2.msra.mxu0 0.0
    %1151 = vmatprep.subr.mxu0 0.0
    %1152 = vmatpush2.msra.mxu0 0.0
    %1153 = vmatprep.mubr.f32.mxu0 0.0
    %1154 = vmatmul.mubr.f32.gmra.mxu0 %v939
    %v1155 = vpop.f32.mrf.mxu0
    %v1156 = vadd.f32 %v428, %v1155
    %v1157 = vpop.f32.mrf.mxu0
    %1158 = vdwg.mxu0
    %v1159 = vadd.f32 %v931, %v1008
    %v1160 = vxor.u32 %v1159, 2147483648
    %v1161 = vmul.f32 %v1160, 1.442695
    %v1162 = vpow.pop %v1161
    %v1163 = vadd.f32 %v1162, 1.0
    %v1164 = vrcp.pop %v1163
    %v1165 = vmul.f32 1.0, %v1164
    %v1166 = vadd.f32 %v932, %v1082
    %v1167 = vxor.u32 %v1166, 2147483648
    %v1168 = vmul.f32 %v1167, 1.442695
    %v1169 = vpow.pop %v1168
    %v1170 = vadd.f32 %v1169, 1.0
    %v1171 = vrcp.pop %v1170
    %v1172 = vmul.f32 1.0, %v1171
    %v1173 = vmul.f32 %v1165, %v1156
    %v1174 = vadd.f32 %v933, %v1173
    %v1175 = vtanh.pop %v1174
    %v1176 = vsub.f32 1.0, %v1172
    %v1177 = vmul.f32 %v1176, %v1175
    %v1178 = vmul.f32 %v1172, %v929
    %v1179 = vadd.f32 %v1177, %v1178
    %1180 = vst.msk [vmem:[#allocation2 + $0x4] sm:$0x3] %vm679, %v1179
    %v1181 = vld [vmem:[#allocation3 + $0x6] sm:$0x3]
    %v1182 = vld [vmem:[#allocation4 + $0x6] sm:$0x3]
    %v1183 = vld [vmem:[#allocation5 + $0x6] sm:$0x3]
    %v1184 = vld [vmem:[%s4] sm:$0xff]
    %v1185 = vld [vmem:[%s4 + $0x8] sm:$0xff]
    %v1186 = vld [vmem:[%s4 + $0x10] sm:$0xff]
    %v1187 = vld [vmem:[%s4 + $0x18] sm:$0xff]
    %v1189 = vsel %vm235, %v1179, 0
    %1191 = vmatprep.subr.mxu0 0.0
    %1192 = vmatpush1.msra.mxu0 0.0
    %1193 = vmatprep.subr.mxu0 0.0
    %1194 = vmatpush1.msra.mxu0 0.0
    %1195 = vmatprep.subr.mxu0 0.0
    %1196 = vmatpush1.msra.mxu0 0.0
    %1197 = vmatprep.subr.mxu0 0.0
    %1198 = vmatpush1.msra.mxu0 0.0
    %1199 = vmatprep.subr.mxu0 0.0
    %1200 = vmatpush1.msra.mxu0 0.0
    %1201 = vmatprep.subr.mxu0 0.0
    %1202 = vmatpush1.msra.mxu0 0.0
    %1203 = vmatprep.subr.mxu0 0.0
    %1204 = vmatpush1.msra.mxu0 0.0
    %1205 = vmatprep.subr.mxu0 0.0
    %1206 = vmatpush1.msra.mxu0 0.0
    %1207 = vmatprep.subr.mxu0 0.0
    %1208 = vmatpush1.msra.mxu0 0.0
    %1209 = vmatprep.subr.mxu0 0.0
    %1210 = vmatpush1.msra.mxu0 0.0
    %1211 = vmatprep.subr.mxu0 0.0
    %1212 = vmatpush1.msra.mxu0 0.0
    %1213 = vmatprep.subr.mxu0 0.0
    %1214 = vmatpush1.msra.mxu0 0.0
    %1215 = vmatprep.subr.mxu0 0.0
    %1216 = vmatpush1.msra.mxu0 %v1187
    %1217 = vmatprep.subr.mxu0 0.0
    %1218 = vmatpush1.msra.mxu0 %v1186
    %1219 = vmatprep.subr.mxu0 0.0
    %1220 = vmatpush1.msra.mxu0 %v1185
    %1221 = vmatprep.subr.mxu0 0.0
    %1222 = vmatpush1.msra.mxu0 %v1184
    %1223 = vmatprep.subr.mxu0 0.0
    %1224 = vmatpush2.msra.mxu0 0.0
    %1225 = vmatprep.subr.mxu0 0.0
    %1226 = vmatpush2.msra.mxu0 0.0
    %1227 = vmatprep.subr.mxu0 0.0
    %1228 = vmatpush2.msra.mxu0 0.0
    %1229 = vmatprep.subr.mxu0 0.0
    %1230 = vmatpush2.msra.mxu0 0.0
    %1231 = vmatprep.subr.mxu0 0.0
    %1232 = vmatpush2.msra.mxu0 0.0
    %1233 = vmatprep.subr.mxu0 0.0
    %1234 = vmatpush2.msra.mxu0 0.0
    %1235 = vmatprep.subr.mxu0 0.0
    %1236 = vmatpush2.msra.mxu0 0.0
    %1237 = vmatprep.subr.mxu0 0.0
    %1238 = vmatpush2.msra.mxu0 0.0
    %1239 = vmatprep.subr.mxu0 0.0
    %1240 = vmatpush2.msra.mxu0 0.0
    %1241 = vmatprep.subr.mxu0 0.0
    %1242 = vmatpush2.msra.mxu0 0.0
    %1243 = vmatprep.subr.mxu0 0.0
    %1244 = vmatpush2.msra.mxu0 0.0
    %1245 = vmatprep.subr.mxu0 0.0
    %1246 = vmatpush2.msra.mxu0 0.0
    %1247 = vmatprep.subr.mxu0 0.0
    %1248 = vmatpush2.msra.mxu0 0.0
    %1249 = vmatprep.subr.mxu0 0.0
    %1250 = vmatpush2.msra.mxu0 0.0
    %1251 = vmatprep.subr.mxu0 0.0
    %1252 = vmatpush2.msra.mxu0 0.0
    %1253 = vmatprep.subr.mxu0 0.0
    %1254 = vmatpush2.msra.mxu0 0.0
    %1255 = vmatprep.mubr.f32.mxu0 0.0
    %1256 = vmatmul.mubr.f32.gmra.mxu0 %v1189
    %v1257 = vpop.f32.mrf.mxu0
    %v1258 = vadd.f32 0.0, %v1257
    %v1259 = vpop.f32.mrf.mxu0
    %1260 = vdwg.mxu0
    %v1261 = vld [vmem:[#allocation12] sm:$0xff]
    %v1262 = vld [vmem:[#allocation12 + $0x8] sm:$0xff]
    %v1263 = vld [vmem:[#allocation12 + $0x10] sm:$0xff]
    %v1264 = vld [vmem:[#allocation12 + $0x18] sm:$0xff]
    %1265 = vmatprep.subr.mxu0 0.0
    %1266 = vmatpush1.msra.mxu0 0.0
    %1267 = vmatprep.subr.mxu0 0.0
    %1268 = vmatpush1.msra.mxu0 0.0
    %1269 = vmatprep.subr.mxu0 0.0
    %1270 = vmatpush1.msra.mxu0 0.0
    %1271 = vmatprep.subr.mxu0 0.0
    %1272 = vmatpush1.msra.mxu0 0.0
    %1273 = vmatprep.subr.mxu0 0.0
    %1274 = vmatpush1.msra.mxu0 0.0
    %1275 = vmatprep.subr.mxu0 0.0
    %1276 = vmatpush1.msra.mxu0 0.0
    %1277 = vmatprep.subr.mxu0 0.0
    %1278 = vmatpush1.msra.mxu0 0.0
    %1279 = vmatprep.subr.mxu0 0.0
    %1280 = vmatpush1.msra.mxu0 0.0
    %1281 = vmatprep.subr.mxu0 0.0
    %1282 = vmatpush1.msra.mxu0 0.0
    %1283 = vmatprep.subr.mxu0 0.0
    %1284 = vmatpush1.msra.mxu0 0.0
    %1285 = vmatprep.subr.mxu0 0.0
    %1286 = vmatpush1.msra.mxu0 0.0
    %1287 = vmatprep.subr.mxu0 0.0
    %1288 = vmatpush1.msra.mxu0 0.0
    %1289 = vmatprep.subr.mxu0 0.0
    %1290 = vmatpush1.msra.mxu0 %v1264
    %1291 = vmatprep.subr.mxu0 0.0
    %1292 = vmatpush1.msra.mxu0 %v1263
    %1293 = vmatprep.subr.mxu0 0.0
    %1294 = vmatpush1.msra.mxu0 %v1262
    %1295 = vmatprep.subr.mxu0 0.0
    %1296 = vmatpush1.msra.mxu0 %v1261
    %1297 = vmatprep.subr.mxu0 0.0
    %1298 = vmatpush2.msra.mxu0 0.0
    %1299 = vmatprep.subr.mxu0 0.0
    %1300 = vmatpush2.msra.mxu0 0.0
    %1301 = vmatprep.subr.mxu0 0.0
    %1302 = vmatpush2.msra.mxu0 0.0
    %1303 = vmatprep.subr.mxu0 0.0
    %1304 = vmatpush2.msra.mxu0 0.0
    %1305 = vmatprep.subr.mxu0 0.0
    %1306 = vmatpush2.msra.mxu0 0.0
    %1307 = vmatprep.subr.mxu0 0.0
    %1308 = vmatpush2.msra.mxu0 0.0
    %1309 = vmatprep.subr.mxu0 0.0
    %1310 = vmatpush2.msra.mxu0 0.0
    %1311 = vmatprep.subr.mxu0 0.0
    %1312 = vmatpush2.msra.mxu0 0.0
    %1313 = vmatprep.subr.mxu0 0.0
    %1314 = vmatpush2.msra.mxu0 0.0
    %1315 = vmatprep.subr.mxu0 0.0
    %1316 = vmatpush2.msra.mxu0 0.0
    %1317 = vmatprep.subr.mxu0 0.0
    %1318 = vmatpush2.msra.mxu0 0.0
    %1319 = vmatprep.subr.mxu0 0.0
    %1320 = vmatpush2.msra.mxu0 0.0
    %1321 = vmatprep.subr.mxu0 0.0
    %1322 = vmatpush2.msra.mxu0 0.0
    %1323 = vmatprep.subr.mxu0 0.0
    %1324 = vmatpush2.msra.mxu0 0.0
    %1325 = vmatprep.subr.mxu0 0.0
    %1326 = vmatpush2.msra.mxu0 0.0
    %1327 = vmatprep.subr.mxu0 0.0
    %1328 = vmatpush2.msra.mxu0 0.0
    %1329 = vmatprep.mubr.f32.mxu0 0.0
    %1330 = vmatmul.mubr.f32.gmra.mxu0 %v1189
    %v1331 = vpop.f32.mrf.mxu0
    %v1332 = vadd.f32 0.0, %v1331
    %v1333 = vpop.f32.mrf.mxu0
    %1334 = vdwg.mxu0
    %v1335 = vld [vmem:[#allocation14] sm:$0xff]
    %v1336 = vld [vmem:[#allocation14 + $0x8] sm:$0xff]
    %v1337 = vld [vmem:[#allocation14 + $0x10] sm:$0xff]
    %v1338 = vld [vmem:[#allocation14 + $0x18] sm:$0xff]
    %1339 = vmatprep.subr.mxu0 0.0
    %1340 = vmatpush1.msra.mxu0 0.0
    %1341 = vmatprep.subr.mxu0 0.0
    %1342 = vmatpush1.msra.mxu0 0.0
    %1343 = vmatprep.subr.mxu0 0.0
    %1344 = vmatpush1.msra.mxu0 0.0
    %1345 = vmatprep.subr.mxu0 0.0
    %1346 = vmatpush1.msra.mxu0 0.0
    %1347 = vmatprep.subr.mxu0 0.0
    %1348 = vmatpush1.msra.mxu0 0.0
    %1349 = vmatprep.subr.mxu0 0.0
    %1350 = vmatpush1.msra.mxu0 0.0
    %1351 = vmatprep.subr.mxu0 0.0
    %1352 = vmatpush1.msra.mxu0 0.0
    %1353 = vmatprep.subr.mxu0 0.0
    %1354 = vmatpush1.msra.mxu0 0.0
    %1355 = vmatprep.subr.mxu0 0.0
    %1356 = vmatpush1.msra.mxu0 0.0
    %1357 = vmatprep.subr.mxu0 0.0
    %1358 = vmatpush1.msra.mxu0 0.0
    %1359 = vmatprep.subr.mxu0 0.0
    %1360 = vmatpush1.msra.mxu0 0.0
    %1361 = vmatprep.subr.mxu0 0.0
    %1362 = vmatpush1.msra.mxu0 0.0
    %1363 = vmatprep.subr.mxu0 0.0
    %1364 = vmatpush1.msra.mxu0 %v1338
    %1365 = vmatprep.subr.mxu0 0.0
    %1366 = vmatpush1.msra.mxu0 %v1337
    %1367 = vmatprep.subr.mxu0 0.0
    %1368 = vmatpush1.msra.mxu0 %v1336
    %1369 = vmatprep.subr.mxu0 0.0
    %1370 = vmatpush1.msra.mxu0 %v1335
    %1371 = vmatprep.subr.mxu0 0.0
    %1372 = vmatpush2.msra.mxu0 0.0
    %1373 = vmatprep.subr.mxu0 0.0
    %1374 = vmatpush2.msra.mxu0 0.0
    %1375 = vmatprep.subr.mxu0 0.0
    %1376 = vmatpush2.msra.mxu0 0.0
    %1377 = vmatprep.subr.mxu0 0.0
    %1378 = vmatpush2.msra.mxu0 0.0
    %1379 = vmatprep.subr.mxu0 0.0
    %1380 = vmatpush2.msra.mxu0 0.0
    %1381 = vmatprep.subr.mxu0 0.0
    %1382 = vmatpush2.msra.mxu0 0.0
    %1383 = vmatprep.subr.mxu0 0.0
    %1384 = vmatpush2.msra.mxu0 0.0
    %1385 = vmatprep.subr.mxu0 0.0
    %1386 = vmatpush2.msra.mxu0 0.0
    %1387 = vmatprep.subr.mxu0 0.0
    %1388 = vmatpush2.msra.mxu0 0.0
    %1389 = vmatprep.subr.mxu0 0.0
    %1390 = vmatpush2.msra.mxu0 0.0
    %1391 = vmatprep.subr.mxu0 0.0
    %1392 = vmatpush2.msra.mxu0 0.0
    %1393 = vmatprep.subr.mxu0 0.0
    %1394 = vmatpush2.msra.mxu0 0.0
    %1395 = vmatprep.subr.mxu0 0.0
    %1396 = vmatpush2.msra.mxu0 0.0
    %1397 = vmatprep.subr.mxu0 0.0
    %1398 = vmatpush2.msra.mxu0 0.0
    %1399 = vmatprep.subr.mxu0 0.0
    %1400 = vmatpush2.msra.mxu0 0.0
    %1401 = vmatprep.subr.mxu0 0.0
    %1402 = vmatpush2.msra.mxu0 0.0
    %1403 = vmatprep.mubr.f32.mxu0 0.0
    %1404 = vmatmul.mubr.f32.gmra.mxu0 %v1189
    %v1405 = vpop.f32.mrf.mxu0
    %v1406 = vadd.f32 %v428, %v1405
    %v1407 = vpop.f32.mrf.mxu0
    %1408 = vdwg.mxu0
    %v1409 = vadd.f32 %v1181, %v1258
    %v1410 = vxor.u32 %v1409, 2147483648
    %v1411 = vmul.f32 %v1410, 1.442695
    %v1412 = vpow.pop %v1411
    %v1413 = vadd.f32 %v1412, 1.0
    %v1414 = vrcp.pop %v1413
    %v1415 = vmul.f32 1.0, %v1414
    %v1416 = vadd.f32 %v1182, %v1332
    %v1417 = vxor.u32 %v1416, 2147483648
    %v1418 = vmul.f32 %v1417, 1.442695
    %v1419 = vpow.pop %v1418
    %v1420 = vadd.f32 %v1419, 1.0
    %v1421 = vrcp.pop %v1420
    %v1422 = vmul.f32 1.0, %v1421
    %v1423 = vmul.f32 %v1415, %v1406
    %v1424 = vadd.f32 %v1183, %v1423
    %v1425 = vtanh.pop %v1424
    %v1426 = vsub.f32 1.0, %v1422
    %v1427 = vmul.f32 %v1426, %v1425
    %v1428 = vmul.f32 %v1422, %v1179
    %v1429 = vadd.f32 %v1427, %v1428
    %1430 = vst.msk [vmem:[#allocation2 + $0x6] sm:$0x3] %vm679, %v1429
    %v1431 = vld [vmem:[#allocation3 + $0x8] sm:$0x3]
    %v1432 = vld [vmem:[#allocation4 + $0x8] sm:$0x3]
    %v1433 = vld [vmem:[#allocation5 + $0x8] sm:$0x3]
    %v1434 = vld [vmem:[%s4] sm:$0xff]
    %v1435 = vld [vmem:[%s4 + $0x8] sm:$0xff]
    %v1436 = vld [vmem:[%s4 + $0x10] sm:$0xff]
    %v1437 = vld [vmem:[%s4 + $0x18] sm:$0xff]
    %v1439 = vsel %vm235, %v1429, 0
    %1441 = vmatprep.subr.mxu0 0.0
    %1442 = vmatpush1.msra.mxu0 0.0
    %1443 = vmatprep.subr.mxu0 0.0
    %1444 = vmatpush1.msra.mxu0 0.0
    %1445 = vmatprep.subr.mxu0 0.0
    %1446 = vmatpush1.msra.mxu0 0.0
    %1447 = vmatprep.subr.mxu0 0.0
    %1448 = vmatpush1.msra.mxu0 0.0
    %1449 = vmatprep.subr.mxu0 0.0
    %1450 = vmatpush1.msra.mxu0 0.0
    %1451 = vmatprep.subr.mxu0 0.0
    %1452 = vmatpush1.msra.mxu0 0.0
    %1453 = vmatprep.subr.mxu0 0.0
    %1454 = vmatpush1.msra.mxu0 0.0
    %1455 = vmatprep.subr.mxu0 0.0
    %1456 = vmatpush1.msra.mxu0 0.0
    %1457 = vmatprep.subr.mxu0 0.0
    %1458 = vmatpush1.msra.mxu0 0.0
    %1459 = vmatprep.subr.mxu0 0.0
    %1460 = vmatpush1.msra.mxu0 0.0
    %1461 = vmatprep.subr.mxu0 0.0
    %1462 = vmatpush1.msra.mxu0 0.0
    %1463 = vmatprep.subr.mxu0 0.0
    %1464 = vmatpush1.msra.mxu0 0.0
    %1465 = vmatprep.subr.mxu0 0.0
    %1466 = vmatpush1.msra.mxu0 %v1437
    %1467 = vmatprep.subr.mxu0 0.0
    %1468 = vmatpush1.msra.mxu0 %v1436
    %1469 = vmatprep.subr.mxu0 0.0
    %1470 = vmatpush1.msra.mxu0 %v1435
    %1471 = vmatprep.subr.mxu0 0.0
    %1472 = vmatpush1.msra.mxu0 %v1434
    %1473 = vmatprep.subr.mxu0 0.0
    %1474 = vmatpush2.msra.mxu0 0.0
    %1475 = vmatprep.subr.mxu0 0.0
    %1476 = vmatpush2.msra.mxu0 0.0
    %1477 = vmatprep.subr.mxu0 0.0
    %1478 = vmatpush2.msra.mxu0 0.0
    %1479 = vmatprep.subr.mxu0 0.0
    %1480 = vmatpush2.msra.mxu0 0.0
    %1481 = vmatprep.subr.mxu0 0.0
    %1482 = vmatpush2.msra.mxu0 0.0
    %1483 = vmatprep.subr.mxu0 0.0
    %1484 = vmatpush2.msra.mxu0 0.0
    %1485 = vmatprep.subr.mxu0 0.0
    %1486 = vmatpush2.msra.mxu0 0.0
    %1487 = vmatprep.subr.mxu0 0.0
    %1488 = vmatpush2.msra.mxu0 0.0
    %1489 = vmatprep.subr.mxu0 0.0
    %1490 = vmatpush2.msra.mxu0 0.0
    %1491 = vmatprep.subr.mxu0 0.0
    %1492 = vmatpush2.msra.mxu0 0.0
    %1493 = vmatprep.subr.mxu0 0.0
    %1494 = vmatpush2.msra.mxu0 0.0
    %1495 = vmatprep.subr.mxu0 0.0
    %1496 = vmatpush2.msra.mxu0 0.0
    %1497 = vmatprep.subr.mxu0 0.0
    %1498 = vmatpush2.msra.mxu0 0.0
    %1499 = vmatprep.subr.mxu0 0.0
    %1500 = vmatpush2.msra.mxu0 0.0
    %1501 = vmatprep.subr.mxu0 0.0
    %1502 = vmatpush2.msra.mxu0 0.0
    %1503 = vmatprep.subr.mxu0 0.0
    %1504 = vmatpush2.msra.mxu0 0.0
    %1505 = vmatprep.mubr.f32.mxu0 0.0
    %1506 = vmatmul.mubr.f32.gmra.mxu0 %v1439
    %v1507 = vpop.f32.mrf.mxu0
    %v1508 = vadd.f32 0.0, %v1507
    %v1509 = vpop.f32.mrf.mxu0
    %1510 = vdwg.mxu0
    %v1511 = vld [vmem:[#allocation12] sm:$0xff]
    %v1512 = vld [vmem:[#allocation12 + $0x8] sm:$0xff]
    %v1513 = vld [vmem:[#allocation12 + $0x10] sm:$0xff]
    %v1514 = vld [vmem:[#allocation12 + $0x18] sm:$0xff]
    %1515 = vmatprep.subr.mxu0 0.0
    %1516 = vmatpush1.msra.mxu0 0.0
    %1517 = vmatprep.subr.mxu0 0.0
    %1518 = vmatpush1.msra.mxu0 0.0
    %1519 = vmatprep.subr.mxu0 0.0
    %1520 = vmatpush1.msra.mxu0 0.0
    %1521 = vmatprep.subr.mxu0 0.0
    %1522 = vmatpush1.msra.mxu0 0.0
    %1523 = vmatprep.subr.mxu0 0.0
    %1524 = vmatpush1.msra.mxu0 0.0
    %1525 = vmatprep.subr.mxu0 0.0
    %1526 = vmatpush1.msra.mxu0 0.0
    %1527 = vmatprep.subr.mxu0 0.0
    %1528 = vmatpush1.msra.mxu0 0.0
    %1529 = vmatprep.subr.mxu0 0.0
    %1530 = vmatpush1.msra.mxu0 0.0
    %1531 = vmatprep.subr.mxu0 0.0
    %1532 = vmatpush1.msra.mxu0 0.0
    %1533 = vmatprep.subr.mxu0 0.0
    %1534 = vmatpush1.msra.mxu0 0.0
    %1535 = vmatprep.subr.mxu0 0.0
    %1536 = vmatpush1.msra.mxu0 0.0
    %1537 = vmatprep.subr.mxu0 0.0
    %1538 = vmatpush1.msra.mxu0 0.0
    %1539 = vmatprep.subr.mxu0 0.0
    %1540 = vmatpush1.msra.mxu0 %v1514
    %1541 = vmatprep.subr.mxu0 0.0
    %1542 = vmatpush1.msra.mxu0 %v1513
    %1543 = vmatprep.subr.mxu0 0.0
    %1544 = vmatpush1.msra.mxu0 %v1512
    %1545 = vmatprep.subr.mxu0 0.0
    %1546 = vmatpush1.msra.mxu0 %v1511
    %1547 = vmatprep.subr.mxu0 0.0
    %1548 = vmatpush2.msra.mxu0 0.0
    %1549 = vmatprep.subr.mxu0 0.0
    %1550 = vmatpush2.msra.mxu0 0.0
    %1551 = vmatprep.subr.mxu0 0.0
    %1552 = vmatpush2.msra.mxu0 0.0
    %1553 = vmatprep.subr.mxu0 0.0
    %1554 = vmatpush2.msra.mxu0 0.0
    %1555 = vmatprep.subr.mxu0 0.0
    %1556 = vmatpush2.msra.mxu0 0.0
    %1557 = vmatprep.subr.mxu0 0.0
    %1558 = vmatpush2.msra.mxu0 0.0
    %1559 = vmatprep.subr.mxu0 0.0
    %1560 = vmatpush2.msra.mxu0 0.0
    %1561 = vmatprep.subr.mxu0 0.0
    %1562 = vmatpush2.msra.mxu0 0.0
    %1563 = vmatprep.subr.mxu0 0.0
    %1564 = vmatpush2.msra.mxu0 0.0
    %1565 = vmatprep.subr.mxu0 0.0
    %1566 = vmatpush2.msra.mxu0 0.0
    %1567 = vmatprep.subr.mxu0 0.0
    %1568 = vmatpush2.msra.mxu0 0.0
    %1569 = vmatprep.subr.mxu0 0.0
    %1570 = vmatpush2.msra.mxu0 0.0
    %1571 = vmatprep.subr.mxu0 0.0
    %1572 = vmatpush2.msra.mxu0 0.0
    %1573 = vmatprep.subr.mxu0 0.0
    %1574 = vmatpush2.msra.mxu0 0.0
    %1575 = vmatprep.subr.mxu0 0.0
    %1576 = vmatpush2.msra.mxu0 0.0
    %1577 = vmatprep.subr.mxu0 0.0
    %1578 = vmatpush2.msra.mxu0 0.0
    %1579 = vmatprep.mubr.f32.mxu0 0.0
    %1580 = vmatmul.mubr.f32.gmra.mxu0 %v1439
    %v1581 = vpop.f32.mrf.mxu0
    %v1582 = vadd.f32 0.0, %v1581
    %v1583 = vpop.f32.mrf.mxu0
    %1584 = vdwg.mxu0
    %v1585 = vld [vmem:[#allocation14] sm:$0xff]
    %v1586 = vld [vmem:[#allocation14 + $0x8] sm:$0xff]
    %v1587 = vld [vmem:[#allocation14 + $0x10] sm:$0xff]
    %v1588 = vld [vmem:[#allocation14 + $0x18] sm:$0xff]
    %1589 = vmatprep.subr.mxu0 0.0
    %1590 = vmatpush1.msra.mxu0 0.0
    %1591 = vmatprep.subr.mxu0 0.0
    %1592 = vmatpush1.msra.mxu0 0.0
    %1593 = vmatprep.subr.mxu0 0.0
    %1594 = vmatpush1.msra.mxu0 0.0
    %1595 = vmatprep.subr.mxu0 0.0
    %1596 = vmatpush1.msra.mxu0 0.0
    %1597 = vmatprep.subr.mxu0 0.0
    %1598 = vmatpush1.msra.mxu0 0.0
    %1599 = vmatprep.subr.mxu0 0.0
    %1600 = vmatpush1.msra.mxu0 0.0
    %1601 = vmatprep.subr.mxu0 0.0
    %1602 = vmatpush1.msra.mxu0 0.0
    %1603 = vmatprep.subr.mxu0 0.0
    %1604 = vmatpush1.msra.mxu0 0.0
    %1605 = vmatprep.subr.mxu0 0.0
    %1606 = vmatpush1.msra.mxu0 0.0
    %1607 = vmatprep.subr.mxu0 0.0
    %1608 = vmatpush1.msra.mxu0 0.0
    %1609 = vmatprep.subr.mxu0 0.0
    %1610 = vmatpush1.msra.mxu0 0.0
    %1611 = vmatprep.subr.mxu0 0.0
    %1612 = vmatpush1.msra.mxu0 0.0
    %1613 = vmatprep.subr.mxu0 0.0
    %1614 = vmatpush1.msra.mxu0 %v1588
    %1615 = vmatprep.subr.mxu0 0.0
    %1616 = vmatpush1.msra.mxu0 %v1587
    %1617 = vmatprep.subr.mxu0 0.0
    %1618 = vmatpush1.msra.mxu0 %v1586
    %1619 = vmatprep.subr.mxu0 0.0
    %1620 = vmatpush1.msra.mxu0 %v1585
    %1621 = vmatprep.subr.mxu0 0.0
    %1622 = vmatpush2.msra.mxu0 0.0
    %1623 = vmatprep.subr.mxu0 0.0
    %1624 = vmatpush2.msra.mxu0 0.0
    %1625 = vmatprep.subr.mxu0 0.0
    %1626 = vmatpush2.msra.mxu0 0.0
    %1627 = vmatprep.subr.mxu0 0.0
    %1628 = vmatpush2.msra.mxu0 0.0
    %1629 = vmatprep.subr.mxu0 0.0
    %1630 = vmatpush2.msra.mxu0 0.0
    %1631 = vmatprep.subr.mxu0 0.0
    %1632 = vmatpush2.msra.mxu0 0.0
    %1633 = vmatprep.subr.mxu0 0.0
    %1634 = vmatpush2.msra.mxu0 0.0
    %1635 = vmatprep.subr.mxu0 0.0
    %1636 = vmatpush2.msra.mxu0 0.0
    %1637 = vmatprep.subr.mxu0 0.0
    %1638 = vmatpush2.msra.mxu0 0.0
    %1639 = vmatprep.subr.mxu0 0.0
    %1640 = vmatpush2.msra.mxu0 0.0
    %1641 = vmatprep.subr.mxu0 0.0
    %1642 = vmatpush2.msra.mxu0 0.0
    %1643 = vmatprep.subr.mxu0 0.0
    %1644 = vmatpush2.msra.mxu0 0.0
    %1645 = vmatprep.subr.mxu0 0.0
    %1646 = vmatpush2.msra.mxu0 0.0
    %1647 = vmatprep.subr.mxu0 0.0
    %1648 = vmatpush2.msra.mxu0 0.0
    %1649 = vmatprep.subr.mxu0 0.0
    %1650 = vmatpush2.msra.mxu0 0.0
    %1651 = vmatprep.subr.mxu0 0.0
    %1652 = vmatpush2.msra.mxu0 0.0
    %1653 = vmatprep.mubr.f32.mxu0 0.0
    %1654 = vmatmul.mubr.f32.gmra.mxu0 %v1439
    %v1655 = vpop.f32.mrf.mxu0
    %v1656 = vadd.f32 %v428, %v1655
    %v1657 = vpop.f32.mrf.mxu0
    %1658 = vdwg.mxu0
    %v1659 = vadd.f32 %v1431, %v1508
    %v1660 = vxor.u32 %v1659, 2147483648
    %v1661 = vmul.f32 %v1660, 1.442695
    %v1662 = vpow.pop %v1661
    %v1663 = vadd.f32 %v1662, 1.0
    %v1664 = vrcp.pop %v1663
    %v1665 = vmul.f32 1.0, %v1664
    %v1666 = vadd.f32 %v1432, %v1582
    %v1667 = vxor.u32 %v1666, 2147483648
    %v1668 = vmul.f32 %v1667, 1.442695
    %v1669 = vpow.pop %v1668
    %v1670 = vadd.f32 %v1669, 1.0
    %v1671 = vrcp.pop %v1670
    %v1672 = vmul.f32 1.0, %v1671
    %v1673 = vmul.f32 %v1665, %v1656
    %v1674 = vadd.f32 %v1433, %v1673
    %v1675 = vtanh.pop %v1674
    %v1676 = vsub.f32 1.0, %v1672
    %v1677 = vmul.f32 %v1676, %v1675
    %v1678 = vmul.f32 %v1672, %v1429
    %v1679 = vadd.f32 %v1677, %v1678
    %1680 = vst.msk [vmem:[#allocation2 + $0x8] sm:$0x3] %vm679, %v1679
    %v1681 = vld [vmem:[#allocation3 + $0xa] sm:$0x3]
    %v1682 = vld [vmem:[#allocation4 + $0xa] sm:$0x3]
    %v1683 = vld [vmem:[#allocation5 + $0xa] sm:$0x3]
    %v1684 = vld [vmem:[%s4] sm:$0xff]
    %v1685 = vld [vmem:[%s4 + $0x8] sm:$0xff]
    %v1686 = vld [vmem:[%s4 + $0x10] sm:$0xff]
    %v1687 = vld [vmem:[%s4 + $0x18] sm:$0xff]
    %v1689 = vsel %vm235, %v1679, 0
    %1691 = vmatprep.subr.mxu0 0.0
    %1692 = vmatpush1.msra.mxu0 0.0
    %1693 = vmatprep.subr.mxu0 0.0
    %1694 = vmatpush1.msra.mxu0 0.0
    %1695 = vmatprep.subr.mxu0 0.0
    %1696 = vmatpush1.msra.mxu0 0.0
    %1697 = vmatprep.subr.mxu0 0.0
    %1698 = vmatpush1.msra.mxu0 0.0
    %1699 = vmatprep.subr.mxu0 0.0
    %1700 = vmatpush1.msra.mxu0 0.0
    %1701 = vmatprep.subr.mxu0 0.0
    %1702 = vmatpush1.msra.mxu0 0.0
    %1703 = vmatprep.subr.mxu0 0.0
    %1704 = vmatpush1.msra.mxu0 0.0
    %1705 = vmatprep.subr.mxu0 0.0
    %1706 = vmatpush1.msra.mxu0 0.0
    %1707 = vmatprep.subr.mxu0 0.0
    %1708 = vmatpush1.msra.mxu0 0.0
    %1709 = vmatprep.subr.mxu0 0.0
    %1710 = vmatpush1.msra.mxu0 0.0
    %1711 = vmatprep.subr.mxu0 0.0
    %1712 = vmatpush1.msra.mxu0 0.0
    %1713 = vmatprep.subr.mxu0 0.0
    %1714 = vmatpush1.msra.mxu0 0.0
    %1715 = vmatprep.subr.mxu0 0.0
    %1716 = vmatpush1.msra.mxu0 %v1687
    %1717 = vmatprep.subr.mxu0 0.0
    %1718 = vmatpush1.msra.mxu0 %v1686
    %1719 = vmatprep.subr.mxu0 0.0
    %1720 = vmatpush1.msra.mxu0 %v1685
    %1721 = vmatprep.subr.mxu0 0.0
    %1722 = vmatpush1.msra.mxu0 %v1684
    %1723 = vmatprep.subr.mxu0 0.0
    %1724 = vmatpush2.msra.mxu0 0.0
    %1725 = vmatprep.subr.mxu0 0.0
    %1726 = vmatpush2.msra.mxu0 0.0
    %1727 = vmatprep.subr.mxu0 0.0
    %1728 = vmatpush2.msra.mxu0 0.0
    %1729 = vmatprep.subr.mxu0 0.0
    %1730 = vmatpush2.msra.mxu0 0.0
    %1731 = vmatprep.subr.mxu0 0.0
    %1732 = vmatpush2.msra.mxu0 0.0
    %1733 = vmatprep.subr.mxu0 0.0
    %1734 = vmatpush2.msra.mxu0 0.0
    %1735 = vmatprep.subr.mxu0 0.0
    %1736 = vmatpush2.msra.mxu0 0.0
    %1737 = vmatprep.subr.mxu0 0.0
    %1738 = vmatpush2.msra.mxu0 0.0
    %1739 = vmatprep.subr.mxu0 0.0
    %1740 = vmatpush2.msra.mxu0 0.0
    %1741 = vmatprep.subr.mxu0 0.0
    %1742 = vmatpush2.msra.mxu0 0.0
    %1743 = vmatprep.subr.mxu0 0.0
    %1744 = vmatpush2.msra.mxu0 0.0
    %1745 = vmatprep.subr.mxu0 0.0
    %1746 = vmatpush2.msra.mxu0 0.0
    %1747 = vmatprep.subr.mxu0 0.0
    %1748 = vmatpush2.msra.mxu0 0.0
    %1749 = vmatprep.subr.mxu0 0.0
    %1750 = vmatpush2.msra.mxu0 0.0
    %1751 = vmatprep.subr.mxu0 0.0
    %1752 = vmatpush2.msra.mxu0 0.0
    %1753 = vmatprep.subr.mxu0 0.0
    %1754 = vmatpush2.msra.mxu0 0.0
    %1755 = vmatprep.mubr.f32.mxu0 0.0
    %1756 = vmatmul.mubr.f32.gmra.mxu0 %v1689
    %v1757 = vpop.f32.mrf.mxu0
    %v1758 = vadd.f32 0.0, %v1757
    %v1759 = vpop.f32.mrf.mxu0
    %1760 = vdwg.mxu0
    %v1761 = vld [vmem:[#allocation12] sm:$0xff]
    %v1762 = vld [vmem:[#allocation12 + $0x8] sm:$0xff]
    %v1763 = vld [vmem:[#allocation12 + $0x10] sm:$0xff]
    %v1764 = vld [vmem:[#allocation12 + $0x18] sm:$0xff]
    %1765 = vmatprep.subr.mxu0 0.0
    %1766 = vmatpush1.msra.mxu0 0.0
    %1767 = vmatprep.subr.mxu0 0.0
    %1768 = vmatpush1.msra.mxu0 0.0
    %1769 = vmatprep.subr.mxu0 0.0
    %1770 = vmatpush1.msra.mxu0 0.0
    %1771 = vmatprep.subr.mxu0 0.0
    %1772 = vmatpush1.msra.mxu0 0.0
    %1773 = vmatprep.subr.mxu0 0.0
    %1774 = vmatpush1.msra.mxu0 0.0
    %1775 = vmatprep.subr.mxu0 0.0
    %1776 = vmatpush1.msra.mxu0 0.0
    %1777 = vmatprep.subr.mxu0 0.0
    %1778 = vmatpush1.msra.mxu0 0.0
    %1779 = vmatprep.subr.mxu0 0.0
    %1780 = vmatpush1.msra.mxu0 0.0
    %1781 = vmatprep.subr.mxu0 0.0
    %1782 = vmatpush1.msra.mxu0 0.0
    %1783 = vmatprep.subr.mxu0 0.0
    %1784 = vmatpush1.msra.mxu0 0.0
    %1785 = vmatprep.subr.mxu0 0.0
    %1786 = vmatpush1.msra.mxu0 0.0
    %1787 = vmatprep.subr.mxu0 0.0
    %1788 = vmatpush1.msra.mxu0 0.0
    %1789 = vmatprep.subr.mxu0 0.0
    %1790 = vmatpush1.msra.mxu0 %v1764
    %1791 = vmatprep.subr.mxu0 0.0
    %1792 = vmatpush1.msra.mxu0 %v1763
    %1793 = vmatprep.subr.mxu0 0.0
    %1794 = vmatpush1.msra.mxu0 %v1762
    %1795 = vmatprep.subr.mxu0 0.0
    %1796 = vmatpush1.msra.mxu0 %v1761
    %1797 = vmatprep.subr.mxu0 0.0
    %1798 = vmatpush2.msra.mxu0 0.0
    %1799 = vmatprep.subr.mxu0 0.0
    %1800 = vmatpush2.msra.mxu0 0.0
    %1801 = vmatprep.subr.mxu0 0.0
    %1802 = vmatpush2.msra.mxu0 0.0
    %1803 = vmatprep.subr.mxu0 0.0
    %1804 = vmatpush2.msra.mxu0 0.0
    %1805 = vmatprep.subr.mxu0 0.0
    %1806 = vmatpush2.msra.mxu0 0.0
    %1807 = vmatprep.subr.mxu0 0.0
    %1808 = vmatpush2.msra.mxu0 0.0
    %1809 = vmatprep.subr.mxu0 0.0
    %1810 = vmatpush2.msra.mxu0 0.0
    %1811 = vmatprep.subr.mxu0 0.0
    %1812 = vmatpush2.msra.mxu0 0.0
    %1813 = vmatprep.subr.mxu0 0.0
    %1814 = vmatpush2.msra.mxu0 0.0
    %1815 = vmatprep.subr.mxu0 0.0
    %1816 = vmatpush2.msra.mxu0 0.0
    %1817 = vmatprep.subr.mxu0 0.0
    %1818 = vmatpush2.msra.mxu0 0.0
    %1819 = vmatprep.subr.mxu0 0.0
    %1820 = vmatpush2.msra.mxu0 0.0
    %1821 = vmatprep.subr.mxu0 0.0
    %1822 = vmatpush2.msra.mxu0 0.0
    %1823 = vmatprep.subr.mxu0 0.0
    %1824 = vmatpush2.msra.mxu0 0.0
    %1825 = vmatprep.subr.mxu0 0.0
    %1826 = vmatpush2.msra.mxu0 0.0
    %1827 = vmatprep.subr.mxu0 0.0
    %1828 = vmatpush2.msra.mxu0 0.0
    %1829 = vmatprep.mubr.f32.mxu0 0.0
    %1830 = vmatmul.mubr.f32.gmra.mxu0 %v1689
    %v1831 = vpop.f32.mrf.mxu0
    %v1832 = vadd.f32 0.0, %v1831
    %v1833 = vpop.f32.mrf.mxu0
    %1834 = vdwg.mxu0
    %v1835 = vld [vmem:[#allocation14] sm:$0xff]
    %v1836 = vld [vmem:[#allocation14 + $0x8] sm:$0xff]
    %v1837 = vld [vmem:[#allocation14 + $0x10] sm:$0xff]
    %v1838 = vld [vmem:[#allocation14 + $0x18] sm:$0xff]
    %1839 = vmatprep.subr.mxu0 0.0
    %1840 = vmatpush1.msra.mxu0 0.0
    %1841 = vmatprep.subr.mxu0 0.0
    %1842 = vmatpush1.msra.mxu0 0.0
    %1843 = vmatprep.subr.mxu0 0.0
    %1844 = vmatpush1.msra.mxu0 0.0
    %1845 = vmatprep.subr.mxu0 0.0
    %1846 = vmatpush1.msra.mxu0 0.0
    %1847 = vmatprep.subr.mxu0 0.0
    %1848 = vmatpush1.msra.mxu0 0.0
    %1849 = vmatprep.subr.mxu0 0.0
    %1850 = vmatpush1.msra.mxu0 0.0
    %1851 = vmatprep.subr.mxu0 0.0
    %1852 = vmatpush1.msra.mxu0 0.0
    %1853 = vmatprep.subr.mxu0 0.0
    %1854 = vmatpush1.msra.mxu0 0.0
    %1855 = vmatprep.subr.mxu0 0.0
    %1856 = vmatpush1.msra.mxu0 0.0
    %1857 = vmatprep.subr.mxu0 0.0
    %1858 = vmatpush1.msra.mxu0 0.0
    %1859 = vmatprep.subr.mxu0 0.0
    %1860 = vmatpush1.msra.mxu0 0.0
    %1861 = vmatprep.subr.mxu0 0.0
    %1862 = vmatpush1.msra.mxu0 0.0
    %1863 = vmatprep.subr.mxu0 0.0
    %1864 = vmatpush1.msra.mxu0 %v1838
    %1865 = vmatprep.subr.mxu0 0.0
    %1866 = vmatpush1.msra.mxu0 %v1837
    %1867 = vmatprep.subr.mxu0 0.0
    %1868 = vmatpush1.msra.mxu0 %v1836
    %1869 = vmatprep.subr.mxu0 0.0
    %1870 = vmatpush1.msra.mxu0 %v1835
    %1871 = vmatprep.subr.mxu0 0.0
    %1872 = vmatpush2.msra.mxu0 0.0
    %1873 = vmatprep.subr.mxu0 0.0
    %1874 = vmatpush2.msra.mxu0 0.0
    %1875 = vmatprep.subr.mxu0 0.0
    %1876 = vmatpush2.msra.mxu0 0.0
    %1877 = vmatprep.subr.mxu0 0.0
    %1878 = vmatpush2.msra.mxu0 0.0
    %1879 = vmatprep.subr.mxu0 0.0
    %1880 = vmatpush2.msra.mxu0 0.0
    %1881 = vmatprep.subr.mxu0 0.0
    %1882 = vmatpush2.msra.mxu0 0.0
    %1883 = vmatprep.subr.mxu0 0.0
    %1884 = vmatpush2.msra.mxu0 0.0
    %1885 = vmatprep.subr.mxu0 0.0
    %1886 = vmatpush2.msra.mxu0 0.0
    %1887 = vmatprep.subr.mxu0 0.0
    %1888 = vmatpush2.msra.mxu0 0.0
    %1889 = vmatprep.subr.mxu0 0.0
    %1890 = vmatpush2.msra.mxu0 0.0
    %1891 = vmatprep.subr.mxu0 0.0
    %1892 = vmatpush2.msra.mxu0 0.0
    %1893 = vmatprep.subr.mxu0 0.0
    %1894 = vmatpush2.msra.mxu0 0.0
    %1895 = vmatprep.subr.mxu0 0.0
    %1896 = vmatpush2.msra.mxu0 0.0
    %1897 = vmatprep.subr.mxu0 0.0
    %1898 = vmatpush2.msra.mxu0 0.0
    %1899 = vmatprep.subr.mxu0 0.0
    %1900 = vmatpush2.msra.mxu0 0.0
    %1901 = vmatprep.subr.mxu0 0.0
    %1902 = vmatpush2.msra.mxu0 0.0
    %1903 = vmatprep.mubr.f32.mxu0 0.0
    %1904 = vmatmul.mubr.f32.gmra.mxu0 %v1689
    %v1905 = vpop.f32.mrf.mxu0
    %v1906 = vadd.f32 %v428, %v1905
    %v1907 = vpop.f32.mrf.mxu0
    %1908 = vdwg.mxu0
    %v1909 = vadd.f32 %v1681, %v1758
    %v1910 = vxor.u32 %v1909, 2147483648
    %v1911 = vmul.f32 %v1910, 1.442695
    %v1912 = vpow.pop %v1911
    %v1913 = vadd.f32 %v1912, 1.0
    %v1914 = vrcp.pop %v1913
    %v1915 = vmul.f32 1.0, %v1914
    %v1916 = vadd.f32 %v1682, %v1832
    %v1917 = vxor.u32 %v1916, 2147483648
    %v1918 = vmul.f32 %v1917, 1.442695
    %v1919 = vpow.pop %v1918
    %v1920 = vadd.f32 %v1919, 1.0
    %v1921 = vrcp.pop %v1920
    %v1922 = vmul.f32 1.0, %v1921
    %v1923 = vmul.f32 %v1915, %v1906
    %v1924 = vadd.f32 %v1683, %v1923
    %v1925 = vtanh.pop %v1924
    %v1926 = vsub.f32 1.0, %v1922
    %v1927 = vmul.f32 %v1926, %v1925
    %v1928 = vmul.f32 %v1922, %v1679
    %v1929 = vadd.f32 %v1927, %v1928
    %1930 = vst.msk [vmem:[#allocation2 + $0xa] sm:$0x3] %vm679, %v1929
    %v1931 = vld [vmem:[#allocation3 + $0xc] sm:$0x3]
    %v1932 = vld [vmem:[#allocation4 + $0xc] sm:$0x3]
    %v1933 = vld [vmem:[#allocation5 + $0xc] sm:$0x3]
    %v1934 = vld [vmem:[%s4] sm:$0xff]
    %v1935 = vld [vmem:[%s4 + $0x8] sm:$0xff]
    %v1936 = vld [vmem:[%s4 + $0x10] sm:$0xff]
    %v1937 = vld [vmem:[%s4 + $0x18] sm:$0xff]
    %v1939 = vsel %vm235, %v1929, 0
    %1941 = vmatprep.subr.mxu0 0.0
    %1942 = vmatpush1.msra.mxu0 0.0
    %1943 = vmatprep.subr.mxu0 0.0
    %1944 = vmatpush1.msra.mxu0 0.0
    %1945 = vmatprep.subr.mxu0 0.0
    %1946 = vmatpush1.msra.mxu0 0.0
    %1947 = vmatprep.subr.mxu0 0.0
    %1948 = vmatpush1.msra.mxu0 0.0
    %1949 = vmatprep.subr.mxu0 0.0
    %1950 = vmatpush1.msra.mxu0 0.0
    %1951 = vmatprep.subr.mxu0 0.0
    %1952 = vmatpush1.msra.mxu0 0.0
    %1953 = vmatprep.subr.mxu0 0.0
    %1954 = vmatpush1.msra.mxu0 0.0
    %1955 = vmatprep.subr.mxu0 0.0
    %1956 = vmatpush1.msra.mxu0 0.0
    %1957 = vmatprep.subr.mxu0 0.0
    %1958 = vmatpush1.msra.mxu0 0.0
    %1959 = vmatprep.subr.mxu0 0.0
    %1960 = vmatpush1.msra.mxu0 0.0
    %1961 = vmatprep.subr.mxu0 0.0
    %1962 = vmatpush1.msra.mxu0 0.0
    %1963 = vmatprep.subr.mxu0 0.0
    %1964 = vmatpush1.msra.mxu0 0.0
    %1965 = vmatprep.subr.mxu0 0.0
    %1966 = vmatpush1.msra.mxu0 %v1937
    %1967 = vmatprep.subr.mxu0 0.0
    %1968 = vmatpush1.msra.mxu0 %v1936
    %1969 = vmatprep.subr.mxu0 0.0
    %1970 = vmatpush1.msra.mxu0 %v1935
    %1971 = vmatprep.subr.mxu0 0.0
    %1972 = vmatpush1.msra.mxu0 %v1934
    %1973 = vmatprep.subr.mxu0 0.0
    %1974 = vmatpush2.msra.mxu0 0.0
    %1975 = vmatprep.subr.mxu0 0.0
    %1976 = vmatpush2.msra.mxu0 0.0
    %1977 = vmatprep.subr.mxu0 0.0
    %1978 = vmatpush2.msra.mxu0 0.0
    %1979 = vmatprep.subr.mxu0 0.0
    %1980 = vmatpush2.msra.mxu0 0.0
    %1981 = vmatprep.subr.mxu0 0.0
    %1982 = vmatpush2.msra.mxu0 0.0
    %1983 = vmatprep.subr.mxu0 0.0
    %1984 = vmatpush2.msra.mxu0 0.0
    %1985 = vmatprep.subr.mxu0 0.0
    %1986 = vmatpush2.msra.mxu0 0.0
    %1987 = vmatprep.subr.mxu0 0.0
    %1988 = vmatpush2.msra.mxu0 0.0
    %1989 = vmatprep.subr.mxu0 0.0
    %1990 = vmatpush2.msra.mxu0 0.0
    %1991 = vmatprep.subr.mxu0 0.0
    %1992 = vmatpush2.msra.mxu0 0.0
    %1993 = vmatprep.subr.mxu0 0.0
    %1994 = vmatpush2.msra.mxu0 0.0
    %1995 = vmatprep.subr.mxu0 0.0
    %1996 = vmatpush2.msra.mxu0 0.0
    %1997 = vmatprep.subr.mxu0 0.0
    %1998 = vmatpush2.msra.mxu0 0.0
    %1999 = vmatprep.subr.mxu0 0.0
    %2000 = vmatpush2.msra.mxu0 0.0
    %2001 = vmatprep.subr.mxu0 0.0
    %2002 = vmatpush2.msra.mxu0 0.0
    %2003 = vmatprep.subr.mxu0 0.0
    %2004 = vmatpush2.msra.mxu0 0.0
    %2005 = vmatprep.mubr.f32.mxu0 0.0
    %2006 = vmatmul.mubr.f32.gmra.mxu0 %v1939
    %v2007 = vpop.f32.mrf.mxu0
    %v2008 = vadd.f32 0.0, %v2007
    %v2009 = vpop.f32.mrf.mxu0
    %2010 = vdwg.mxu0
    %v2011 = vld [vmem:[#allocation12] sm:$0xff]
    %v2012 = vld [vmem:[#allocation12 + $0x8] sm:$0xff]
    %v2013 = vld [vmem:[#allocation12 + $0x10] sm:$0xff]
    %v2014 = vld [vmem:[#allocation12 + $0x18] sm:$0xff]
    %2015 = vmatprep.subr.mxu0 0.0
    %2016 = vmatpush1.msra.mxu0 0.0
    %2017 = vmatprep.subr.mxu0 0.0
    %2018 = vmatpush1.msra.mxu0 0.0
    %2019 = vmatprep.subr.mxu0 0.0
    %2020 = vmatpush1.msra.mxu0 0.0
    %2021 = vmatprep.subr.mxu0 0.0
    %2022 = vmatpush1.msra.mxu0 0.0
    %2023 = vmatprep.subr.mxu0 0.0
    %2024 = vmatpush1.msra.mxu0 0.0
    %2025 = vmatprep.subr.mxu0 0.0
    %2026 = vmatpush1.msra.mxu0 0.0
    %2027 = vmatprep.subr.mxu0 0.0
    %2028 = vmatpush1.msra.mxu0 0.0
    %2029 = vmatprep.subr.mxu0 0.0
    %2030 = vmatpush1.msra.mxu0 0.0
    %2031 = vmatprep.subr.mxu0 0.0
    %2032 = vmatpush1.msra.mxu0 0.0
    %2033 = vmatprep.subr.mxu0 0.0
    %2034 = vmatpush1.msra.mxu0 0.0
    %2035 = vmatprep.subr.mxu0 0.0
    %2036 = vmatpush1.msra.mxu0 0.0
    %2037 = vmatprep.subr.mxu0 0.0
    %2038 = vmatpush1.msra.mxu0 0.0
    %2039 = vmatprep.subr.mxu0 0.0
    %2040 = vmatpush1.msra.mxu0 %v2014
    %2041 = vmatprep.subr.mxu0 0.0
    %2042 = vmatpush1.msra.mxu0 %v2013
    %2043 = vmatprep.subr.mxu0 0.0
    %2044 = vmatpush1.msra.mxu0 %v2012
    %2045 = vmatprep.subr.mxu0 0.0
    %2046 = vmatpush1.msra.mxu0 %v2011
    %2047 = vmatprep.subr.mxu0 0.0
    %2048 = vmatpush2.msra.mxu0 0.0
    %2049 = vmatprep.subr.mxu0 0.0
    %2050 = vmatpush2.msra.mxu0 0.0
    %2051 = vmatprep.subr.mxu0 0.0
    %2052 = vmatpush2.msra.mxu0 0.0
    %2053 = vmatprep.subr.mxu0 0.0
    %2054 = vmatpush2.msra.mxu0 0.0
    %2055 = vmatprep.subr.mxu0 0.0
    %2056 = vmatpush2.msra.mxu0 0.0
    %2057 = vmatprep.subr.mxu0 0.0
    %2058 = vmatpush2.msra.mxu0 0.0
    %2059 = vmatprep.subr.mxu0 0.0
    %2060 = vmatpush2.msra.mxu0 0.0
    %2061 = vmatprep.subr.mxu0 0.0
    %2062 = vmatpush2.msra.mxu0 0.0
    %2063 = vmatprep.subr.mxu0 0.0
    %2064 = vmatpush2.msra.mxu0 0.0
    %2065 = vmatprep.subr.mxu0 0.0
    %2066 = vmatpush2.msra.mxu0 0.0
    %2067 = vmatprep.subr.mxu0 0.0
    %2068 = vmatpush2.msra.mxu0 0.0
    %2069 = vmatprep.subr.mxu0 0.0
    %2070 = vmatpush2.msra.mxu0 0.0
    %2071 = vmatprep.subr.mxu0 0.0
    %2072 = vmatpush2.msra.mxu0 0.0
    %2073 = vmatprep.subr.mxu0 0.0
    %2074 = vmatpush2.msra.mxu0 0.0
    %2075 = vmatprep.subr.mxu0 0.0
    %2076 = vmatpush2.msra.mxu0 0.0
    %2077 = vmatprep.subr.mxu0 0.0
    %2078 = vmatpush2.msra.mxu0 0.0
    %2079 = vmatprep.mubr.f32.mxu0 0.0
    %2080 = vmatmul.mubr.f32.gmra.mxu0 %v1939
    %v2081 = vpop.f32.mrf.mxu0
    %v2082 = vadd.f32 0.0, %v2081
    %v2083 = vpop.f32.mrf.mxu0
    %2084 = vdwg.mxu0
    %v2085 = vld [vmem:[#allocation14] sm:$0xff]
    %v2086 = vld [vmem:[#allocation14 + $0x8] sm:$0xff]
    %v2087 = vld [vmem:[#allocation14 + $0x10] sm:$0xff]
    %v2088 = vld [vmem:[#allocation14 + $0x18] sm:$0xff]
    %2089 = vmatprep.subr.mxu0 0.0
    %2090 = vmatpush1.msra.mxu0 0.0
    %2091 = vmatprep.subr.mxu0 0.0
    %2092 = vmatpush1.msra.mxu0 0.0
    %2093 = vmatprep.subr.mxu0 0.0
    %2094 = vmatpush1.msra.mxu0 0.0
    %2095 = vmatprep.subr.mxu0 0.0
    %2096 = vmatpush1.msra.mxu0 0.0
    %2097 = vmatprep.subr.mxu0 0.0
    %2098 = vmatpush1.msra.mxu0 0.0
    %2099 = vmatprep.subr.mxu0 0.0
    %2100 = vmatpush1.msra.mxu0 0.0
    %2101 = vmatprep.subr.mxu0 0.0
    %2102 = vmatpush1.msra.mxu0 0.0
    %2103 = vmatprep.subr.mxu0 0.0
    %2104 = vmatpush1.msra.mxu0 0.0
    %2105 = vmatprep.subr.mxu0 0.0
    %2106 = vmatpush1.msra.mxu0 0.0
    %2107 = vmatprep.subr.mxu0 0.0
    %2108 = vmatpush1.msra.mxu0 0.0
    %2109 = vmatprep.subr.mxu0 0.0
    %2110 = vmatpush1.msra.mxu0 0.0
    %2111 = vmatprep.subr.mxu0 0.0
    %2112 = vmatpush1.msra.mxu0 0.0
    %2113 = vmatprep.subr.mxu0 0.0
    %2114 = vmatpush1.msra.mxu0 %v2088
    %2115 = vmatprep.subr.mxu0 0.0
    %2116 = vmatpush1.msra.mxu0 %v2087
    %2117 = vmatprep.subr.mxu0 0.0
    %2118 = vmatpush1.msra.mxu0 %v2086
    %2119 = vmatprep.subr.mxu0 0.0
    %2120 = vmatpush1.msra.mxu0 %v2085
    %2121 = vmatprep.subr.mxu0 0.0
    %2122 = vmatpush2.msra.mxu0 0.0
    %2123 = vmatprep.subr.mxu0 0.0
    %2124 = vmatpush2.msra.mxu0 0.0
    %2125 = vmatprep.subr.mxu0 0.0
    %2126 = vmatpush2.msra.mxu0 0.0
    %2127 = vmatprep.subr.mxu0 0.0
    %2128 = vmatpush2.msra.mxu0 0.0
    %2129 = vmatprep.subr.mxu0 0.0
    %2130 = vmatpush2.msra.mxu0 0.0
    %2131 = vmatprep.subr.mxu0 0.0
    %2132 = vmatpush2.msra.mxu0 0.0
    %2133 = vmatprep.subr.mxu0 0.0
    %2134 = vmatpush2.msra.mxu0 0.0
    %2135 = vmatprep.subr.mxu0 0.0
    %2136 = vmatpush2.msra.mxu0 0.0
    %2137 = vmatprep.subr.mxu0 0.0
    %2138 = vmatpush2.msra.mxu0 0.0
    %2139 = vmatprep.subr.mxu0 0.0
    %2140 = vmatpush2.msra.mxu0 0.0
    %2141 = vmatprep.subr.mxu0 0.0
    %2142 = vmatpush2.msra.mxu0 0.0
    %2143 = vmatprep.subr.mxu0 0.0
    %2144 = vmatpush2.msra.mxu0 0.0
    %2145 = vmatprep.subr.mxu0 0.0
    %2146 = vmatpush2.msra.mxu0 0.0
    %2147 = vmatprep.subr.mxu0 0.0
    %2148 = vmatpush2.msra.mxu0 0.0
    %2149 = vmatprep.subr.mxu0 0.0
    %2150 = vmatpush2.msra.mxu0 0.0
    %2151 = vmatprep.subr.mxu0 0.0
    %2152 = vmatpush2.msra.mxu0 0.0
    %2153 = vmatprep.mubr.f32.mxu0 0.0
    %2154 = vmatmul.mubr.f32.gmra.mxu0 %v1939
    %v2155 = vpop.f32.mrf.mxu0
    %v2156 = vadd.f32 %v428, %v2155
    %v2157 = vpop.f32.mrf.mxu0
    %2158 = vdwg.mxu0
    %v2159 = vadd.f32 %v1931, %v2008
    %v2160 = vxor.u32 %v2159, 2147483648
    %v2161 = vmul.f32 %v2160, 1.442695
    %v2162 = vpow.pop %v2161
    %v2163 = vadd.f32 %v2162, 1.0
    %v2164 = vrcp.pop %v2163
    %v2165 = vmul.f32 1.0, %v2164
    %v2166 = vadd.f32 %v1932, %v2082
    %v2167 = vxor.u32 %v2166, 2147483648
    %v2168 = vmul.f32 %v2167, 1.442695
    %v2169 = vpow.pop %v2168
    %v2170 = vadd.f32 %v2169, 1.0
    %v2171 = vrcp.pop %v2170
    %v2172 = vmul.f32 1.0, %v2171
    %v2173 = vmul.f32 %v2165, %v2156
    %v2174 = vadd.f32 %v1933, %v2173
    %v2175 = vtanh.pop %v2174
    %v2176 = vsub.f32 1.0, %v2172
    %v2177 = vmul.f32 %v2176, %v2175
    %v2178 = vmul.f32 %v2172, %v1929
    %v2179 = vadd.f32 %v2177, %v2178
    %2180 = vst.msk [vmem:[#allocation2 + $0xc] sm:$0x3] %vm679, %v2179
    %v2181 = vld [vmem:[#allocation3 + $0xe] sm:$0x3]
    %v2182 = vld [vmem:[#allocation4 + $0xe] sm:$0x3]
    %v2183 = vld [vmem:[#allocation5 + $0xe] sm:$0x3]
    %v2184 = vld [vmem:[%s4] sm:$0xff]
    %v2185 = vld [vmem:[%s4 + $0x8] sm:$0xff]
    %v2186 = vld [vmem:[%s4 + $0x10] sm:$0xff]
    %v2187 = vld [vmem:[%s4 + $0x18] sm:$0xff]
    %v2189 = vsel %vm235, %v2179, 0
    %2191 = vmatprep.subr.mxu0 0.0
    %2192 = vmatpush1.msra.mxu0 0.0
    %2193 = vmatprep.subr.mxu0 0.0
    %2194 = vmatpush1.msra.mxu0 0.0
    %2195 = vmatprep.subr.mxu0 0.0
    %2196 = vmatpush1.msra.mxu0 0.0
    %2197 = vmatprep.subr.mxu0 0.0
    %2198 = vmatpush1.msra.mxu0 0.0
    %2199 = vmatprep.subr.mxu0 0.0
    %2200 = vmatpush1.msra.mxu0 0.0
    %2201 = vmatprep.subr.mxu0 0.0
    %2202 = vmatpush1.msra.mxu0 0.0
    %2203 = vmatprep.subr.mxu0 0.0
    %2204 = vmatpush1.msra.mxu0 0.0
    %2205 = vmatprep.subr.mxu0 0.0
    %2206 = vmatpush1.msra.mxu0 0.0
    %2207 = vmatprep.subr.mxu0 0.0
    %2208 = vmatpush1.msra.mxu0 0.0
    %2209 = vmatprep.subr.mxu0 0.0
    %2210 = vmatpush1.msra.mxu0 0.0
    %2211 = vmatprep.subr.mxu0 0.0
    %2212 = vmatpush1.msra.mxu0 0.0
    %2213 = vmatprep.subr.mxu0 0.0
    %2214 = vmatpush1.msra.mxu0 0.0
    %2215 = vmatprep.subr.mxu0 0.0
    %2216 = vmatpush1.msra.mxu0 %v2187
    %2217 = vmatprep.subr.mxu0 0.0
    %2218 = vmatpush1.msra.mxu0 %v2186
    %2219 = vmatprep.subr.mxu0 0.0
    %2220 = vmatpush1.msra.mxu0 %v2185
    %2221 = vmatprep.subr.mxu0 0.0
    %2222 = vmatpush1.msra.mxu0 %v2184
    %2223 = vmatprep.subr.mxu0 0.0
    %2224 = vmatpush2.msra.mxu0 0.0
    %2225 = vmatprep.subr.mxu0 0.0
    %2226 = vmatpush2.msra.mxu0 0.0
    %2227 = vmatprep.subr.mxu0 0.0
    %2228 = vmatpush2.msra.mxu0 0.0
    %2229 = vmatprep.subr.mxu0 0.0
    %2230 = vmatpush2.msra.mxu0 0.0
    %2231 = vmatprep.subr.mxu0 0.0
    %2232 = vmatpush2.msra.mxu0 0.0
    %2233 = vmatprep.subr.mxu0 0.0
    %2234 = vmatpush2.msra.mxu0 0.0
    %2235 = vmatprep.subr.mxu0 0.0
    %2236 = vmatpush2.msra.mxu0 0.0
    %2237 = vmatprep.subr.mxu0 0.0
    %2238 = vmatpush2.msra.mxu0 0.0
    %2239 = vmatprep.subr.mxu0 0.0
    %2240 = vmatpush2.msra.mxu0 0.0
    %2241 = vmatprep.subr.mxu0 0.0
    %2242 = vmatpush2.msra.mxu0 0.0
    %2243 = vmatprep.subr.mxu0 0.0
    %2244 = vmatpush2.msra.mxu0 0.0
    %2245 = vmatprep.subr.mxu0 0.0
    %2246 = vmatpush2.msra.mxu0 0.0
    %2247 = vmatprep.subr.mxu0 0.0
    %2248 = vmatpush2.msra.mxu0 0.0
    %2249 = vmatprep.subr.mxu0 0.0
    %2250 = vmatpush2.msra.mxu0 0.0
    %2251 = vmatprep.subr.mxu0 0.0
    %2252 = vmatpush2.msra.mxu0 0.0
    %2253 = vmatprep.subr.mxu0 0.0
    %2254 = vmatpush2.msra.mxu0 0.0
    %2255 = vmatprep.mubr.f32.mxu0 0.0
    %2256 = vmatmul.mubr.f32.gmra.mxu0 %v2189
    %v2257 = vpop.f32.mrf.mxu0
    %v2258 = vadd.f32 0.0, %v2257
    %v2259 = vpop.f32.mrf.mxu0
    %2260 = vdwg.mxu0
    %v2261 = vld [vmem:[#allocation12] sm:$0xff]
    %v2262 = vld [vmem:[#allocation12 + $0x8] sm:$0xff]
    %v2263 = vld [vmem:[#allocation12 + $0x10] sm:$0xff]
    %v2264 = vld [vmem:[#allocation12 + $0x18] sm:$0xff]
    %2265 = vmatprep.subr.mxu0 0.0
    %2266 = vmatpush1.msra.mxu0 0.0
    %2267 = vmatprep.subr.mxu0 0.0
    %2268 = vmatpush1.msra.mxu0 0.0
    %2269 = vmatprep.subr.mxu0 0.0
    %2270 = vmatpush1.msra.mxu0 0.0
    %2271 = vmatprep.subr.mxu0 0.0
    %2272 = vmatpush1.msra.mxu0 0.0
    %2273 = vmatprep.subr.mxu0 0.0
    %2274 = vmatpush1.msra.mxu0 0.0
    %2275 = vmatprep.subr.mxu0 0.0
    %2276 = vmatpush1.msra.mxu0 0.0
    %2277 = vmatprep.subr.mxu0 0.0
    %2278 = vmatpush1.msra.mxu0 0.0
    %2279 = vmatprep.subr.mxu0 0.0
    %2280 = vmatpush1.msra.mxu0 0.0
    %2281 = vmatprep.subr.mxu0 0.0
    %2282 = vmatpush1.msra.mxu0 0.0
    %2283 = vmatprep.subr.mxu0 0.0
    %2284 = vmatpush1.msra.mxu0 0.0
    %2285 = vmatprep.subr.mxu0 0.0
    %2286 = vmatpush1.msra.mxu0 0.0
    %2287 = vmatprep.subr.mxu0 0.0
    %2288 = vmatpush1.msra.mxu0 0.0
    %2289 = vmatprep.subr.mxu0 0.0
    %2290 = vmatpush1.msra.mxu0 %v2264
    %2291 = vmatprep.subr.mxu0 0.0
    %2292 = vmatpush1.msra.mxu0 %v2263
    %2293 = vmatprep.subr.mxu0 0.0
    %2294 = vmatpush1.msra.mxu0 %v2262
    %2295 = vmatprep.subr.mxu0 0.0
    %2296 = vmatpush1.msra.mxu0 %v2261
    %2297 = vmatprep.subr.mxu0 0.0
    %2298 = vmatpush2.msra.mxu0 0.0
    %2299 = vmatprep.subr.mxu0 0.0
    %2300 = vmatpush2.msra.mxu0 0.0
    %2301 = vmatprep.subr.mxu0 0.0
    %2302 = vmatpush2.msra.mxu0 0.0
    %2303 = vmatprep.subr.mxu0 0.0
    %2304 = vmatpush2.msra.mxu0 0.0
    %2305 = vmatprep.subr.mxu0 0.0
    %2306 = vmatpush2.msra.mxu0 0.0
    %2307 = vmatprep.subr.mxu0 0.0
    %2308 = vmatpush2.msra.mxu0 0.0
    %2309 = vmatprep.subr.mxu0 0.0
    %2310 = vmatpush2.msra.mxu0 0.0
    %2311 = vmatprep.subr.mxu0 0.0
    %2312 = vmatpush2.msra.mxu0 0.0
    %2313 = vmatprep.subr.mxu0 0.0
    %2314 = vmatpush2.msra.mxu0 0.0
    %2315 = vmatprep.subr.mxu0 0.0
    %2316 = vmatpush2.msra.mxu0 0.0
    %2317 = vmatprep.subr.mxu0 0.0
    %2318 = vmatpush2.msra.mxu0 0.0
    %2319 = vmatprep.subr.mxu0 0.0
    %2320 = vmatpush2.msra.mxu0 0.0
    %2321 = vmatprep.subr.mxu0 0.0
    %2322 = vmatpush2.msra.mxu0 0.0
    %2323 = vmatprep.subr.mxu0 0.0
    %2324 = vmatpush2.msra.mxu0 0.0
    %2325 = vmatprep.subr.mxu0 0.0
    %2326 = vmatpush2.msra.mxu0 0.0
    %2327 = vmatprep.subr.mxu0 0.0
    %2328 = vmatpush2.msra.mxu0 0.0
    %2329 = vmatprep.mubr.f32.mxu0 0.0
    %2330 = vmatmul.mubr.f32.gmra.mxu0 %v2189
    %v2331 = vpop.f32.mrf.mxu0
    %v2332 = vadd.f32 0.0, %v2331
    %v2333 = vpop.f32.mrf.mxu0
    %2334 = vdwg.mxu0
    %v2335 = vld [vmem:[#allocation14] sm:$0xff]
    %v2336 = vld [vmem:[#allocation14 + $0x8] sm:$0xff]
    %v2337 = vld [vmem:[#allocation14 + $0x10] sm:$0xff]
    %v2338 = vld [vmem:[#allocation14 + $0x18] sm:$0xff]
    %2339 = vmatprep.subr.mxu0 0.0
    %2340 = vmatpush1.msra.mxu0 0.0
    %2341 = vmatprep.subr.mxu0 0.0
    %2342 = vmatpush1.msra.mxu0 0.0
    %2343 = vmatprep.subr.mxu0 0.0
    %2344 = vmatpush1.msra.mxu0 0.0
    %2345 = vmatprep.subr.mxu0 0.0
    %2346 = vmatpush1.msra.mxu0 0.0
    %2347 = vmatprep.subr.mxu0 0.0
    %2348 = vmatpush1.msra.mxu0 0.0
    %2349 = vmatprep.subr.mxu0 0.0
    %2350 = vmatpush1.msra.mxu0 0.0
    %2351 = vmatprep.subr.mxu0 0.0
    %2352 = vmatpush1.msra.mxu0 0.0
    %2353 = vmatprep.subr.mxu0 0.0
    %2354 = vmatpush1.msra.mxu0 0.0
    %2355 = vmatprep.subr.mxu0 0.0
    %2356 = vmatpush1.msra.mxu0 0.0
    %2357 = vmatprep.subr.mxu0 0.0
    %2358 = vmatpush1.msra.mxu0 0.0
    %2359 = vmatprep.subr.mxu0 0.0
    %2360 = vmatpush1.msra.mxu0 0.0
    %2361 = vmatprep.subr.mxu0 0.0
    %2362 = vmatpush1.msra.mxu0 0.0
    %2363 = vmatprep.subr.mxu0 0.0
    %2364 = vmatpush1.msra.mxu0 %v2338
    %2365 = vmatprep.subr.mxu0 0.0
    %2366 = vmatpush1.msra.mxu0 %v2337
    %2367 = vmatprep.subr.mxu0 0.0
    %2368 = vmatpush1.msra.mxu0 %v2336
    %2369 = vmatprep.subr.mxu0 0.0
    %2370 = vmatpush1.msra.mxu0 %v2335
    %2371 = vmatprep.subr.mxu0 0.0
    %2372 = vmatpush2.msra.mxu0 0.0
    %2373 = vmatprep.subr.mxu0 0.0
    %2374 = vmatpush2.msra.mxu0 0.0
    %2375 = vmatprep.subr.mxu0 0.0
    %2376 = vmatpush2.msra.mxu0 0.0
    %2377 = vmatprep.subr.mxu0 0.0
    %2378 = vmatpush2.msra.mxu0 0.0
    %2379 = vmatprep.subr.mxu0 0.0
    %2380 = vmatpush2.msra.mxu0 0.0
    %2381 = vmatprep.subr.mxu0 0.0
    %2382 = vmatpush2.msra.mxu0 0.0
    %2383 = vmatprep.subr.mxu0 0.0
    %2384 = vmatpush2.msra.mxu0 0.0
    %2385 = vmatprep.subr.mxu0 0.0
    %2386 = vmatpush2.msra.mxu0 0.0
    %2387 = vmatprep.subr.mxu0 0.0
    %2388 = vmatpush2.msra.mxu0 0.0
    %2389 = vmatprep.subr.mxu0 0.0
    %2390 = vmatpush2.msra.mxu0 0.0
    %2391 = vmatprep.subr.mxu0 0.0
    %2392 = vmatpush2.msra.mxu0 0.0
    %2393 = vmatprep.subr.mxu0 0.0
    %2394 = vmatpush2.msra.mxu0 0.0
    %2395 = vmatprep.subr.mxu0 0.0
    %2396 = vmatpush2.msra.mxu0 0.0
    %2397 = vmatprep.subr.mxu0 0.0
    %2398 = vmatpush2.msra.mxu0 0.0
    %2399 = vmatprep.subr.mxu0 0.0
    %2400 = vmatpush2.msra.mxu0 0.0
    %2401 = vmatprep.subr.mxu0 0.0
    %2402 = vmatpush2.msra.mxu0 0.0
    %2403 = vmatprep.mubr.f32.mxu0 0.0
    %2404 = vmatmul.mubr.f32.gmra.mxu0 %v2189
    %v2405 = vpop.f32.mrf.mxu0
    %v2406 = vadd.f32 %v428, %v2405
    %v2407 = vpop.f32.mrf.mxu0
    %2408 = vdwg.mxu0
    %v2409 = vadd.f32 %v2181, %v2258
    %v2410 = vxor.u32 %v2409, 2147483648
    %v2411 = vmul.f32 %v2410, 1.442695
    %v2412 = vpow.pop %v2411
    %v2413 = vadd.f32 %v2412, 1.0
    %v2414 = vrcp.pop %v2413
    %v2415 = vmul.f32 1.0, %v2414
    %v2416 = vadd.f32 %v2182, %v2332
    %v2417 = vxor.u32 %v2416, 2147483648
    %v2418 = vmul.f32 %v2417, 1.442695
    %v2419 = vpow.pop %v2418
    %v2420 = vadd.f32 %v2419, 1.0
    %v2421 = vrcp.pop %v2420
    %v2422 = vmul.f32 1.0, %v2421
    %v2423 = vmul.f32 %v2415, %v2406
    %v2424 = vadd.f32 %v2183, %v2423
    %v2425 = vtanh.pop %v2424
    %v2426 = vsub.f32 1.0, %v2422
    %v2427 = vmul.f32 %v2426, %v2425
    %v2428 = vmul.f32 %v2422, %v2179
    %v2429 = vadd.f32 %v2427, %v2428
    %2430 = vst.msk [vmem:[#allocation2 + $0xe] sm:$0x3] %vm679, %v2429
    %v2431 = vld [vmem:[#allocation2] sm:$0xff]
    %v2432 = vld [vmem:[#allocation2 + $0x8] sm:$0xff]
    %v2433 = vld [vmem:[%s13] sm:$0xff]
    %v2434 = vld [vmem:[%s13 + $0x8] sm:$0xff]
    %v2435 = vld [vmem:[%s13 + $0x10] sm:$0xff]
    %v2436 = vld [vmem:[%s13 + $0x18] sm:$0xff]
    %v2437 = vld [vmem:[#allocation15] sm:$0xff]
    %v2438 = vld [vmem:[#allocation15 + $0x8] sm:$0xff]
    %v2439 = vld [vmem:[#allocation15 + $0x10] sm:$0xff]
    %v2440 = vld [vmem:[#allocation15 + $0x18] sm:$0xff]
    %v2442 = vsel %vm235, %v2429, 0
    %2444 = vmatprep.subr.mxu0 0.0
    %2445 = vmatpush1.msra.mxu0 0.0
    %2446 = vmatprep.subr.mxu0 0.0
    %2447 = vmatpush1.msra.mxu0 0.0
    %2448 = vmatprep.subr.mxu0 0.0
    %2449 = vmatpush1.msra.mxu0 0.0
    %2450 = vmatprep.subr.mxu0 0.0
    %2451 = vmatpush1.msra.mxu0 0.0
    %2452 = vmatprep.subr.mxu0 0.0
    %2453 = vmatpush1.msra.mxu0 0.0
    %2454 = vmatprep.subr.mxu0 0.0
    %2455 = vmatpush1.msra.mxu0 0.0
    %2456 = vmatprep.subr.mxu0 0.0
    %2457 = vmatpush1.msra.mxu0 0.0
    %2458 = vmatprep.subr.mxu0 0.0
    %2459 = vmatpush1.msra.mxu0 0.0
    %2460 = vmatprep.subr.mxu0 0.0
    %2461 = vmatpush1.msra.mxu0 0.0
    %2462 = vmatprep.subr.mxu0 0.0
    %2463 = vmatpush1.msra.mxu0 0.0
    %2464 = vmatprep.subr.mxu0 0.0
    %2465 = vmatpush1.msra.mxu0 0.0
    %2466 = vmatprep.subr.mxu0 0.0
    %2467 = vmatpush1.msra.mxu0 0.0
    %2468 = vmatprep.subr.mxu0 0.0
    %2469 = vmatpush1.msra.mxu0 %v2440
    %2470 = vmatprep.subr.mxu0 0.0
    %2471 = vmatpush1.msra.mxu0 %v2439
    %2472 = vmatprep.subr.mxu0 0.0
    %2473 = vmatpush1.msra.mxu0 %v2438
    %2474 = vmatprep.subr.mxu0 0.0
    %2475 = vmatpush1.msra.mxu0 %v2437
    %2476 = vmatprep.subr.mxu0 0.0
    %2477 = vmatpush2.msra.mxu0 0.0
    %2478 = vmatprep.subr.mxu0 0.0
    %2479 = vmatpush2.msra.mxu0 0.0
    %2480 = vmatprep.subr.mxu0 0.0
    %2481 = vmatpush2.msra.mxu0 0.0
    %2482 = vmatprep.subr.mxu0 0.0
    %2483 = vmatpush2.msra.mxu0 0.0
    %2484 = vmatprep.subr.mxu0 0.0
    %2485 = vmatpush2.msra.mxu0 0.0
    %2486 = vmatprep.subr.mxu0 0.0
    %2487 = vmatpush2.msra.mxu0 0.0
    %2488 = vmatprep.subr.mxu0 0.0
    %2489 = vmatpush2.msra.mxu0 0.0
    %2490 = vmatprep.subr.mxu0 0.0
    %2491 = vmatpush2.msra.mxu0 0.0
    %2492 = vmatprep.subr.mxu0 0.0
    %2493 = vmatpush2.msra.mxu0 0.0
    %2494 = vmatprep.subr.mxu0 0.0
    %2495 = vmatpush2.msra.mxu0 0.0
    %2496 = vmatprep.subr.mxu0 0.0
    %2497 = vmatpush2.msra.mxu0 0.0
    %2498 = vmatprep.subr.mxu0 0.0
    %2499 = vmatpush2.msra.mxu0 0.0
    %2500 = vmatprep.subr.mxu0 0.0
    %2501 = vmatpush2.msra.mxu0 0.0
    %2502 = vmatprep.subr.mxu0 0.0
    %2503 = vmatpush2.msra.mxu0 0.0
    %2504 = vmatprep.subr.mxu0 0.0
    %2505 = vmatpush2.msra.mxu0 0.0
    %2506 = vmatprep.subr.mxu0 0.0
    %2507 = vmatpush2.msra.mxu0 0.0
    %2508 = vmatprep.mubr.f32.mxu0 0.0
    %2509 = vmatmul.mubr.f32.gmra.mxu0 %v2442
    %v2510 = vpop.f32.mrf.mxu0
    %v2511 = vadd.f32 0.0, %v2510
    %v2512 = vpop.f32.mrf.mxu0
    %2513 = vdwg.mxu0
    %v2514 = vlaneseq
    %v2515 = vshrl.u32 %v2514, 7
    %v2516 = vadd.s32 %v2515, 8
    %vm2517 = vcmp.lt.s32.totalorder %v2515, 0
    %v2518 = vsub.s32 0, %v2515
    %v2519 = vsel %vm2517, %v2518, %v2515
    %v2520 = vshrl.u32 %v2519, 1
    %v2521 = vand.u32 %v2519, 1
    %v2522 = vsub.s32 0, %v2521
    %v2523 = vsel %vm2517, %v2522, %v2521
    %vm2524 = vcmp.lt.s32.totalorder %v2516, 0
    %v2525 = vsub.s32 0, %v2516
    %v2526 = vsel %vm2524, %v2525, %v2516
    %v2527 = vshrl.u32 %v2526, 1
    %v2528 = vand.u32 %v2526, 1
    %v2529 = vsub.s32 0, %v2528
    %v2530 = vsel %vm2524, %v2529, %v2528
    %vm2531 = vcmp.ne.s32.totalorder %v2523, 0
    %vm2532 = vcmp.ne.s32.totalorder %v2530, 0
    %vm2533 = vcmp.lt.s32.totalorder %v2523, 0
    %vm2534 = vcmp.lt.s32.totalorder %v2530, 0
    %vm2535 = vmand %vm2533, %vm2531
    %vm2536 = vmand %vm2534, %vm2532
    %v2537 = vadd.s32 %v2523, 2
    %v2538 = vadd.s32 %v2530, 2
    %v2539 = vsel %vm2535, %v2537, %v2523
    %v2540 = vsel %vm2536, %v2538, %v2530
    %v2541 = vlaneseq
    %v2542 = vand.u32 %v2541, 127
    %vm2543 = vcmp.eq.s32.totalorder %v2539, %v2542
    %vm2544 = vcmp.eq.s32.totalorder %v2540, %v2542
    %v2545 = vsel %vm2543, 1, 0
    %v2546 = vsel %vm2544, 1, 0
    %v2547 = vcvt.s32.f32 %v2545
    %v2548 = vcvt.s32.f32 %v2546
    %vm2549 = vcmp.lt.s32.totalorder %v2542, 0
    %v2550 = vsub.s32 0, %v2542
    %v2551 = vsel %vm2549, %v2550, %v2542
    %v2552 = vshrl.u32 %v2551, 1
    %v2553 = vand.u32 %v2551, 1
    %v2554 = vsub.s32 0, %v2553
    %v2555 = vsel %vm2549, %v2554, %v2553
    %vm2556 = vcmp.ne.s32.totalorder %v2555, 0
    %vm2557 = vcmp.lt.s32.totalorder %v2555, 0
    %vm2558 = vmand %vm2557, %vm2556
    %v2559 = vadd.s32 %v2555, 2
    %v2560 = vsel %vm2558, %v2559, %v2555
    %vm2561 = vcmp.eq.s32.totalorder %v2560, %v2515
    %v2562 = vsel %vm2561, 1, 0
    %v2563 = vcvt.s32.f32 %v2562
    %vm2564 = vcmask 15360
    %v2566 = vsel %vm2564, %v2547, 0
    %v2569 = vsel %vm2564, %v2548, 0
    %vm2571 = vcmask 1041408
    %v2573 = vsel %vm2571, %v2511, 0
    %2575 = vmatprep.subr.mxu0 0.0
    %2576 = vmatpush1.msra.mxu0 0.0
    %2577 = vmatprep.subr.mxu0 0.0
    %2578 = vmatpush1.msra.mxu0 0.0
    %2579 = vmatprep.subr.mxu0 0.0
    %2580 = vmatpush1.msra.mxu0 0.0
    %2581 = vmatprep.subr.mxu0 0.0
    %2582 = vmatpush1.msra.mxu0 0.0
    %2583 = vmatprep.subr.mxu0 0.0
    %2584 = vmatpush1.msra.mxu0 0.0
    %2585 = vmatprep.subr.mxu0 0.0
    %2586 = vmatpush1.msra.mxu0 0.0
    %2587 = vmatprep.subr.mxu0 0.0
    %2588 = vmatpush1.msra.mxu0 0.0
    %2589 = vmatprep.subr.mxu0 0.0
    %2590 = vmatpush1.msra.mxu0 0.0
    %2591 = vmatprep.subr.mxu0 0.0
    %2592 = vmatpush1.msra.mxu0 0.0
    %2593 = vmatprep.subr.mxu0 0.0
    %2594 = vmatpush1.msra.mxu0 0.0
    %2595 = vmatprep.subr.mxu0 0.0
    %2596 = vmatpush1.msra.mxu0 0.0
    %2597 = vmatprep.subr.mxu0 0.0
    %2598 = vmatpush1.msra.mxu0 0.0
    %2599 = vmatprep.subr.mxu0 0.0
    %2600 = vmatpush1.msra.mxu0 0.0
    %2601 = vmatprep.subr.mxu0 0.0
    %2602 = vmatpush1.msra.mxu0 0.0
    %2603 = vmatprep.subr.mxu0 0.0
    %2604 = vmatpush1.msra.mxu0 0.0
    %2605 = vmatprep.subr.mxu0 0.0
    %2606 = vmatpush1.msra.mxu0 %v2573
    %2607 = vmatprep.subr.mxu0 0.0
    %2608 = vmatpush2.msra.mxu0 0.0
    %2609 = vmatprep.subr.mxu0 0.0
    %2610 = vmatpush2.msra.mxu0 0.0
    %2611 = vmatprep.subr.mxu0 0.0
    %2612 = vmatpush2.msra.mxu0 0.0
    %2613 = vmatprep.subr.mxu0 0.0
    %2614 = vmatpush2.msra.mxu0 0.0
    %2615 = vmatprep.subr.mxu0 0.0
    %2616 = vmatpush2.msra.mxu0 0.0
    %2617 = vmatprep.subr.mxu0 0.0
    %2618 = vmatpush2.msra.mxu0 0.0
    %2619 = vmatprep.subr.mxu0 0.0
    %2620 = vmatpush2.msra.mxu0 0.0
    %2621 = vmatprep.subr.mxu0 0.0
    %2622 = vmatpush2.msra.mxu0 0.0
    %2623 = vmatprep.subr.mxu0 0.0
    %2624 = vmatpush2.msra.mxu0 0.0
    %2625 = vmatprep.subr.mxu0 0.0
    %2626 = vmatpush2.msra.mxu0 0.0
    %2627 = vmatprep.subr.mxu0 0.0
    %2628 = vmatpush2.msra.mxu0 0.0
    %2629 = vmatprep.subr.mxu0 0.0
    %2630 = vmatpush2.msra.mxu0 0.0
    %2631 = vmatprep.subr.mxu0 0.0
    %2632 = vmatpush2.msra.mxu0 0.0
    %2633 = vmatprep.subr.mxu0 0.0
    %2634 = vmatpush2.msra.mxu0 0.0
    %2635 = vmatprep.subr.mxu0 0.0
    %2636 = vmatpush2.msra.mxu0 0.0
    %2637 = vmatprep.subr.mxu0 0.0
    %2638 = vmatpush2.msra.mxu0 0.0
    %2639 = vmatprep.mubr.f32.mxu0 0.0
    %2640 = vmatmul.mubr.f32.gmra.mxu0 %v2566
    %v2641 = vpop.f32.mrf.mxu0
    %v2642 = vadd.f32 0.0, %v2641
    %v2643 = vpop.f32.mrf.mxu0
    %2644 = vmatprep.mubr.f32.mxu0 0.0
    %2645 = vmatmul.mubr.f32.gmra.mxu0 %v2569
    %v2646 = vpop.f32.mrf.mxu0
    %v2647 = vadd.f32 0.0, %v2646
    %v2648 = vpop.f32.mrf.mxu0
    %2649 = vdwg.mxu0
    %v2651 = vsel %vm235, %v2431, 0
    %v2654 = vsel %vm235, %v2432, 0
    %2656 = vmatprep.subr.mxu0 0.0
    %2657 = vmatpush1.msra.mxu0 0.0
    %2658 = vmatprep.subr.mxu0 0.0
    %2659 = vmatpush1.msra.mxu0 0.0
    %2660 = vmatprep.subr.mxu0 0.0
    %2661 = vmatpush1.msra.mxu0 0.0
    %2662 = vmatprep.subr.mxu0 0.0
    %2663 = vmatpush1.msra.mxu0 0.0
    %2664 = vmatprep.subr.mxu0 0.0
    %2665 = vmatpush1.msra.mxu0 0.0
    %2666 = vmatprep.subr.mxu0 0.0
    %2667 = vmatpush1.msra.mxu0 0.0
    %2668 = vmatprep.subr.mxu0 0.0
    %2669 = vmatpush1.msra.mxu0 0.0
    %2670 = vmatprep.subr.mxu0 0.0
    %2671 = vmatpush1.msra.mxu0 0.0
    %2672 = vmatprep.subr.mxu0 0.0
    %2673 = vmatpush1.msra.mxu0 0.0
    %2674 = vmatprep.subr.mxu0 0.0
    %2675 = vmatpush1.msra.mxu0 0.0
    %2676 = vmatprep.subr.mxu0 0.0
    %2677 = vmatpush1.msra.mxu0 0.0
    %2678 = vmatprep.subr.mxu0 0.0
    %2679 = vmatpush1.msra.mxu0 0.0
    %2680 = vmatprep.subr.mxu0 0.0
    %2681 = vmatpush1.msra.mxu0 %v2436
    %2682 = vmatprep.subr.mxu0 0.0
    %2683 = vmatpush1.msra.mxu0 %v2435
    %2684 = vmatprep.subr.mxu0 0.0
    %2685 = vmatpush1.msra.mxu0 %v2434
    %2686 = vmatprep.subr.mxu0 0.0
    %2687 = vmatpush1.msra.mxu0 %v2433
    %2688 = vmatprep.subr.mxu0 0.0
    %2689 = vmatpush2.msra.mxu0 0.0
    %2690 = vmatprep.subr.mxu0 0.0
    %2691 = vmatpush2.msra.mxu0 0.0
    %2692 = vmatprep.subr.mxu0 0.0
    %2693 = vmatpush2.msra.mxu0 0.0
    %2694 = vmatprep.subr.mxu0 0.0
    %2695 = vmatpush2.msra.mxu0 0.0
    %2696 = vmatprep.subr.mxu0 0.0
    %2697 = vmatpush2.msra.mxu0 0.0
    %2698 = vmatprep.subr.mxu0 0.0
    %2699 = vmatpush2.msra.mxu0 0.0
    %2700 = vmatprep.subr.mxu0 0.0
    %2701 = vmatpush2.msra.mxu0 0.0
    %2702 = vmatprep.subr.mxu0 0.0
    %2703 = vmatpush2.msra.mxu0 0.0
    %2704 = vmatprep.subr.mxu0 0.0
    %2705 = vmatpush2.msra.mxu0 0.0
    %2706 = vmatprep.subr.mxu0 0.0
    %2707 = vmatpush2.msra.mxu0 0.0
    %2708 = vmatprep.subr.mxu0 0.0
    %2709 = vmatpush2.msra.mxu0 0.0
    %2710 = vmatprep.subr.mxu0 0.0
    %2711 = vmatpush2.msra.mxu0 0.0
    %2712 = vmatprep.subr.mxu0 0.0
    %2713 = vmatpush2.msra.mxu0 0.0
    %2714 = vmatprep.subr.mxu0 0.0
    %2715 = vmatpush2.msra.mxu0 0.0
    %2716 = vmatprep.subr.mxu0 0.0
    %2717 = vmatpush2.msra.mxu0 0.0
    %2718 = vmatprep.subr.mxu0 0.0
    %2719 = vmatpush2.msra.mxu0 0.0
    %2720 = vmatprep.mubr.f32.mxu0 0.0
    %2721 = vmatmul.mubr.f32.gmra.mxu0 %v2651
    %v2722 = vpop.f32.mrf.mxu0
    %v2723 = vadd.f32 %v2642, %v2722
    %v2724 = vpop.f32.mrf.mxu0
    %2725 = vmatprep.mubr.f32.mxu0 0.0
    %2726 = vmatmul.mubr.f32.gmra.mxu0 %v2654
    %v2727 = vpop.f32.mrf.mxu0
    %v2728 = vadd.f32 %v2647, %v2727
    %v2729 = vpop.f32.mrf.mxu0
    %2730 = vdwg.mxu0
    %v2731 = vtanh.pop %v2723
    %v2732 = vtanh.pop %v2728
    %v2733 = vld [vmem:[%s15] sm:$0xff]
    %v2734 = vld [vmem:[%s15 + $0x8] sm:$0xff]
    %v2735 = vld [vmem:[%s15 + $0x10] sm:$0xff]
    %v2736 = vld [vmem:[%s15 + $0x18] sm:$0xff]
    %v2738 = vsel %vm235, %v2731, 0
    %v2741 = vsel %vm235, %v2732, 0
    %2743 = vmatprep.subr.mxu0 0.0
    %2744 = vmatpush1.msra.mxu0 0.0
    %2745 = vmatprep.subr.mxu0 0.0
    %2746 = vmatpush1.msra.mxu0 0.0
    %2747 = vmatprep.subr.mxu0 0.0
    %2748 = vmatpush1.msra.mxu0 0.0
    %2749 = vmatprep.subr.mxu0 0.0
    %2750 = vmatpush1.msra.mxu0 0.0
    %2751 = vmatprep.subr.mxu0 0.0
    %2752 = vmatpush1.msra.mxu0 0.0
    %2753 = vmatprep.subr.mxu0 0.0
    %2754 = vmatpush1.msra.mxu0 0.0
    %2755 = vmatprep.subr.mxu0 0.0
    %2756 = vmatpush1.msra.mxu0 0.0
    %2757 = vmatprep.subr.mxu0 0.0
    %2758 = vmatpush1.msra.mxu0 0.0
    %2759 = vmatprep.subr.mxu0 0.0
    %2760 = vmatpush1.msra.mxu0 0.0
    %2761 = vmatprep.subr.mxu0 0.0
    %2762 = vmatpush1.msra.mxu0 0.0
    %2763 = vmatprep.subr.mxu0 0.0
    %2764 = vmatpush1.msra.mxu0 0.0
    %2765 = vmatprep.subr.mxu0 0.0
    %2766 = vmatpush1.msra.mxu0 0.0
    %2767 = vmatprep.subr.mxu0 0.0
    %2768 = vmatpush1.msra.mxu0 %v2736
    %2769 = vmatprep.subr.mxu0 0.0
    %2770 = vmatpush1.msra.mxu0 %v2735
    %2771 = vmatprep.subr.mxu0 0.0
    %2772 = vmatpush1.msra.mxu0 %v2734
    %2773 = vmatprep.subr.mxu0 0.0
    %2774 = vmatpush1.msra.mxu0 %v2733
    %2775 = vmatprep.subr.mxu0 0.0
    %2776 = vmatpush2.msra.mxu0 0.0
    %2777 = vmatprep.subr.mxu0 0.0
    %2778 = vmatpush2.msra.mxu0 0.0
    %2779 = vmatprep.subr.mxu0 0.0
    %2780 = vmatpush2.msra.mxu0 0.0
    %2781 = vmatprep.subr.mxu0 0.0
    %2782 = vmatpush2.msra.mxu0 0.0
    %2783 = vmatprep.subr.mxu0 0.0
    %2784 = vmatpush2.msra.mxu0 0.0
    %2785 = vmatprep.subr.mxu0 0.0
    %2786 = vmatpush2.msra.mxu0 0.0
    %2787 = vmatprep.subr.mxu0 0.0
    %2788 = vmatpush2.msra.mxu0 0.0
    %2789 = vmatprep.subr.mxu0 0.0
    %2790 = vmatpush2.msra.mxu0 0.0
    %2791 = vmatprep.subr.mxu0 0.0
    %2792 = vmatpush2.msra.mxu0 0.0
    %2793 = vmatprep.subr.mxu0 0.0
    %2794 = vmatpush2.msra.mxu0 0.0
    %2795 = vmatprep.subr.mxu0 0.0
    %2796 = vmatpush2.msra.mxu0 0.0
    %2797 = vmatprep.subr.mxu0 0.0
    %2798 = vmatpush2.msra.mxu0 0.0
    %2799 = vmatprep.subr.mxu0 0.0
    %2800 = vmatpush2.msra.mxu0 0.0
    %2801 = vmatprep.subr.mxu0 0.0
    %2802 = vmatpush2.msra.mxu0 0.0
    %2803 = vmatprep.subr.mxu0 0.0
    %2804 = vmatpush2.msra.mxu0 0.0
    %2805 = vmatprep.subr.mxu0 0.0
    %2806 = vmatpush2.msra.mxu0 0.0
    %2807 = vmatprep.mubr.f32.mxu0 0.0
    %2808 = vmatmul.mubr.f32.gmra.mxu0 %v2738
    %v2809 = vpop.f32.mrf.mxu0
    %v2810 = vadd.f32 0.0, %v2809
    %v2811 = vpop.f32.mrf.mxu0
    %2812 = vmatprep.mubr.f32.mxu0 0.0
    %2813 = vmatmul.mubr.f32.gmra.mxu0 %v2741
    %v2814 = vpop.f32.mrf.mxu0
    %v2815 = vadd.f32 0.0, %v2814
    %v2816 = vpop.f32.mrf.mxu0
    %2817 = vdwg.mxu0
    %vm2818 = vcmask 7168
    %v2819 = vsel %vm2818, %v2810, -inf
    %v2820 = vsel %vm2818, %v2815, -inf
    %v2821 = vmax.f32 %v2819, %v2820
    %v2822 = vrot.slane %v2821, 4
    %v2823 = vmax.f32 %v2821, %v2822
    %v2824 = vrot.slane %v2823, 2
    %v2825 = vmax.f32 %v2823, %v2824
    %v2826 = vrot.slane %v2825, 1
    %v2827 = vmax.f32 %v2825, %v2826
    %v2828 = vsub.f32 %v2810, %v2827
    %v2829 = vsub.f32 %v2815, %v2827
    %v2830 = vmul.f32 %v2828, 1.442695
    %v2831 = vpow.pop %v2830
    %v2832 = vmul.f32 %v2829, 1.442695
    %v2833 = vpow.pop %v2832
    %vm2834 = vcmask 130048
    %v2836 = vsel %vm2834, %v2563, 0
    %2838 = vmatprep.subr.mxu0 0.0
    %2839 = vmatpush1.msra.mxu0 0.0
    %2840 = vmatprep.subr.mxu0 0.0
    %2841 = vmatpush1.msra.mxu0 0.0
    %2842 = vmatprep.subr.mxu0 0.0
    %2843 = vmatpush1.msra.mxu0 0.0
    %2844 = vmatprep.subr.mxu0 0.0
    %2845 = vmatpush1.msra.mxu0 0.0
    %2846 = vmatprep.subr.mxu0 0.0
    %2847 = vmatpush1.msra.mxu0 0.0
    %2848 = vmatprep.subr.mxu0 0.0
    %2849 = vmatpush1.msra.mxu0 0.0
    %2850 = vmatprep.subr.mxu0 0.0
    %2851 = vmatpush1.msra.mxu0 0.0
    %2852 = vmatprep.subr.mxu0 0.0
    %2853 = vmatpush1.msra.mxu0 0.0
    %2854 = vmatprep.subr.mxu0 0.0
    %2855 = vmatpush1.msra.mxu0 0.0
    %2856 = vmatprep.subr.mxu0 0.0
    %2857 = vmatpush1.msra.mxu0 0.0
    %2858 = vmatprep.subr.mxu0 0.0
    %2859 = vmatpush1.msra.mxu0 0.0
    %2860 = vmatprep.subr.mxu0 0.0
    %2861 = vmatpush1.msra.mxu0 0.0
    %2862 = vmatprep.subr.mxu0 0.0
    %2863 = vmatpush1.msra.mxu0 0.0
    %2864 = vmatprep.subr.mxu0 0.0
    %2865 = vmatpush1.msra.mxu0 0.0
    %2866 = vmatprep.subr.mxu0 0.0
    %2867 = vmatpush1.msra.mxu0 %v2833
    %2868 = vmatprep.subr.mxu0 0.0
    %2869 = vmatpush1.msra.mxu0 %v2831
    %2870 = vmatprep.subr.mxu0 0.0
    %2871 = vmatpush2.msra.mxu0 0.0
    %2872 = vmatprep.subr.mxu0 0.0
    %2873 = vmatpush2.msra.mxu0 0.0
    %2874 = vmatprep.subr.mxu0 0.0
    %2875 = vmatpush2.msra.mxu0 0.0
    %2876 = vmatprep.subr.mxu0 0.0
    %2877 = vmatpush2.msra.mxu0 0.0
    %2878 = vmatprep.subr.mxu0 0.0
    %2879 = vmatpush2.msra.mxu0 0.0
    %2880 = vmatprep.subr.mxu0 0.0
    %2881 = vmatpush2.msra.mxu0 0.0
    %2882 = vmatprep.subr.mxu0 0.0
    %2883 = vmatpush2.msra.mxu0 0.0
    %2884 = vmatprep.subr.mxu0 0.0
    %2885 = vmatpush2.msra.mxu0 0.0
    %2886 = vmatprep.subr.mxu0 0.0
    %2887 = vmatpush2.msra.mxu0 0.0
    %2888 = vmatprep.subr.mxu0 0.0
    %2889 = vmatpush2.msra.mxu0 0.0
    %2890 = vmatprep.subr.mxu0 0.0
    %2891 = vmatpush2.msra.mxu0 0.0
    %2892 = vmatprep.subr.mxu0 0.0
    %2893 = vmatpush2.msra.mxu0 0.0
    %2894 = vmatprep.subr.mxu0 0.0
    %2895 = vmatpush2.msra.mxu0 0.0
    %2896 = vmatprep.subr.mxu0 0.0
    %2897 = vmatpush2.msra.mxu0 0.0
    %2898 = vmatprep.subr.mxu0 0.0
    %2899 = vmatpush2.msra.mxu0 0.0
    %2900 = vmatprep.subr.mxu0 0.0
    %2901 = vmatpush2.msra.mxu0 0.0
    %2902 = vmatprep.mubr.f32.mxu0 0.0
    %2903 = vmatmul.mubr.f32.gmra.mxu0 %v2836
    %v2904 = vpop.f32.mrf.mxu0
    %v2905 = vadd.f32 0.0, %v2904
    %v2906 = vpop.f32.mrf.mxu0
    %2907 = vdwg.mxu0
    %2909 = vset.pattern.permute.xlu0 0
    %2910 = vperm.xlu0 %2909, %v2831
    %v2911 = vpop.permute.xlu0 %2910
    %2914 = vset.pattern.permute.xlu0 0
    %2915 = vperm.xlu0 %2914, %v2833
    %v2916 = vpop.permute.xlu0 %2915
    %v2918 = vmul.f32 %v2911, %v2431
    %v2919 = vmul.f32 %v2916, %v2432
    %2920 = vmatprep.subr.mxu0 0.0
    %2921 = vmatpush1.msra.mxu0 0.0
    %2922 = vmatprep.subr.mxu0 0.0
    %2923 = vmatpush1.msra.mxu0 0.0
    %2924 = vmatprep.subr.mxu0 0.0
    %2925 = vmatpush1.msra.mxu0 0.0
    %2926 = vmatprep.subr.mxu0 0.0
    %2927 = vmatpush1.msra.mxu0 0.0
    %2928 = vmatprep.subr.mxu0 0.0
    %2929 = vmatpush1.msra.mxu0 0.0
    %2930 = vmatprep.subr.mxu0 0.0
    %2931 = vmatpush1.msra.mxu0 0.0
    %2932 = vmatprep.subr.mxu0 0.0
    %2933 = vmatpush1.msra.mxu0 0.0
    %2934 = vmatprep.subr.mxu0 0.0
    %2935 = vmatpush1.msra.mxu0 0.0
    %2936 = vmatprep.subr.mxu0 0.0
    %2937 = vmatpush1.msra.mxu0 0.0
    %2938 = vmatprep.subr.mxu0 0.0
    %2939 = vmatpush1.msra.mxu0 0.0
    %2940 = vmatprep.subr.mxu0 0.0
    %2941 = vmatpush1.msra.mxu0 0.0
    %2942 = vmatprep.subr.mxu0 0.0
    %2943 = vmatpush1.msra.mxu0 0.0
    %2944 = vmatprep.subr.mxu0 0.0
    %2945 = vmatpush1.msra.mxu0 0.0
    %2946 = vmatprep.subr.mxu0 0.0
    %2947 = vmatpush1.msra.mxu0 0.0
    %2948 = vmatprep.subr.mxu0 0.0
    %2949 = vmatpush1.msra.mxu0 %v2919
    %2950 = vmatprep.subr.mxu0 0.0
    %2951 = vmatpush1.msra.mxu0 %v2918
    %2952 = vmatprep.subr.mxu0 0.0
    %2953 = vmatpush2.msra.mxu0 0.0
    %2954 = vmatprep.subr.mxu0 0.0
    %2955 = vmatpush2.msra.mxu0 0.0
    %2956 = vmatprep.subr.mxu0 0.0
    %2957 = vmatpush2.msra.mxu0 0.0
    %2958 = vmatprep.subr.mxu0 0.0
    %2959 = vmatpush2.msra.mxu0 0.0
    %2960 = vmatprep.subr.mxu0 0.0
    %2961 = vmatpush2.msra.mxu0 0.0
    %2962 = vmatprep.subr.mxu0 0.0
    %2963 = vmatpush2.msra.mxu0 0.0
    %2964 = vmatprep.subr.mxu0 0.0
    %2965 = vmatpush2.msra.mxu0 0.0
    %2966 = vmatprep.subr.mxu0 0.0
    %2967 = vmatpush2.msra.mxu0 0.0
    %2968 = vmatprep.subr.mxu0 0.0
    %2969 = vmatpush2.msra.mxu0 0.0
    %2970 = vmatprep.subr.mxu0 0.0
    %2971 = vmatpush2.msra.mxu0 0.0
    %2972 = vmatprep.subr.mxu0 0.0
    %2973 = vmatpush2.msra.mxu0 0.0
    %2974 = vmatprep.subr.mxu0 0.0
    %2975 = vmatpush2.msra.mxu0 0.0
    %2976 = vmatprep.subr.mxu0 0.0
    %2977 = vmatpush2.msra.mxu0 0.0
    %2978 = vmatprep.subr.mxu0 0.0
    %2979 = vmatpush2.msra.mxu0 0.0
    %2980 = vmatprep.subr.mxu0 0.0
    %2981 = vmatpush2.msra.mxu0 0.0
    %2982 = vmatprep.subr.mxu0 0.0
    %2983 = vmatpush2.msra.mxu0 0.0
    %2984 = vmatprep.mubr.f32.mxu0 0.0
    %2985 = vmatmul.mubr.f32.gmra.mxu0 %v2836
    %v2986 = vpop.f32.mrf.mxu0
    %v2987 = vadd.f32 0.0, %v2986
    %v2988 = vpop.f32.mrf.mxu0
    %2989 = vdwg.mxu0
    %2991 = vset.pattern.permute.xlu0 0
    %2992 = vperm.xlu0 %2991, %v2905
    %v2993 = vpop.permute.xlu0 %2992
    %v2995 = vrcp.pop %v2993
    %v2996 = vmul.f32 %v2987, %v2995
    %2997 = vst.msk [vmem:[#allocation17] sm:$0x3] %vm679, %v2996
    // Predicated region
    $region90: #{tpu_custom_call.1} parent=1 // pred_check
      _
    $region91: #{tpu_custom_call.1} parent=1 // pred_check_branch
      %2999 = sbr.rel (0) target = $region93
    $region92: #{tpu_custom_call.1} parent=1 // pred_region
      %s3001 = ssub.s32 32, 32
      %3002 = vsyncadd [#allocation8], %s3001
      %s3004 = sshll.u32 [#allocation17], 4
      %s3005 = int_to_ptr.vmem [resolvable:$true] %s3004
      %3007 = dma.vmem_to_hbm [thread:$0]  %s3005, 32, %s16, [#allocation8]
    $region93: #{tpu_custom_call.1} parent=1 // pred_fallthru
      _
    // Predicated region
    $region94: #{tpu_custom_call.1} parent=1 // pred_check
      _
    $region95: #{tpu_custom_call.1} parent=1 // pred_check_branch
      %3009 = sbr.rel (0) target = $region97
    $region96: #{tpu_custom_call.1} parent=1 // pred_region
      %3010 = dma.done [#allocation8], 32
    $region97: #{tpu_custom_call.1} parent=1 // pred_fallthru
      _
    %3011 = vsyncpa [#allocation7], 1
    %3012 = vsyncpa [#allocation10], 1
    %3013 = vsyncpa [#allocation13], 1
    %3014 = vsyncpa [#allocation16], 1
    %3015 = vsyncpa [#allocation8], 1

</llo_original>
